<compile_context>
chip_gen: v7x
topology: tpu7x:2x2x1
jax: 0.10.0
libtpu: 0.0.40
codegen_flags: <defaults>
</compile_context>

<pallas_src>
import math

import jax
import jax.numpy as jnp
from jax.experimental import pallas as pl
from jax.experimental.pallas import tpu as pltpu

K_SIZE = 9                   # depthwise kernel size
PAD = K_SIZE // 2
EPS = 1e-5                   # torch BatchNorm1d default
SUBLANE = 8                  # row axes kept 8-aligned
MAX_ROW_TILE = 1024          # measured ~85% of HBM roofline at 512-1024 rows
ACT_DTYPE = jnp.bfloat16     # HBM activation-slab dtype


def _gelu(x):
    # Exact (erf-based) GELU, matching torch.nn.GELU() default.
    # TODO(synk): optional tanh approximation would move this onto the EUP slot.
    return 0.5 * x * (1.0 + jax.lax.erf(x * (1.0 / math.sqrt(2.0))))


def _round_up(v, m):
    return (v + m - 1) // m * m


def _vmem_limit_bytes():
    """Scoped-VMEM limit derived from physical capacity (v7x=64MiB, v6e/v5e=128MiB)."""
    phys = 64 * 1024 * 1024
    try:
        phys = int(pltpu.get_tpu_info().vmem_capacity_bytes)
    except Exception:
        pass
    return int(min(phys * 3 // 4, 96 * 1024 * 1024))


def _pick_geometry(n, l, c, vmem_limit):
    """Padded length lp (>= l + PAD, multiple of 8) and pass-2 row tile.

    Guarantees (n * lp) % tile == 0 without ever falling back to tiny tiles:
    for long sequences lp itself is padded up to a multiple of the tile.
    """
    lp = _round_up(l + PAD, SUBLANE)          # >= PAD pad rows: no per-tap masks
    budget = max(vmem_limit // 2, 4 * 1024 * 1024)
    cap = budget // (c * 4 * 8)               # ~8 live f32-equivalent (tile,C) slabs
    cap = max(SUBLANE, min(MAX_ROW_TILE, cap - cap % SUBLANE))
    if lp <= cap:
        g = max(1, cap // lp)                 # whole sequences per tile
        while n % g:
            g -= 1
        return lp, g * lp
    # Long sequence: largest tile <= cap whose row padding of lp stays small.
    allow = max(8 * SUBLANE, lp // 16)
    best_tm, best_pad = SUBLANE, 0            # tm=8 always divides (lp % 8 == 0)
    for tm in range(cap, SUBLANE - 1, -SUBLANE):
        pad = (-lp) % tm
        if pad <= allow:
            best_tm, best_pad = tm, pad
            break
    return lp + best_pad, best_tm


def _make_dw_kernel(lp):
    """Depthwise 9-tap 'same' conv + GELU + partial BN1 stats for one sequence."""

    def kernel(a_ref, mask_ref, sci_ref, shi_ref, w_ref, b_ref, h_ref, st_ref):
        mask = mask_ref[...]                                    # (lp, 1) 1/0 rows
        # Folded previous-layer BN2 affine; the mask keeps pad rows exactly
        # zero, which is what makes the un-masked rolls below correct.
        x = (a_ref[...].astype(jnp.float32) * sci_ref[...] + shi_ref[...]) * mask
        w = w_ref[...].astype(jnp.float32)                      # (K, C) taps
        acc = x * w[PAD:PAD + 1, :]                             # center tap
        for k in range(K_SIZE):
            if k == PAD:
                continue
            # h[l] += w[k] * x[l + k - PAD].  Wrap-around is harmless:
            #  - front taps wrap in the (>= PAD) zeroed tail rows;
            #  - back taps only corrupt pad rows, which are masked out of the
            #    stats here and re-zeroed by pass 2 before the next layer.
            xk = pltpu.roll(x, shift=(PAD - k) % lp, axis=0)    # XLU rotate
            acc = acc + xk * w[k:k + 1, :]
        h = _gelu(acc + b_ref[...])
        h_ref[...] = h.astype(h_ref.dtype)                      # bf16 HBM slab
        hm = h * mask                                           # valid rows only
        st_ref[0:1, :] = jnp.sum(hm, axis=0, keepdims=True)
        st_ref[1:2, :] = jnp.sum(hm * hm, axis=0, keepdims=True)

    return kernel


def _pw_kernel(h_ref, a_ref, mask_ref, sci_ref, shi_ref, sc1_ref, sh1_ref,
               w_ref, b_ref, y_ref, st_ref):
    """BN1 affine + residual + 1x1 conv (bf16 MXU, f32 acc) + GELU + BN2 stats."""
    mask = mask_ref[...]                                        # (tm, 1)
    # Residual input = folded previous-BN2 affine of the raw slab.
    xres = a_ref[...].astype(jnp.float32) * sci_ref[...] + shi_ref[...]
    t = h_ref[...].astype(jnp.float32) * sc1_ref[...] + sh1_ref[...] + xres
    y = jnp.dot(t.astype(jnp.bfloat16), w_ref[...],             # bf16 MXU matmul
                preferred_element_type=jnp.float32)
    # Row mask zeroes pad rows: keeps BN2 stats exact and keeps the next
    # layer's depthwise zero padding valid.
    y = _gelu(y + b_ref[...]) * mask
    y_ref[...] = y.astype(y_ref.dtype)
    st_ref[0:1, :] = jnp.sum(y, axis=0, keepdims=True)
    st_ref[1:2, :] = jnp.sum(y * y, axis=0, keepdims=True)


def _bn_fold(s, sq, count, gamma, beta):
    """Fold train-mode BatchNorm stats into a per-channel scale/shift (f32)."""
    mu = s / count
    var = jnp.maximum(sq / count - mu * mu, 0.0)    # biased variance, like torch
    scale = gamma * jax.lax.rsqrt(var + EPS)
    shift = beta - mu * scale
    return (scale[None, :].astype(jnp.float32),
            shift[None, :].astype(jnp.float32))


def _convmixer_layer(a2, sc_in, sh_in, mask_l, mask_rows, p, dims, vmem_limit):
    n, l_true, lp, c, tm = dims
    rows = n * lp
    rt = rows // tm
    count = float(n * l_true)
    cparams = pltpu.CompilerParams(dimension_semantics=("parallel",),
                                   vmem_limit_bytes=vmem_limit)
    vec = pl.BlockSpec((1, c), lambda i: (0, 0))       # broadcast (1, C) params

    # ---- pass 1: depthwise conv + GELU + per-batch partial BN1 stats ----
    h1, st1 = pl.pallas_call(
        _make_dw_kernel(lp),
        grid=(n,),
        in_specs=[
            pl.BlockSpec((lp, c), lambda i: (i, 0)),            # one full sequence
            pl.BlockSpec((lp, 1), lambda i: (0, 0)),            # row validity mask
            vec, vec,                                           # folded prev-BN2 affine
            pl.BlockSpec((K_SIZE, c), lambda i: (0, 0)),        # depthwise taps
            vec,                                                # depthwise bias
        ],
        out_specs=[
            pl.BlockSpec((lp, c), lambda i: (i, 0)),
            pl.BlockSpec((SUBLANE, c), lambda i: (i, 0)),
        ],
        out_shape=[
            jax.ShapeDtypeStruct((rows, c), ACT_DTYPE),
            jax.ShapeDtypeStruct((n * SUBLANE, c), jnp.float32),
        ],
        compiler_params=cparams,
    )(a2, mask_l, sc_in, sh_in, p["dw_w"], p["dw_b"])

    st1 = st1.reshape(n, SUBLANE, c)
    sc1, sh1 = _bn_fold(st1[:, 0].sum(0), st1[:, 1].sum(0), count, p["g1"], p["b1"])

    # ---- pass 2: BN1 + residual + 1x1 conv + GELU + partial BN2 stats ----
    y1, st2 = pl.pallas_call(
        _pw_kernel,
        grid=(rt,),
        in_specs=[
            pl.BlockSpec((tm, c), lambda i: (i, 0)),            # h1 tile
            pl.BlockSpec((tm, c), lambda i: (i, 0)),            # raw slab (residual)
            pl.BlockSpec((tm, 1), lambda i: (i, 0)),            # row validity mask
            vec, vec,                                           # folded prev-BN2 affine
            vec, vec,                                           # folded BN1 affine
            # TODO(synk): pipeline_mode=pl.Buffered(1) on this constant-index
            # weight block would free C*C*2 bytes of VMEM for bigger row tiles.
            pl.BlockSpec((c, c), lambda i: (0, 0)),             # pointwise weight
            vec,                                                # pointwise bias
        ],
        out_specs=[
            pl.BlockSpec((tm, c), lambda i: (i, 0)),
            pl.BlockSpec((SUBLANE, c), lambda i: (i, 0)),
        ],
        out_shape=[
            jax.ShapeDtypeStruct((rows, c), ACT_DTYPE),
            jax.ShapeDtypeStruct((rt * SUBLANE, c), jnp.float32),
        ],
        compiler_params=cparams,
    )(h1, a2, mask_rows, sc_in, sh_in, sc1, sh1, p["pw_w"], p["pw_b"])

    st2 = st2.reshape(rt, SUBLANE, c)
    sc2, sh2 = _bn_fold(st2[:, 0].sum(0), st2[:, 1].sum(0), count, p["g2"], p["b2"])
    # BN2 is returned as a folded affine, applied inside the next layer's
    # kernels (or by the XLA epilogue) -> one fewer HBM pass per layer.
    return y1, sc2, sh2


def init_convmixer_params(key, dim, depth, kernel_size=K_SIZE):
    """Deterministic synthetic params; shapes mirror the PyTorch module."""
    params = []
    for _ in range(depth):
        k0, k1, k2, k3, key = jax.random.split(key, 5)
        dw_bound = 1.0 / math.sqrt(kernel_size)   # depthwise fan_in = 1 * K
        pw_bound = 1.0 / math.sqrt(dim)           # pointwise fan_in = dim * 1
        params.append({
            # torch depthwise weight (dim, 1, K) stored transposed as (K, dim)
            "dw_w": jax.random.uniform(k0, (kernel_size, dim), jnp.float32,
                                       -dw_bound, dw_bound),
            "dw_b": jax.random.uniform(k1, (dim,), jnp.float32, -dw_bound, dw_bound),
            "g1": jnp.ones((dim,), jnp.float32),
            "b1": jnp.zeros((dim,), jnp.float32),
            # torch pointwise weight (dim, dim, 1) stored transposed as (in, out)
            "pw_w": jax.random.uniform(k2, (dim, dim), jnp.float32,
                                       -pw_bound, pw_bound),
            "pw_b": jax.random.uniform(k3, (dim,), jnp.float32, -pw_bound, pw_bound),
            "g2": jnp.ones((dim,), jnp.float32),
            "b2": jnp.zeros((dim,), jnp.float32),
        })
    return params


def _prep_params(params):
    """Reshape biases to (1, C) rows and cast the pointwise weight to bf16."""
    prepped = []
    for p in params:
        prepped.append({
            "dw_w": p["dw_w"].astype(jnp.float32),
            "dw_b": p["dw_b"].reshape(1, -1).astype(jnp.float32),
            "g1": p["g1"].astype(jnp.float32),
            "b1": p["b1"].astype(jnp.float32),
            "pw_w": p["pw_w"].astype(jnp.bfloat16),
            "pw_b": p["pw_b"].reshape(1, -1).astype(jnp.float32),
            "g2": p["g2"].astype(jnp.float32),
            "b2": p["b2"].astype(jnp.float32),
        })
    return prepped


def convmixer_forward(x_ncl, params):
    """x_ncl: (N, C, L) float32, same layout as the PyTorch module input.

    Matches the PyTorch module in training mode (batch statistics for both
    BatchNorms); activations are carried bf16 between kernels.
    """
    n, c, l = x_ncl.shape
    vmem_limit = _vmem_limit_bytes()
    lp, tm = _pick_geometry(n, l, c, vmem_limit)
    rows = n * lp
    dims = (n, l, lp, c, tm)

    # NCL -> NLC (channels on the lane axis at true width), pad L with >= PAD
    # zero rows, flatten to a single (rows, C) bf16 slab at the HBM boundary.
    x = jnp.transpose(x_ncl, (0, 2, 1))
    x = jnp.pad(x, ((0, 0), (0, lp - l), (0, 0)))
    a2 = x.reshape(rows, c).astype(ACT_DTYPE)

    mask_l = (jnp.arange(lp) < l).astype(jnp.float32).reshape(lp, 1)
    mask_rows = jnp.tile(mask_l, (n, 1))                       # (rows, 1)

    pparams = _prep_params(params)
    sc_in = jnp.ones((1, c), jnp.float32)    # folded "previous BN2" affine (identity)
    sh_in = jnp.zeros((1, c), jnp.float32)
    for p in pparams:
        a2, sc_in, sh_in = _convmixer_layer(a2, sc_in, sh_in, mask_l, mask_rows,
                                            p, dims, vmem_limit)

    # Last layer's folded BN2 affine + un-pad + transpose, fused in plain XLA
    # (saves one full rows x C HBM read+write vs. a dedicated flush kernel).
    y = a2.astype(jnp.float32).reshape(n, lp, c)[:, :l, :]
    y = y * sc_in + sh_in
    return jnp.transpose(y, (0, 2, 1))       # back to NCL, f32


if __name__ == "__main__":
    # Small but non-trivial shapes: exercises length padding (300 -> 304 rows,
    # >= PAD zero rows), a multi-step grid in both passes, true (unpadded)
    # channel width C=32, and depth = 2.
    N, DIM, L, DEPTH = 4, 32, 300, 2
    key = jax.random.PRNGKey(0)
    kx, kp = jax.random.split(key)
    x = jax.random.normal(kx, (N, DIM, L), jnp.float32)   # NCL, like PyTorch
    params = init_convmixer_params(kp, DIM, DEPTH)

    out = jax.jit(convmixer_forward)(x, params)
    out = jax.block_until_ready(out)
    assert out.shape == (N, DIM, L) and out.dtype == jnp.float32
    assert bool(jnp.all(jnp.isfinite(out)))
    print("KERNEL_OK")
</pallas_src>

<mosaic_0001>
module attributes {stable_mosaic.version = 11 : i64} {
  func.func @kernel(%arg0: i32, %arg1: memref<304x32xbf16, #tpu.memory_space<vmem>>, %arg2: memref<304x1xf32, #tpu.memory_space<vmem>>, %arg3: memref<1x32xf32, #tpu.memory_space<vmem>>, %arg4: memref<1x32xf32, #tpu.memory_space<vmem>>, %arg5: memref<9x32xf32, #tpu.memory_space<vmem>>, %arg6: memref<1x32xf32, #tpu.memory_space<vmem>>, %arg7: memref<304x32xbf16, #tpu.memory_space<vmem>>, %arg8: memref<8x32xf32, #tpu.memory_space<vmem>>) attributes {dimension_semantics = [#tpu.dimension_semantics<parallel>], iteration_bounds = array<i64: 4>, scalar_prefetch = 0 : i64, scratch_operands = 0 : i64, tpu.core_type = #tpu.core_type<tc>, window_params = [{transform_indices = @transform_0, window_bounds = array<i64: 304, 32>}, {pipeline_mode = #tpu.pipeline_mode<synchronous>, transform_indices = @transform_1, window_bounds = array<i64: 304, 1>}, {pipeline_mode = #tpu.pipeline_mode<synchronous>, transform_indices = @transform_2, window_bounds = array<i64: 1, 32>}, {pipeline_mode = #tpu.pipeline_mode<synchronous>, transform_indices = @transform_3, window_bounds = array<i64: 1, 32>}, {pipeline_mode = #tpu.pipeline_mode<synchronous>, transform_indices = @transform_4, window_bounds = array<i64: 9, 32>}, {pipeline_mode = #tpu.pipeline_mode<synchronous>, transform_indices = @transform_5, window_bounds = array<i64: 1, 32>}, {transform_indices = @transform_6, window_bounds = array<i64: 304, 32>}, {transform_indices = @transform_7, window_bounds = array<i64: 8, 32>}]} {
    %c0 = arith.constant 0 : index
    %c0_0 = arith.constant 0 : index
    %0 = vector.load %arg2[%c0, %c0_0] : memref<304x1xf32, #tpu.memory_space<vmem>>, vector<304x1xf32>
    %c0_1 = arith.constant 0 : index
    %c0_2 = arith.constant 0 : index
    %1 = vector.load %arg1[%c0_1, %c0_2] : memref<304x32xbf16, #tpu.memory_space<vmem>>, vector<304x32xbf16>
    %2 = arith.extf %1 : vector<304x32xbf16> to vector<304x32xf32>
    %c0_3 = arith.constant 0 : index
    %c0_4 = arith.constant 0 : index
    %3 = vector.load %arg3[%c0_3, %c0_4] : memref<1x32xf32, #tpu.memory_space<vmem>>, vector<1x32xf32>
    %4 = vector.broadcast %3 : vector<1x32xf32> to vector<304x32xf32>
    %5 = arith.mulf %2, %4 : vector<304x32xf32>
    %c0_5 = arith.constant 0 : index
    %c0_6 = arith.constant 0 : index
    %6 = vector.load %arg4[%c0_5, %c0_6] : memref<1x32xf32, #tpu.memory_space<vmem>>, vector<1x32xf32>
    %7 = vector.broadcast %6 : vector<1x32xf32> to vector<304x32xf32>
    %8 = arith.addf %5, %7 : vector<304x32xf32>
    %9 = vector.broadcast %0 : vector<304x1xf32> to vector<304x32xf32>
    %10 = arith.mulf %8, %9 : vector<304x32xf32>
    %c0_7 = arith.constant 0 : index
    %c0_8 = arith.constant 0 : index
    %11 = vector.load %arg5[%c0_7, %c0_8] : memref<9x32xf32, #tpu.memory_space<vmem>>, vector<9x32xf32>
    %12 = vector.extract_strided_slice %11 {offsets = [4, 0], sizes = [1, 32], strides = [1, 1]} : vector<9x32xf32> to vector<1x32xf32>
    %13 = vector.broadcast %12 : vector<1x32xf32> to vector<304x32xf32>
    %14 = arith.mulf %10, %13 : vector<304x32xf32>
    %c4_i32 = arith.constant 4 : i32
    %15 = tpu.dynamic_rotate %10 by %c4_i32 dim 0 : vector<304x32xf32>, i32 -> vector<304x32xf32>
    %16 = vector.extract_strided_slice %11 {offsets = [0, 0], sizes = [1, 32], strides = [1, 1]} : vector<9x32xf32> to vector<1x32xf32>
    %17 = vector.broadcast %16 : vector<1x32xf32> to vector<304x32xf32>
    %18 = arith.mulf %15, %17 : vector<304x32xf32>
    %19 = arith.addf %14, %18 : vector<304x32xf32>
    %c3_i32 = arith.constant 3 : i32
    %20 = tpu.dynamic_rotate %10 by %c3_i32 dim 0 : vector<304x32xf32>, i32 -> vector<304x32xf32>
    %21 = vector.extract_strided_slice %11 {offsets = [1, 0], sizes = [1, 32], strides = [1, 1]} : vector<9x32xf32> to vector<1x32xf32>
    %22 = vector.broadcast %21 : vector<1x32xf32> to vector<304x32xf32>
    %23 = arith.mulf %20, %22 : vector<304x32xf32>
    %24 = arith.addf %19, %23 : vector<304x32xf32>
    %c2_i32 = arith.constant 2 : i32
    %25 = tpu.dynamic_rotate %10 by %c2_i32 dim 0 : vector<304x32xf32>, i32 -> vector<304x32xf32>
    %26 = vector.extract_strided_slice %11 {offsets = [2, 0], sizes = [1, 32], strides = [1, 1]} : vector<9x32xf32> to vector<1x32xf32>
    %27 = vector.broadcast %26 : vector<1x32xf32> to vector<304x32xf32>
    %28 = arith.mulf %25, %27 : vector<304x32xf32>
    %29 = arith.addf %24, %28 : vector<304x32xf32>
    %c1_i32 = arith.constant 1 : i32
    %30 = tpu.dynamic_rotate %10 by %c1_i32 dim 0 : vector<304x32xf32>, i32 -> vector<304x32xf32>
    %31 = vector.extract_strided_slice %11 {offsets = [3, 0], sizes = [1, 32], strides = [1, 1]} : vector<9x32xf32> to vector<1x32xf32>
    %32 = vector.broadcast %31 : vector<1x32xf32> to vector<304x32xf32>
    %33 = arith.mulf %30, %32 : vector<304x32xf32>
    %34 = arith.addf %29, %33 : vector<304x32xf32>
    %c303_i32 = arith.constant 303 : i32
    %35 = tpu.dynamic_rotate %10 by %c303_i32 dim 0 : vector<304x32xf32>, i32 -> vector<304x32xf32>
    %36 = vector.extract_strided_slice %11 {offsets = [5, 0], sizes = [1, 32], strides = [1, 1]} : vector<9x32xf32> to vector<1x32xf32>
    %37 = vector.broadcast %36 : vector<1x32xf32> to vector<304x32xf32>
    %38 = arith.mulf %35, %37 : vector<304x32xf32>
    %39 = arith.addf %34, %38 : vector<304x32xf32>
    %c302_i32 = arith.constant 302 : i32
    %40 = tpu.dynamic_rotate %10 by %c302_i32 dim 0 : vector<304x32xf32>, i32 -> vector<304x32xf32>
    %41 = vector.extract_strided_slice %11 {offsets = [6, 0], sizes = [1, 32], strides = [1, 1]} : vector<9x32xf32> to vector<1x32xf32>
    %42 = vector.broadcast %41 : vector<1x32xf32> to vector<304x32xf32>
    %43 = arith.mulf %40, %42 : vector<304x32xf32>
    %44 = arith.addf %39, %43 : vector<304x32xf32>
    %c301_i32 = arith.constant 301 : i32
    %45 = tpu.dynamic_rotate %10 by %c301_i32 dim 0 : vector<304x32xf32>, i32 -> vector<304x32xf32>
    %46 = vector.extract_strided_slice %11 {offsets = [7, 0], sizes = [1, 32], strides = [1, 1]} : vector<9x32xf32> to vector<1x32xf32>
    %47 = vector.broadcast %46 : vector<1x32xf32> to vector<304x32xf32>
    %48 = arith.mulf %45, %47 : vector<304x32xf32>
    %49 = arith.addf %44, %48 : vector<304x32xf32>
    %c300_i32 = arith.constant 300 : i32
    %50 = tpu.dynamic_rotate %10 by %c300_i32 dim 0 : vector<304x32xf32>, i32 -> vector<304x32xf32>
    %51 = vector.extract_strided_slice %11 {offsets = [8, 0], sizes = [1, 32], strides = [1, 1]} : vector<9x32xf32> to vector<1x32xf32>
    %52 = vector.broadcast %51 : vector<1x32xf32> to vector<304x32xf32>
    %53 = arith.mulf %50, %52 : vector<304x32xf32>
    %54 = arith.addf %49, %53 : vector<304x32xf32>
    %c0_9 = arith.constant 0 : index
    %c0_10 = arith.constant 0 : index
    %55 = vector.load %arg6[%c0_9, %c0_10] : memref<1x32xf32, #tpu.memory_space<vmem>>, vector<1x32xf32>
    %56 = vector.broadcast %55 : vector<1x32xf32> to vector<304x32xf32>
    %57 = arith.addf %54, %56 : vector<304x32xf32>
    %cst = arith.constant 5.000000e-01 : f32
    %58 = vector.broadcast %cst : f32 to vector<304x32xf32>
    %59 = arith.mulf %58, %57 : vector<304x32xf32>
    %cst_11 = arith.constant 0.707106769 : f32
    %60 = vector.broadcast %cst_11 : f32 to vector<304x32xf32>
    %61 = arith.mulf %57, %60 : vector<304x32xf32>
    %62 = math.erf %61 : vector<304x32xf32>
    %cst_12 = arith.constant 1.000000e+00 : f32
    %63 = vector.broadcast %cst_12 : f32 to vector<304x32xf32>
    %64 = arith.addf %63, %62 : vector<304x32xf32>
    %65 = arith.mulf %59, %64 : vector<304x32xf32>
    %66 = arith.truncf %65 : vector<304x32xf32> to vector<304x32xbf16>
    %c0_13 = arith.constant 0 : index
    %c0_14 = arith.constant 0 : index
    %67 = vector.load %arg7[%c0_13, %c0_14] : memref<304x32xbf16, #tpu.memory_space<vmem>>, vector<304x32xbf16>
    tpu.vector_store %arg7[%c0_13, %c0_14], %66 {strides = array<i32>} : memref<304x32xbf16, #tpu.memory_space<vmem>>, vector<304x32xbf16>,
    %68 = vector.broadcast %0 : vector<304x1xf32> to vector<304x32xf32>
    %69 = arith.mulf %65, %68 : vector<304x32xf32>
    %cst_15 = arith.constant dense<0.000000e+00> : vector<32xf32>
    %70 = vector.multi_reduction <add>, %69, %cst_15 [0] : vector<304x32xf32> to vector<32xf32>
    %71 = vector.shape_cast %70 : vector<32xf32> to vector<1x32xf32>
    %c0_16 = arith.constant 0 : index
    %c0_17 = arith.constant 0 : index
    %72 = vector.load %arg8[%c0_16, %c0_17] : memref<8x32xf32, #tpu.memory_space<vmem>>, vector<1x32xf32>
    tpu.vector_store %arg8[%c0_16, %c0_17], %71 {strides = array<i32>} : memref<8x32xf32, #tpu.memory_space<vmem>>, vector<1x32xf32>,
    %73 = arith.mulf %69, %69 : vector<304x32xf32>
    %cst_18 = arith.constant dense<0.000000e+00> : vector<32xf32>
    %74 = vector.multi_reduction <add>, %73, %cst_18 [0] : vector<304x32xf32> to vector<32xf32>
    %75 = vector.shape_cast %74 : vector<32xf32> to vector<1x32xf32>
    %c1 = arith.constant 1 : index
    %c0_19 = arith.constant 0 : index
    %76 = vector.load %arg8[%c1, %c0_19] : memref<8x32xf32, #tpu.memory_space<vmem>>, vector<1x32xf32>
    tpu.vector_store %arg8[%c1, %c0_19], %75 {strides = array<i32>} : memref<8x32xf32, #tpu.memory_space<vmem>>, vector<1x32xf32>,
    return
  }
  func.func @transform_0(%arg0: i32) -> (i32, i32) {
    %c0_i32 = arith.constant 0 : i32
    %c0_i32_0 = arith.constant 0 : i32
    return %arg0, %c0_i32 : i32, i32
  }
  func.func @transform_1(%arg0: i32) -> (i32, i32) {
    %c0_i32 = arith.constant 0 : i32
    %c0_i32_0 = arith.constant 0 : i32
    %c0_i32_1 = arith.constant 0 : i32
    return %c0_i32, %c0_i32_0 : i32, i32
  }
  func.func @transform_2(%arg0: i32) -> (i32, i32) {
    %c0_i32 = arith.constant 0 : i32
    %c0_i32_0 = arith.constant 0 : i32
    %c0_i32_1 = arith.constant 0 : i32
    return %c0_i32, %c0_i32_0 : i32, i32
  }
  func.func @transform_3(%arg0: i32) -> (i32, i32) {
    %c0_i32 = arith.constant 0 : i32
    %c0_i32_0 = arith.constant 0 : i32
    %c0_i32_1 = arith.constant 0 : i32
    return %c0_i32, %c0_i32_0 : i32, i32
  }
  func.func @transform_4(%arg0: i32) -> (i32, i32) {
    %c0_i32 = arith.constant 0 : i32
    %c0_i32_0 = arith.constant 0 : i32
    %c0_i32_1 = arith.constant 0 : i32
    return %c0_i32, %c0_i32_0 : i32, i32
  }
  func.func @transform_5(%arg0: i32) -> (i32, i32) {
    %c0_i32 = arith.constant 0 : i32
    %c0_i32_0 = arith.constant 0 : i32
    %c0_i32_1 = arith.constant 0 : i32
    return %c0_i32, %c0_i32_0 : i32, i32
  }
  func.func @transform_6(%arg0: i32) -> (i32, i32) {
    %c0_i32 = arith.constant 0 : i32
    %c0_i32_0 = arith.constant 0 : i32
    return %arg0, %c0_i32 : i32, i32
  }
  func.func @transform_7(%arg0: i32) -> (i32, i32) {
    %c0_i32 = arith.constant 0 : i32
    %c0_i32_0 = arith.constant 0 : i32
    return %arg0, %c0_i32 : i32, i32
  }
}

module attributes {stable_mosaic.version = 11 : i64} {
  func.func @_pw_kernel(%arg0: i32, %arg1: memref<608x32xbf16, #tpu.memory_space<vmem>>, %arg2: memref<608x32xbf16, #tpu.memory_space<vmem>>, %arg3: memref<608x1xf32, #tpu.memory_space<vmem>>, %arg4: memref<1x32xf32, #tpu.memory_space<vmem>>, %arg5: memref<1x32xf32, #tpu.memory_space<vmem>>, %arg6: memref<1x32xf32, #tpu.memory_space<vmem>>, %arg7: memref<1x32xf32, #tpu.memory_space<vmem>>, %arg8: memref<32x32xbf16, #tpu.memory_space<vmem>>, %arg9: memref<1x32xf32, #tpu.memory_space<vmem>>, %arg10: memref<608x32xbf16, #tpu.memory_space<vmem>>, %arg11: memref<8x32xf32, #tpu.memory_space<vmem>>) attributes {dimension_semantics = [#tpu.dimension_semantics<parallel>], iteration_bounds = array<i64: 2>, scalar_prefetch = 0 : i64, scratch_operands = 0 : i64, tpu.core_type = #tpu.core_type<tc>, window_params = [{transform_indices = @transform_0, window_bounds = array<i64: 608, 32>}, {transform_indices = @transform_1, window_bounds = array<i64: 608, 32>}, {transform_indices = @transform_2, window_bounds = array<i64: 608, 1>}, {pipeline_mode = #tpu.pipeline_mode<synchronous>, transform_indices = @transform_3, window_bounds = array<i64: 1, 32>}, {pipeline_mode = #tpu.pipeline_mode<synchronous>, transform_indices = @transform_4, window_bounds = array<i64: 1, 32>}, {pipeline_mode = #tpu.pipeline_mode<synchronous>, transform_indices = @transform_5, window_bounds = array<i64: 1, 32>}, {pipeline_mode = #tpu.pipeline_mode<synchronous>, transform_indices = @transform_6, window_bounds = array<i64: 1, 32>}, {pipeline_mode = #tpu.pipeline_mode<synchronous>, transform_indices = @transform_7, window_bounds = array<i64: 32, 32>}, {pipeline_mode = #tpu.pipeline_mode<synchronous>, transform_indices = @transform_8, window_bounds = array<i64: 1, 32>}, {transform_indices = @transform_9, window_bounds = array<i64: 608, 32>}, {transform_indices = @transform_10, window_bounds = array<i64: 8, 32>}]} {
    %c0 = arith.constant 0 : index
    %c0_0 = arith.constant 0 : index
    %0 = vector.load %arg3[%c0, %c0_0] : memref<608x1xf32, #tpu.memory_space<vmem>>, vector<608x1xf32>
    %c0_1 = arith.constant 0 : index
    %c0_2 = arith.constant 0 : index
    %1 = vector.load %arg2[%c0_1, %c0_2] : memref<608x32xbf16, #tpu.memory_space<vmem>>, vector<608x32xbf16>
    %2 = arith.extf %1 : vector<608x32xbf16> to vector<608x32xf32>
    %c0_3 = arith.constant 0 : index
    %c0_4 = arith.constant 0 : index
    %3 = vector.load %arg4[%c0_3, %c0_4] : memref<1x32xf32, #tpu.memory_space<vmem>>, vector<1x32xf32>
    %4 = vector.broadcast %3 : vector<1x32xf32> to vector<608x32xf32>
    %5 = arith.mulf %2, %4 : vector<608x32xf32>
    %c0_5 = arith.constant 0 : index
    %c0_6 = arith.constant 0 : index
    %6 = vector.load %arg5[%c0_5, %c0_6] : memref<1x32xf32, #tpu.memory_space<vmem>>, vector<1x32xf32>
    %7 = vector.broadcast %6 : vector<1x32xf32> to vector<608x32xf32>
    %8 = arith.addf %5, %7 : vector<608x32xf32>
    %c0_7 = arith.constant 0 : index
    %c0_8 = arith.constant 0 : index
    %9 = vector.load %arg1[%c0_7, %c0_8] : memref<608x32xbf16, #tpu.memory_space<vmem>>, vector<608x32xbf16>
    %10 = arith.extf %9 : vector<608x32xbf16> to vector<608x32xf32>
    %c0_9 = arith.constant 0 : index
    %c0_10 = arith.constant 0 : index
    %11 = vector.load %arg6[%c0_9, %c0_10] : memref<1x32xf32, #tpu.memory_space<vmem>>, vector<1x32xf32>
    %12 = vector.broadcast %11 : vector<1x32xf32> to vector<608x32xf32>
    %13 = arith.mulf %10, %12 : vector<608x32xf32>
    %c0_11 = arith.constant 0 : index
    %c0_12 = arith.constant 0 : index
    %14 = vector.load %arg7[%c0_11, %c0_12] : memref<1x32xf32, #tpu.memory_space<vmem>>, vector<1x32xf32>
    %15 = vector.broadcast %14 : vector<1x32xf32> to vector<608x32xf32>
    %16 = arith.addf %13, %15 : vector<608x32xf32>
    %17 = arith.addf %16, %8 : vector<608x32xf32>
    %18 = arith.truncf %17 : vector<608x32xf32> to vector<608x32xbf16>
    %c0_13 = arith.constant 0 : index
    %c0_14 = arith.constant 0 : index
    %19 = vector.load %arg8[%c0_13, %c0_14] : memref<32x32xbf16, #tpu.memory_space<vmem>>, vector<32x32xbf16>
    %cst = arith.constant dense<0.000000e+00> : vector<608x32xf32>
    %20 = tpu.matmul %18, %19, %cst {dimension_numbers = #tpu.dot_dimension_numbers<[1], [0], [0], [1], [0, 0, 1, 1], [], []>} : vector<608x32xbf16>, vector<32x32xbf16>, vector<608x32xf32> -> vector<608x32xf32>
    %c0_15 = arith.constant 0 : index
    %c0_16 = arith.constant 0 : index
    %21 = vector.load %arg9[%c0_15, %c0_16] : memref<1x32xf32, #tpu.memory_space<vmem>>, vector<1x32xf32>
    %22 = vector.broadcast %21 : vector<1x32xf32> to vector<608x32xf32>
    %23 = arith.addf %20, %22 : vector<608x32xf32>
    %cst_17 = arith.constant 5.000000e-01 : f32
    %24 = vector.broadcast %cst_17 : f32 to vector<608x32xf32>
    %25 = arith.mulf %24, %23 : vector<608x32xf32>
    %cst_18 = arith.constant 0.707106769 : f32
    %26 = vector.broadcast %cst_18 : f32 to vector<608x32xf32>
    %27 = arith.mulf %23, %26 : vector<608x32xf32>
    %28 = math.erf %27 : vector<608x32xf32>
    %cst_19 = arith.constant 1.000000e+00 : f32
    %29 = vector.broadcast %cst_19 : f32 to vector<608x32xf32>
    %30 = arith.addf %29, %28 : vector<608x32xf32>
    %31 = arith.mulf %25, %30 : vector<608x32xf32>
    %32 = vector.broadcast %0 : vector<608x1xf32> to vector<608x32xf32>
    %33 = arith.mulf %31, %32 : vector<608x32xf32>
    %34 = arith.truncf %33 : vector<608x32xf32> to vector<608x32xbf16>
    %c0_20 = arith.constant 0 : index
    %c0_21 = arith.constant 0 : index
    %35 = vector.load %arg10[%c0_20, %c0_21] : memref<608x32xbf16, #tpu.memory_space<vmem>>, vector<608x32xbf16>
    tpu.vector_store %arg10[%c0_20, %c0_21], %34 {strides = array<i32>} : memref<608x32xbf16, #tpu.memory_space<vmem>>, vector<608x32xbf16>,
    %cst_22 = arith.constant dense<0.000000e+00> : vector<32xf32>
    %36 = vector.multi_reduction <add>, %33, %cst_22 [0] : vector<608x32xf32> to vector<32xf32>
    %37 = vector.shape_cast %36 : vector<32xf32> to vector<1x32xf32>
    %c0_23 = arith.constant 0 : index
    %c0_24 = arith.constant 0 : index
    %38 = vector.load %arg11[%c0_23, %c0_24] : memref<8x32xf32, #tpu.memory_space<vmem>>, vector<1x32xf32>
    tpu.vector_store %arg11[%c0_23, %c0_24], %37 {strides = array<i32>} : memref<8x32xf32, #tpu.memory_space<vmem>>, vector<1x32xf32>,
    %39 = arith.mulf %33, %33 : vector<608x32xf32>
    %cst_25 = arith.constant dense<0.000000e+00> : vector<32xf32>
    %40 = vector.multi_reduction <add>, %39, %cst_25 [0] : vector<608x32xf32> to vector<32xf32>
    %41 = vector.shape_cast %40 : vector<32xf32> to vector<1x32xf32>
    %c1 = arith.constant 1 : index
    %c0_26 = arith.constant 0 : index
    %42 = vector.load %arg11[%c1, %c0_26] : memref<8x32xf32, #tpu.memory_space<vmem>>, vector<1x32xf32>
    tpu.vector_store %arg11[%c1, %c0_26], %41 {strides = array<i32>} : memref<8x32xf32, #tpu.memory_space<vmem>>, vector<1x32xf32>,
    return
  }
  func.func @transform_0(%arg0: i32) -> (i32, i32) {
    %c0_i32 = arith.constant 0 : i32
    %c0_i32_0 = arith.constant 0 : i32
    return %arg0, %c0_i32 : i32, i32
  }
  func.func @transform_1(%arg0: i32) -> (i32, i32) {
    %c0_i32 = arith.constant 0 : i32
    %c0_i32_0 = arith.constant 0 : i32
    return %arg0, %c0_i32 : i32, i32
  }
  func.func @transform_2(%arg0: i32) -> (i32, i32) {
    %c0_i32 = arith.constant 0 : i32
    %c0_i32_0 = arith.constant 0 : i32
    return %arg0, %c0_i32 : i32, i32
  }
  func.func @transform_3(%arg0: i32) -> (i32, i32) {
    %c0_i32 = arith.constant 0 : i32
    %c0_i32_0 = arith.constant 0 : i32
    %c0_i32_1 = arith.constant 0 : i32
    return %c0_i32, %c0_i32_0 : i32, i32
  }
  func.func @transform_4(%arg0: i32) -> (i32, i32) {
    %c0_i32 = arith.constant 0 : i32
    %c0_i32_0 = arith.constant 0 : i32
    %c0_i32_1 = arith.constant 0 : i32
    return %c0_i32, %c0_i32_0 : i32, i32
  }
  func.func @transform_5(%arg0: i32) -> (i32, i32) {
    %c0_i32 = arith.constant 0 : i32
    %c0_i32_0 = arith.constant 0 : i32
    %c0_i32_1 = arith.constant 0 : i32
    return %c0_i32, %c0_i32_0 : i32, i32
  }
  func.func @transform_6(%arg0: i32) -> (i32, i32) {
    %c0_i32 = arith.constant 0 : i32
    %c0_i32_0 = arith.constant 0 : i32
    %c0_i32_1 = arith.constant 0 : i32
    return %c0_i32, %c0_i32_0 : i32, i32
  }
  func.func @transform_7(%arg0: i32) -> (i32, i32) {
    %c0_i32 = arith.constant 0 : i32
    %c0_i32_0 = arith.constant 0 : i32
    %c0_i32_1 = arith.constant 0 : i32
    return %c0_i32, %c0_i32_0 : i32, i32
  }
  func.func @transform_8(%arg0: i32) -> (i32, i32) {
    %c0_i32 = arith.constant 0 : i32
    %c0_i32_0 = arith.constant 0 : i32
    %c0_i32_1 = arith.constant 0 : i32
    return %c0_i32, %c0_i32_0 : i32, i32
  }
  func.func @transform_9(%arg0: i32) -> (i32, i32) {
    %c0_i32 = arith.constant 0 : i32
    %c0_i32_0 = arith.constant 0 : i32
    return %arg0, %c0_i32 : i32, i32
  }
  func.func @transform_10(%arg0: i32) -> (i32, i32) {
    %c0_i32 = arith.constant 0 : i32
    %c0_i32_0 = arith.constant 0 : i32
    return %arg0, %c0_i32 : i32, i32
  }
}

</mosaic_0001>

<llo_original>
// kernel: convmixer_forward.4
$region0: #{convmixer_forward.4}
  #allocation0 [shape = 'u32[]', space=smem, size = 0x4, offset = 0x4, fixed_abs, tag = 'smem constant byte address 0x4 - core index']
  #allocation1 [shape = 'u32[144,128]{1,0:T(1,128)}', space=vmem, size = 0x12000, scoped, tag = 'internal scratch']
  %s0 = inlined_call_operand.vmem [shape: bf16[1216,32], index: 0, kind: input, shape index: {}]
  %s1 = inlined_call_operand.vmem [shape: f32[304,1], index: 1, kind: input, shape index: {}]
  %s2 = inlined_call_operand.vmem [shape: f32[1,32], index: 2, kind: input, shape index: {}]
  %s3 = inlined_call_operand.vmem [shape: f32[1,32], index: 3, kind: input, shape index: {}]
  %s4 = inlined_call_operand.vmem [shape: f32[9,32], index: 4, kind: input, shape index: {}]
  %s5 = inlined_call_operand.vmem [shape: f32[1,32], index: 5, kind: input, shape index: {}]
  %s6 = inlined_call_operand.vmem [shape: bf16[1216,32], index: 6, kind: output, shape index: {0}]
  %s7 = inlined_call_operand.vmem [shape: f32[32,32], index: 7, kind: output, shape index: {1}]
  %8 = xla_tuple %s6, %s7
  %s9 = sld [smem:[#allocation0]]
  $region65: #{convmixer_forward.4} parent=0
    _
  %s11 = ssub.s32 1, %s9
  %s12 = scalar_select 0, %s11, %s9
  loop: start=0, step=1, limit=6
  $region2: #{convmixer_forward.4} parent=0 // loop_pre_header
    _
  $region3: #{convmixer_forward.4} parent=0 // loop_header
    %s14 = sphi 0, %s18
    %p15 = scmp.ge.s32.totalorder %s14, 6
    %s24 = sphi 0, %s26
    %s27 = sphi 0, %s24
    %s28 = sphi 0, %s27
    %s44 = sphi 0, %s28
    %s48 = sphi 0, %s48
    %s50 = sphi 0, %s48
    %s51 = sphi 0, %s50
    %s65 = sphi 0, %s51
    %s69 = sphi 0, %s69
    %s71 = sphi 0, %s69
    %s72 = sphi 0, %s71
    %s86 = sphi 0, %s72
    %s90 = sphi 0, %s90
    %s92 = sphi 0, %s90
    %s93 = sphi 0, %s92
    %s107 = sphi 0, %s93
    %s111 = sphi 0, %s111
    %s113 = sphi 0, %s111
    %s114 = sphi 0, %s113
    %s128 = sphi 0, %s114
    %s132 = sphi 0, %s132
    %s134 = sphi 0, %s132
    %s135 = sphi 0, %s134
    %s149 = sphi 0, %s135
    %s155 = sphi 0, %s157
    %s158 = sphi 0, %s155
    %s159 = sphi 0, %s158
    %s175 = sphi 0, %s159
    %s181 = sphi 0, %s183
    %s184 = sphi 0, %s181
    %s185 = sphi 0, %s184
    %s201 = sphi 0, %s185
  $region4: #{convmixer_forward.4} parent=0 // loop_header_branch
    %17 = sbr.rel (%p15) target = $region8
  $region5: #{convmixer_forward.4} parent=0 // loop_body
    %s19 = ssub.s32 %s14, 1
    %s20 = ssub.s32 %s14, 2
    %s21 = sadd.s32 %s14, 1
    %s22 = ssub.s32 %s14, %s21
    %p23 = scmp.eq.s32.totalorder %s22, 0
    %s25 = sadd.s32 %s24, 1
    %s26 = scalar_select %p23, %s24, %s25
    %p29 = pneg %p23
    %p30 = scmp.eq.s32.totalorder %s14, 3
    %p31 = por %p29, %p30
    %p32 = scmp.ne.s32.totalorder %s24, %s27
    %p33 = scmp.eq.s32.totalorder %s14, 0
    %p34 = por %p32, %p33
    %p35 = scmp.ne.s32.totalorder %s24, %s27
    %p36 = scmp.eq.s32.totalorder %s19, 3
    %p37 = por %p35, %p36
    %p38 = scmp.ne.s32.totalorder %s27, %s28
    %p39 = scmp.eq.s32.totalorder %s19, 0
    %p40 = por %p38, %p39
    %p41 = scmp.ne.s32.totalorder %s27, %s28
    %p42 = scmp.eq.s32.totalorder %s20, 3
    %p43 = por %p41, %p42
    %p45 = scmp.ne.s32.totalorder %s28, %s44
    %p46 = scmp.eq.s32.totalorder %s20, 0
    %p47 = por %p45, %p46
    %s49 = sadd.s32 %s48, 1
    %p52 = scmp.eq.s32.totalorder %s14, 3
    %p53 = scmp.ne.s32.totalorder %s48, %s50
    %p54 = scmp.eq.s32.totalorder %s14, 0
    %p55 = por %p53, %p54
    %p56 = scmp.ne.s32.totalorder %s48, %s50
    %p57 = scmp.eq.s32.totalorder %s19, 3
    %p58 = por %p56, %p57
    %p59 = scmp.ne.s32.totalorder %s50, %s51
    %p60 = scmp.eq.s32.totalorder %s19, 0
    %p61 = por %p59, %p60
    %p62 = scmp.ne.s32.totalorder %s50, %s51
    %p63 = scmp.eq.s32.totalorder %s20, 3
    %p64 = por %p62, %p63
    %p66 = scmp.ne.s32.totalorder %s51, %s65
    %p67 = scmp.eq.s32.totalorder %s20, 0
    %p68 = por %p66, %p67
    %s70 = sadd.s32 %s69, 1
    %p73 = scmp.eq.s32.totalorder %s14, 3
    %p74 = scmp.ne.s32.totalorder %s69, %s71
    %p75 = scmp.eq.s32.totalorder %s14, 0
    %p76 = por %p74, %p75
    %p77 = scmp.ne.s32.totalorder %s69, %s71
    %p78 = scmp.eq.s32.totalorder %s19, 3
    %p79 = por %p77, %p78
    %p80 = scmp.ne.s32.totalorder %s71, %s72
    %p81 = scmp.eq.s32.totalorder %s19, 0
    %p82 = por %p80, %p81
    %p83 = scmp.ne.s32.totalorder %s71, %s72
    %p84 = scmp.eq.s32.totalorder %s20, 3
    %p85 = por %p83, %p84
    %p87 = scmp.ne.s32.totalorder %s72, %s86
    %p88 = scmp.eq.s32.totalorder %s20, 0
    %p89 = por %p87, %p88
    %s91 = sadd.s32 %s90, 1
    %p94 = scmp.eq.s32.totalorder %s14, 3
    %p95 = scmp.ne.s32.totalorder %s90, %s92
    %p96 = scmp.eq.s32.totalorder %s14, 0
    %p97 = por %p95, %p96
    %p98 = scmp.ne.s32.totalorder %s90, %s92
    %p99 = scmp.eq.s32.totalorder %s19, 3
    %p100 = por %p98, %p99
    %p101 = scmp.ne.s32.totalorder %s92, %s93
    %p102 = scmp.eq.s32.totalorder %s19, 0
    %p103 = por %p101, %p102
    %p104 = scmp.ne.s32.totalorder %s92, %s93
    %p105 = scmp.eq.s32.totalorder %s20, 3
    %p106 = por %p104, %p105
    %p108 = scmp.ne.s32.totalorder %s93, %s107
    %p109 = scmp.eq.s32.totalorder %s20, 0
    %p110 = por %p108, %p109
    %s112 = sadd.s32 %s111, 1
    %p115 = scmp.eq.s32.totalorder %s14, 3
    %p116 = scmp.ne.s32.totalorder %s111, %s113
    %p117 = scmp.eq.s32.totalorder %s14, 0
    %p118 = por %p116, %p117
    %p119 = scmp.ne.s32.totalorder %s111, %s113
    %p120 = scmp.eq.s32.totalorder %s19, 3
    %p121 = por %p119, %p120
    %p122 = scmp.ne.s32.totalorder %s113, %s114
    %p123 = scmp.eq.s32.totalorder %s19, 0
    %p124 = por %p122, %p123
    %p125 = scmp.ne.s32.totalorder %s113, %s114
    %p126 = scmp.eq.s32.totalorder %s20, 3
    %p127 = por %p125, %p126
    %p129 = scmp.ne.s32.totalorder %s114, %s128
    %p130 = scmp.eq.s32.totalorder %s20, 0
    %p131 = por %p129, %p130
    %s133 = sadd.s32 %s132, 1
    %p136 = scmp.eq.s32.totalorder %s14, 3
    %p137 = scmp.ne.s32.totalorder %s132, %s134
    %p138 = scmp.eq.s32.totalorder %s14, 0
    %p139 = por %p137, %p138
    %p140 = scmp.ne.s32.totalorder %s132, %s134
    %p141 = scmp.eq.s32.totalorder %s19, 3
    %p142 = por %p140, %p141
    %p143 = scmp.ne.s32.totalorder %s134, %s135
    %p144 = scmp.eq.s32.totalorder %s19, 0
    %p145 = por %p143, %p144
    %p146 = scmp.ne.s32.totalorder %s134, %s135
    %p147 = scmp.eq.s32.totalorder %s20, 3
    %p148 = por %p146, %p147
    %p150 = scmp.ne.s32.totalorder %s135, %s149
    %p151 = scmp.eq.s32.totalorder %s20, 0
    %p152 = por %p150, %p151
    %s153 = ssub.s32 %s14, %s21
    %p154 = scmp.eq.s32.totalorder %s153, 0
    %s156 = sadd.s32 %s155, 1
    %s157 = scalar_select %p154, %s155, %s156
    %p160 = pneg %p154
    %p161 = scmp.eq.s32.totalorder %s14, 3
    %p162 = por %p160, %p161
    %p163 = scmp.ne.s32.totalorder %s155, %s158
    %p164 = scmp.eq.s32.totalorder %s14, 0
    %p165 = por %p163, %p164
    %p166 = scmp.ne.s32.totalorder %s155, %s158
    %p167 = scmp.eq.s32.totalorder %s19, 3
    %p168 = por %p166, %p167
    %p169 = scmp.ne.s32.totalorder %s158, %s159
    %p170 = scmp.eq.s32.totalorder %s19, 0
    %p171 = por %p169, %p170
    %p172 = scmp.ne.s32.totalorder %s158, %s159
    %p173 = scmp.eq.s32.totalorder %s20, 3
    %p174 = por %p172, %p173
    %p176 = scmp.ne.s32.totalorder %s159, %s175
    %p177 = scmp.eq.s32.totalorder %s20, 0
    %p178 = por %p176, %p177
    %s179 = ssub.s32 %s14, %s21
    %p180 = scmp.eq.s32.totalorder %s179, 0
    %s182 = sadd.s32 %s181, 1
    %s183 = scalar_select %p180, %s181, %s182
    %p186 = pneg %p180
    %p187 = scmp.eq.s32.totalorder %s14, 3
    %p188 = por %p186, %p187
    %p189 = scmp.ne.s32.totalorder %s181, %s184
    %p190 = scmp.eq.s32.totalorder %s14, 0
    %p191 = por %p189, %p190
    %p192 = scmp.ne.s32.totalorder %s181, %s184
    %p193 = scmp.eq.s32.totalorder %s19, 3
    %p194 = por %p192, %p193
    %p195 = scmp.ne.s32.totalorder %s184, %s185
    %p196 = scmp.eq.s32.totalorder %s19, 0
    %p197 = por %p195, %p196
    %p198 = scmp.ne.s32.totalorder %s184, %s185
    %p199 = scmp.eq.s32.totalorder %s20, 3
    %p200 = por %p198, %p199
    %p202 = scmp.ne.s32.totalorder %s185, %s201
    %p203 = scmp.eq.s32.totalorder %s20, 0
    %p204 = por %p202, %p203
    %p205 = scmp.le.s32.totalorder 1, %s14
    %p206 = scmp.lt.s32.totalorder %s14, 5
    %p207 = pnand %p205, %p206
    %p208 = pneg %p207
    // Predicated region
    $region9: #{convmixer_forward.4} parent=5 // pred_check
      _
    $region10: #{convmixer_forward.4} parent=5 // pred_check_branch
      %210 = sbr.rel (%p207) target = $region12
    $region11: #{convmixer_forward.4} parent=5 // pred_region
      %s211 = ssub.s32 %s14, 1
      // Predicated region
      $region13: #{convmixer_forward.4} parent=11 // pred_check
        %p212 = pneg %p61
      $region14: #{convmixer_forward.4} parent=11 // pred_check_branch
        %214 = sbr.rel (%p212) target = $region16
      $region15: #{convmixer_forward.4} parent=11 // pred_region
        _
      $region16: #{convmixer_forward.4} parent=11 // pred_fallthru
        _
      // Predicated region
      $region17: #{convmixer_forward.4} parent=11 // pred_check
        %p215 = pneg %p82
      $region18: #{convmixer_forward.4} parent=11 // pred_check_branch
        %217 = sbr.rel (%p215) target = $region20
      $region19: #{convmixer_forward.4} parent=11 // pred_region
        _
      $region20: #{convmixer_forward.4} parent=11 // pred_fallthru
        _
      // Predicated region
      $region21: #{convmixer_forward.4} parent=11 // pred_check
        %p218 = pneg %p103
      $region22: #{convmixer_forward.4} parent=11 // pred_check_branch
        %220 = sbr.rel (%p218) target = $region24
      $region23: #{convmixer_forward.4} parent=11 // pred_region
        _
      $region24: #{convmixer_forward.4} parent=11 // pred_fallthru
        _
      // Predicated region
      $region25: #{convmixer_forward.4} parent=11 // pred_check
        %p221 = pneg %p124
      $region26: #{convmixer_forward.4} parent=11 // pred_check_branch
        %223 = sbr.rel (%p221) target = $region28
      $region27: #{convmixer_forward.4} parent=11 // pred_region
        _
      $region28: #{convmixer_forward.4} parent=11 // pred_fallthru
        _
      // Predicated region
      $region29: #{convmixer_forward.4} parent=11 // pred_check
        %p224 = pneg %p145
      $region30: #{convmixer_forward.4} parent=11 // pred_check_branch
        %226 = sbr.rel (%p224) target = $region32
      $region31: #{convmixer_forward.4} parent=11 // pred_region
        _
      $region32: #{convmixer_forward.4} parent=11 // pred_fallthru
        _
    $region12: #{convmixer_forward.4} parent=5 // pred_fallthru
      _
    %p227 = scmp.lt.s32.totalorder %s14, 4
    // Predicated region
    $region33: #{convmixer_forward.4} parent=5 // pred_check
      %p228 = pneg %p227
    $region34: #{convmixer_forward.4} parent=5 // pred_check_branch
      %230 = sbr.rel (%p228) target = $region36
    $region35: #{convmixer_forward.4} parent=5 // pred_region
      // Predicated region
      $region37: #{convmixer_forward.4} parent=35 // pred_check
        %p231 = pneg %p34
      $region38: #{convmixer_forward.4} parent=35 // pred_check_branch
        %233 = sbr.rel (%p231) target = $region40
      $region39: #{convmixer_forward.4} parent=35 // pred_region
        %s234 = smul.u32 38, %s14
        %p235 = scmp.lt.s32.totalorder %s234, 151
        %s236 = scalar_select %p235, %s234, 151
        %s237 = smul.addr %s236, 4
        %s238 = scalar_lea.vmem %s0, %s237
        %s239 = smul.u32 38, %s14
      $region40: #{convmixer_forward.4} parent=35 // pred_fallthru
        _
    $region36: #{convmixer_forward.4} parent=5 // pred_fallthru
      _
    %p240 = scmp.le.s32.totalorder 1, %s14
    %p241 = scmp.lt.s32.totalorder %s14, 5
    %p242 = pnand %p240, %p241
    %p243 = pneg %p242
    // Predicated region
    $region41: #{convmixer_forward.4} parent=5 // pred_check
      _
    $region42: #{convmixer_forward.4} parent=5 // pred_check_branch
      %245 = sbr.rel (%p242) target = $region44
    $region43: #{convmixer_forward.4} parent=5 // pred_region
      %s246 = ssub.s32 %s14, 1
      %s247 = smul.u32 38, %s19
      %p248 = scmp.lt.s32.totalorder %s247, 151
      %s249 = scalar_select %p248, %s247, 151
      %s250 = smul.addr %s249, 4
      %s251 = scalar_lea.vmem %s0, %s250
      %p252 = pneg %p40
      %p253 = pneg %p37
      %p254 = pneg %p61
      %p255 = pneg %p58
      %p256 = pneg %p82
      %p257 = pneg %p79
      %p258 = pneg %p103
      %p259 = pneg %p100
      %p260 = pneg %p124
      %p261 = pneg %p121
      %p262 = pneg %p145
      %p263 = pneg %p142
      %p264 = pneg %p171
      %p265 = pneg %p168
      %s266 = smul.u32 38, %s19
      %p267 = scmp.lt.s32.totalorder %s266, 151
      %s268 = scalar_select %p267, %s266, 151
      %s269 = smul.addr %s268, 4
      %s270 = scalar_lea.vmem %s6, %s269
      %p271 = pneg %p197
      %p272 = pneg %p194
      %p273 = scmp.lt.s32.totalorder %s19, 3
      %s274 = scalar_select %p273, %s19, 3
      %s275 = smul.addr %s274, 8
      %s276 = scalar_lea.vmem %s7, %s275
      %s277 = smul.u32 38, %s19
      %p278 = scmp.lt.s32.totalorder %s277, 151
      %s279 = scalar_select %p278, %s277, 151
      %s280 = smul.addr %s279, 4
      %s281 = scalar_lea.vmem %s0, %s280
      %s282 = smul.u32 38, %s19
      %s283 = smul.u32 38, %s19
      %p284 = scmp.lt.s32.totalorder %s283, 151
      %s285 = scalar_select %p284, %s283, 151
      %s286 = smul.addr %s285, 4
      %s287 = scalar_lea.vmem %s6, %s286
      %s288 = smul.u32 38, %s19
      %p289 = scmp.lt.s32.totalorder %s19, 3
      %s290 = scalar_select %p289, %s19, 3
      %s291 = smul.addr %s290, 8
      %s292 = scalar_lea.vmem %s7, %s291
      %v293 = vld [vmem:[%s1] sm:$0xff]
      %v294 = vld [vmem:[%s1 + $0x8] sm:$0xff]
      %v295 = vld [vmem:[%s1 + $0x10] sm:$0xff]
      %v296 = vld [vmem:[%s1 + $0x18] sm:$0xff]
      %v297 = vld [vmem:[%s1 + $0x20] sm:$0xff]
      %v298 = vld [vmem:[%s1 + $0x28] sm:$0xff]
      %v299 = vld [vmem:[%s1 + $0x30] sm:$0xff]
      %v300 = vld [vmem:[%s1 + $0x38] sm:$0xff]
      %v301 = vld [vmem:[%s1 + $0x40] sm:$0xff]
      %v302 = vld [vmem:[%s1 + $0x48] sm:$0xff]
      %v303 = vld [vmem:[%s1 + $0x50] sm:$0xff]
      %v304 = vld [vmem:[%s1 + $0x58] sm:$0xff]
      %v305 = vld [vmem:[%s1 + $0x60] sm:$0xff]
      %v306 = vld [vmem:[%s1 + $0x68] sm:$0xff]
      %v307 = vld [vmem:[%s1 + $0x70] sm:$0xff]
      %v308 = vld [vmem:[%s1 + $0x78] sm:$0xff]
      %v309 = vld [vmem:[%s1 + $0x80] sm:$0xff]
      %v310 = vld [vmem:[%s1 + $0x88] sm:$0xff]
      %v311 = vld [vmem:[%s1 + $0x90] sm:$0xff]
      %v312 = vld [vmem:[%s1 + $0x98] sm:$0xff]
      %v313 = vld [vmem:[%s1 + $0xa0] sm:$0xff]
      %v314 = vld [vmem:[%s1 + $0xa8] sm:$0xff]
      %v315 = vld [vmem:[%s1 + $0xb0] sm:$0xff]
      %v316 = vld [vmem:[%s1 + $0xb8] sm:$0xff]
      %v317 = vld [vmem:[%s1 + $0xc0] sm:$0xff]
      %v318 = vld [vmem:[%s1 + $0xc8] sm:$0xff]
      %v319 = vld [vmem:[%s1 + $0xd0] sm:$0xff]
      %v320 = vld [vmem:[%s1 + $0xd8] sm:$0xff]
      %v321 = vld [vmem:[%s1 + $0xe0] sm:$0xff]
      %v322 = vld [vmem:[%s1 + $0xe8] sm:$0xff]
      %v323 = vld [vmem:[%s1 + $0xf0] sm:$0xff]
      %v324 = vld [vmem:[%s1 + $0xf8] sm:$0xff]
      %v325 = vld [vmem:[%s1 + $0x100] sm:$0xff]
      %v326 = vld [vmem:[%s1 + $0x108] sm:$0xff]
      %v327 = vld [vmem:[%s1 + $0x110] sm:$0xff]
      %v328 = vld [vmem:[%s1 + $0x118] sm:$0xff]
      %v329 = vld [vmem:[%s1 + $0x120] sm:$0xff]
      %v330 = vld [vmem:[%s1 + $0x128] sm:$0xff]
      %v331 = vld [vmem:[%s281] sm:$0xf]
      %v332 = vld [vmem:[%s281 + $0x4] sm:$0xf]
      %v333 = vld [vmem:[%s281 + $0x8] sm:$0xf]
      %v334 = vld [vmem:[%s281 + $0xc] sm:$0xf]
      %v335 = vld [vmem:[%s281 + $0x10] sm:$0xf]
      %v336 = vld [vmem:[%s281 + $0x14] sm:$0xf]
      %v337 = vld [vmem:[%s281 + $0x18] sm:$0xf]
      %v338 = vld [vmem:[%s281 + $0x1c] sm:$0xf]
      %v339 = vld [vmem:[%s281 + $0x20] sm:$0xf]
      %v340 = vld [vmem:[%s281 + $0x24] sm:$0xf]
      %v341 = vld [vmem:[%s281 + $0x28] sm:$0xf]
      %v342 = vld [vmem:[%s281 + $0x2c] sm:$0xf]
      %v343 = vld [vmem:[%s281 + $0x30] sm:$0xf]
      %v344 = vld [vmem:[%s281 + $0x34] sm:$0xf]
      %v345 = vld [vmem:[%s281 + $0x38] sm:$0xf]
      %v346 = vld [vmem:[%s281 + $0x3c] sm:$0xf]
      %v347 = vld [vmem:[%s281 + $0x40] sm:$0xf]
      %v348 = vld [vmem:[%s281 + $0x44] sm:$0xf]
      %v349 = vld [vmem:[%s281 + $0x48] sm:$0xf]
      %v350 = vld [vmem:[%s281 + $0x4c] sm:$0xf]
      %v351 = vld [vmem:[%s281 + $0x50] sm:$0xf]
      %v352 = vld [vmem:[%s281 + $0x54] sm:$0xf]
      %v353 = vld [vmem:[%s281 + $0x58] sm:$0xf]
      %v354 = vld [vmem:[%s281 + $0x5c] sm:$0xf]
      %v355 = vld [vmem:[%s281 + $0x60] sm:$0xf]
      %v356 = vld [vmem:[%s281 + $0x64] sm:$0xf]
      %v357 = vld [vmem:[%s281 + $0x68] sm:$0xf]
      %v358 = vld [vmem:[%s281 + $0x6c] sm:$0xf]
      %v359 = vld [vmem:[%s281 + $0x70] sm:$0xf]
      %v360 = vld [vmem:[%s281 + $0x74] sm:$0xf]
      %v361 = vld [vmem:[%s281 + $0x78] sm:$0xf]
      %v362 = vld [vmem:[%s281 + $0x7c] sm:$0xf]
      %v363 = vld [vmem:[%s281 + $0x80] sm:$0xf]
      %v364 = vld [vmem:[%s281 + $0x84] sm:$0xf]
      %v365 = vld [vmem:[%s281 + $0x88] sm:$0xf]
      %v366 = vld [vmem:[%s281 + $0x8c] sm:$0xf]
      %v367 = vld [vmem:[%s281 + $0x90] sm:$0xf]
      %v368 = vld [vmem:[%s281 + $0x94] sm:$0xf]
      %v369 = vunpack.c.l.bf16 %v331
      %v370 = vunpack.c.l.bf16 %v332
      %v371 = vunpack.c.l.bf16 %v333
      %v372 = vunpack.c.l.bf16 %v334
      %v373 = vunpack.c.l.bf16 %v335
      %v374 = vunpack.c.l.bf16 %v336
      %v375 = vunpack.c.l.bf16 %v337
      %v376 = vunpack.c.l.bf16 %v338
      %v377 = vunpack.c.l.bf16 %v339
      %v378 = vunpack.c.l.bf16 %v340
      %v379 = vunpack.c.l.bf16 %v341
      %v380 = vunpack.c.l.bf16 %v342
      %v381 = vunpack.c.l.bf16 %v343
      %v382 = vunpack.c.l.bf16 %v344
      %v383 = vunpack.c.l.bf16 %v345
      %v384 = vunpack.c.l.bf16 %v346
      %v385 = vunpack.c.l.bf16 %v347
      %v386 = vunpack.c.l.bf16 %v348
      %v387 = vunpack.c.l.bf16 %v349
      %v388 = vunpack.c.l.bf16 %v350
      %v389 = vunpack.c.l.bf16 %v351
      %v390 = vunpack.c.l.bf16 %v352
      %v391 = vunpack.c.l.bf16 %v353
      %v392 = vunpack.c.l.bf16 %v354
      %v393 = vunpack.c.l.bf16 %v355
      %v394 = vunpack.c.l.bf16 %v356
      %v395 = vunpack.c.l.bf16 %v357
      %v396 = vunpack.c.l.bf16 %v358
      %v397 = vunpack.c.l.bf16 %v359
      %v398 = vunpack.c.l.bf16 %v360
      %v399 = vunpack.c.l.bf16 %v361
      %v400 = vunpack.c.l.bf16 %v362
      %v401 = vunpack.c.l.bf16 %v363
      %v402 = vunpack.c.l.bf16 %v364
      %v403 = vunpack.c.l.bf16 %v365
      %v404 = vunpack.c.l.bf16 %v366
      %v405 = vunpack.c.l.bf16 %v367
      %v406 = vunpack.c.l.bf16 %v368
      %v407 = vld [vmem:[%s2] sm:$0x1]
      %v409 = vlaneseq
      %v410 = vshrl.u32 %v409, 7
      %v411 = vsub.s32 0, %v410
      %v412 = vrot.slane %v407, %v411
      %v414 = vmul.f32 %v369, %v412
      %v415 = vmul.f32 %v370, %v412
      %v416 = vmul.f32 %v371, %v412
      %v417 = vmul.f32 %v372, %v412
      %v418 = vmul.f32 %v373, %v412
      %v419 = vmul.f32 %v374, %v412
      %v420 = vmul.f32 %v375, %v412
      %v421 = vmul.f32 %v376, %v412
      %v422 = vmul.f32 %v377, %v412
      %v423 = vmul.f32 %v378, %v412
      %v424 = vmul.f32 %v379, %v412
      %v425 = vmul.f32 %v380, %v412
      %v426 = vmul.f32 %v381, %v412
      %v427 = vmul.f32 %v382, %v412
      %v428 = vmul.f32 %v383, %v412
      %v429 = vmul.f32 %v384, %v412
      %v430 = vmul.f32 %v385, %v412
      %v431 = vmul.f32 %v386, %v412
      %v432 = vmul.f32 %v387, %v412
      %v433 = vmul.f32 %v388, %v412
      %v434 = vmul.f32 %v389, %v412
      %v435 = vmul.f32 %v390, %v412
      %v436 = vmul.f32 %v391, %v412
      %v437 = vmul.f32 %v392, %v412
      %v438 = vmul.f32 %v393, %v412
      %v439 = vmul.f32 %v394, %v412
      %v440 = vmul.f32 %v395, %v412
      %v441 = vmul.f32 %v396, %v412
      %v442 = vmul.f32 %v397, %v412
      %v443 = vmul.f32 %v398, %v412
      %v444 = vmul.f32 %v399, %v412
      %v445 = vmul.f32 %v400, %v412
      %v446 = vmul.f32 %v401, %v412
      %v447 = vmul.f32 %v402, %v412
      %v448 = vmul.f32 %v403, %v412
      %v449 = vmul.f32 %v404, %v412
      %v450 = vmul.f32 %v405, %v412
      %v451 = vmul.f32 %v406, %v412
      %v452 = vld [vmem:[%s3] sm:$0x1]
      %v454 = vlaneseq
      %v455 = vshrl.u32 %v454, 7
      %v456 = vsub.s32 0, %v455
      %v457 = vrot.slane %v452, %v456
      %v459 = vadd.f32 %v414, %v457
      %v460 = vadd.f32 %v415, %v457
      %v461 = vadd.f32 %v416, %v457
      %v462 = vadd.f32 %v417, %v457
      %v463 = vadd.f32 %v418, %v457
      %v464 = vadd.f32 %v419, %v457
      %v465 = vadd.f32 %v420, %v457
      %v466 = vadd.f32 %v421, %v457
      %v467 = vadd.f32 %v422, %v457
      %v468 = vadd.f32 %v423, %v457
      %v469 = vadd.f32 %v424, %v457
      %v470 = vadd.f32 %v425, %v457
      %v471 = vadd.f32 %v426, %v457
      %v472 = vadd.f32 %v427, %v457
      %v473 = vadd.f32 %v428, %v457
      %v474 = vadd.f32 %v429, %v457
      %v475 = vadd.f32 %v430, %v457
      %v476 = vadd.f32 %v431, %v457
      %v477 = vadd.f32 %v432, %v457
      %v478 = vadd.f32 %v433, %v457
      %v479 = vadd.f32 %v434, %v457
      %v480 = vadd.f32 %v435, %v457
      %v481 = vadd.f32 %v436, %v457
      %v482 = vadd.f32 %v437, %v457
      %v483 = vadd.f32 %v438, %v457
      %v484 = vadd.f32 %v439, %v457
      %v485 = vadd.f32 %v440, %v457
      %v486 = vadd.f32 %v441, %v457
      %v487 = vadd.f32 %v442, %v457
      %v488 = vadd.f32 %v443, %v457
      %v489 = vadd.f32 %v444, %v457
      %v490 = vadd.f32 %v445, %v457
      %v491 = vadd.f32 %v446, %v457
      %v492 = vadd.f32 %v447, %v457
      %v493 = vadd.f32 %v448, %v457
      %v494 = vadd.f32 %v449, %v457
      %v495 = vadd.f32 %v450, %v457
      %v496 = vadd.f32 %v451, %v457
      %498 = vset.pattern.permute.xlu0 0
      %499 = vperm.xlu0 %498, %v293
      %v500 = vpop.permute.xlu0 %499
      %503 = vset.pattern.permute.xlu0 0
      %504 = vperm.xlu0 %503, %v294
      %v505 = vpop.permute.xlu0 %504
      %508 = vset.pattern.permute.xlu0 0
      %509 = vperm.xlu0 %508, %v295
      %v510 = vpop.permute.xlu0 %509
      %513 = vset.pattern.permute.xlu0 0
      %514 = vperm.xlu0 %513, %v296
      %v515 = vpop.permute.xlu0 %514
      %518 = vset.pattern.permute.xlu0 0
      %519 = vperm.xlu0 %518, %v297
      %v520 = vpop.permute.xlu0 %519
      %523 = vset.pattern.permute.xlu0 0
      %524 = vperm.xlu0 %523, %v298
      %v525 = vpop.permute.xlu0 %524
      %528 = vset.pattern.permute.xlu0 0
      %529 = vperm.xlu0 %528, %v299
      %v530 = vpop.permute.xlu0 %529
      %533 = vset.pattern.permute.xlu0 0
      %534 = vperm.xlu0 %533, %v300
      %v535 = vpop.permute.xlu0 %534
      %538 = vset.pattern.permute.xlu0 0
      %539 = vperm.xlu0 %538, %v301
      %v540 = vpop.permute.xlu0 %539
      %543 = vset.pattern.permute.xlu0 0
      %544 = vperm.xlu0 %543, %v302
      %v545 = vpop.permute.xlu0 %544
      %548 = vset.pattern.permute.xlu0 0
      %549 = vperm.xlu0 %548, %v303
      %v550 = vpop.permute.xlu0 %549
      %553 = vset.pattern.permute.xlu0 0
      %554 = vperm.xlu0 %553, %v304
      %v555 = vpop.permute.xlu0 %554
      %558 = vset.pattern.permute.xlu0 0
      %559 = vperm.xlu0 %558, %v305
      %v560 = vpop.permute.xlu0 %559
      %563 = vset.pattern.permute.xlu0 0
      %564 = vperm.xlu0 %563, %v306
      %v565 = vpop.permute.xlu0 %564
      %568 = vset.pattern.permute.xlu0 0
      %569 = vperm.xlu0 %568, %v307
      %v570 = vpop.permute.xlu0 %569
      %573 = vset.pattern.permute.xlu0 0
      %574 = vperm.xlu0 %573, %v308
      %v575 = vpop.permute.xlu0 %574
      %578 = vset.pattern.permute.xlu0 0
      %579 = vperm.xlu0 %578, %v309
      %v580 = vpop.permute.xlu0 %579
      %583 = vset.pattern.permute.xlu0 0
      %584 = vperm.xlu0 %583, %v310
      %v585 = vpop.permute.xlu0 %584
      %588 = vset.pattern.permute.xlu0 0
      %589 = vperm.xlu0 %588, %v311
      %v590 = vpop.permute.xlu0 %589
      %593 = vset.pattern.permute.xlu0 0
      %594 = vperm.xlu0 %593, %v312
      %v595 = vpop.permute.xlu0 %594
      %598 = vset.pattern.permute.xlu0 0
      %599 = vperm.xlu0 %598, %v313
      %v600 = vpop.permute.xlu0 %599
      %603 = vset.pattern.permute.xlu0 0
      %604 = vperm.xlu0 %603, %v314
      %v605 = vpop.permute.xlu0 %604
      %608 = vset.pattern.permute.xlu0 0
      %609 = vperm.xlu0 %608, %v315
      %v610 = vpop.permute.xlu0 %609
      %613 = vset.pattern.permute.xlu0 0
      %614 = vperm.xlu0 %613, %v316
      %v615 = vpop.permute.xlu0 %614
      %618 = vset.pattern.permute.xlu0 0
      %619 = vperm.xlu0 %618, %v317
      %v620 = vpop.permute.xlu0 %619
      %623 = vset.pattern.permute.xlu0 0
      %624 = vperm.xlu0 %623, %v318
      %v625 = vpop.permute.xlu0 %624
      %628 = vset.pattern.permute.xlu0 0
      %629 = vperm.xlu0 %628, %v319
      %v630 = vpop.permute.xlu0 %629
      %633 = vset.pattern.permute.xlu0 0
      %634 = vperm.xlu0 %633, %v320
      %v635 = vpop.permute.xlu0 %634
      %638 = vset.pattern.permute.xlu0 0
      %639 = vperm.xlu0 %638, %v321
      %v640 = vpop.permute.xlu0 %639
      %643 = vset.pattern.permute.xlu0 0
      %644 = vperm.xlu0 %643, %v322
      %v645 = vpop.permute.xlu0 %644
      %648 = vset.pattern.permute.xlu0 0
      %649 = vperm.xlu0 %648, %v323
      %v650 = vpop.permute.xlu0 %649
      %653 = vset.pattern.permute.xlu0 0
      %654 = vperm.xlu0 %653, %v324
      %v655 = vpop.permute.xlu0 %654
      %658 = vset.pattern.permute.xlu0 0
      %659 = vperm.xlu0 %658, %v325
      %v660 = vpop.permute.xlu0 %659
      %663 = vset.pattern.permute.xlu0 0
      %664 = vperm.xlu0 %663, %v326
      %v665 = vpop.permute.xlu0 %664
      %668 = vset.pattern.permute.xlu0 0
      %669 = vperm.xlu0 %668, %v327
      %v670 = vpop.permute.xlu0 %669
      %673 = vset.pattern.permute.xlu0 0
      %674 = vperm.xlu0 %673, %v328
      %v675 = vpop.permute.xlu0 %674
      %678 = vset.pattern.permute.xlu0 0
      %679 = vperm.xlu0 %678, %v329
      %v680 = vpop.permute.xlu0 %679
      %683 = vset.pattern.permute.xlu0 0
      %684 = vperm.xlu0 %683, %v330
      %v685 = vpop.permute.xlu0 %684
      %v687 = vmul.f32 %v459, %v500
      %v688 = vmul.f32 %v460, %v505
      %v689 = vmul.f32 %v461, %v510
      %v690 = vmul.f32 %v462, %v515
      %v691 = vmul.f32 %v463, %v520
      %v692 = vmul.f32 %v464, %v525
      %v693 = vmul.f32 %v465, %v530
      %v694 = vmul.f32 %v466, %v535
      %v695 = vmul.f32 %v467, %v540
      %v696 = vmul.f32 %v468, %v545
      %v697 = vmul.f32 %v469, %v550
      %v698 = vmul.f32 %v470, %v555
      %v699 = vmul.f32 %v471, %v560
      %v700 = vmul.f32 %v472, %v565
      %v701 = vmul.f32 %v473, %v570
      %v702 = vmul.f32 %v474, %v575
      %v703 = vmul.f32 %v475, %v580
      %v704 = vmul.f32 %v476, %v585
      %v705 = vmul.f32 %v477, %v590
      %v706 = vmul.f32 %v478, %v595
      %v707 = vmul.f32 %v479, %v600
      %v708 = vmul.f32 %v480, %v605
      %v709 = vmul.f32 %v481, %v610
      %v710 = vmul.f32 %v482, %v615
      %v711 = vmul.f32 %v483, %v620
      %v712 = vmul.f32 %v484, %v625
      %v713 = vmul.f32 %v485, %v630
      %v714 = vmul.f32 %v486, %v635
      %v715 = vmul.f32 %v487, %v640
      %v716 = vmul.f32 %v488, %v645
      %v717 = vmul.f32 %v489, %v650
      %v718 = vmul.f32 %v490, %v655
      %v719 = vmul.f32 %v491, %v660
      %v720 = vmul.f32 %v492, %v665
      %v721 = vmul.f32 %v493, %v670
      %v722 = vmul.f32 %v494, %v675
      %v723 = vmul.f32 %v495, %v680
      %v724 = vmul.f32 %v496, %v685
      %v725 = vld [vmem:[%s4] sm:$0xff]
      %v726 = vld [vmem:[%s4 + $0x8] sm:$0x1]
      %v727 = vlaneseq
      %v728 = vshrl.u32 %v727, 7
      %v729 = vsub.s32 4, %v728
      %v730 = vrot.slane %v725, %v729
      %v731 = vmul.f32 %v687, %v730
      %v732 = vmul.f32 %v688, %v730
      %v733 = vmul.f32 %v689, %v730
      %v734 = vmul.f32 %v690, %v730
      %v735 = vmul.f32 %v691, %v730
      %v736 = vmul.f32 %v692, %v730
      %v737 = vmul.f32 %v693, %v730
      %v738 = vmul.f32 %v694, %v730
      %v739 = vmul.f32 %v695, %v730
      %v740 = vmul.f32 %v696, %v730
      %v741 = vmul.f32 %v697, %v730
      %v742 = vmul.f32 %v698, %v730
      %v743 = vmul.f32 %v699, %v730
      %v744 = vmul.f32 %v700, %v730
      %v745 = vmul.f32 %v701, %v730
      %v746 = vmul.f32 %v702, %v730
      %v747 = vmul.f32 %v703, %v730
      %v748 = vmul.f32 %v704, %v730
      %v749 = vmul.f32 %v705, %v730
      %v750 = vmul.f32 %v706, %v730
      %v751 = vmul.f32 %v707, %v730
      %v752 = vmul.f32 %v708, %v730
      %v753 = vmul.f32 %v709, %v730
      %v754 = vmul.f32 %v710, %v730
      %v755 = vmul.f32 %v711, %v730
      %v756 = vmul.f32 %v712, %v730
      %v757 = vmul.f32 %v713, %v730
      %v758 = vmul.f32 %v714, %v730
      %v759 = vmul.f32 %v715, %v730
      %v760 = vmul.f32 %v716, %v730
      %v761 = vmul.f32 %v717, %v730
      %v762 = vmul.f32 %v718, %v730
      %v763 = vmul.f32 %v719, %v730
      %v764 = vmul.f32 %v720, %v730
      %v765 = vmul.f32 %v721, %v730
      %v766 = vmul.f32 %v722, %v730
      %v767 = vmul.f32 %v723, %v730
      %v768 = vmul.f32 %v724, %v730
      %v769 = vrot.slane %v687, 4
      %v770 = vrot.slane %v688, 4
      %v771 = vrot.slane %v689, 4
      %v772 = vrot.slane %v690, 4
      %v773 = vrot.slane %v691, 4
      %v774 = vrot.slane %v692, 4
      %v775 = vrot.slane %v693, 4
      %v776 = vrot.slane %v694, 4
      %v777 = vrot.slane %v695, 4
      %v778 = vrot.slane %v696, 4
      %v779 = vrot.slane %v697, 4
      %v780 = vrot.slane %v698, 4
      %v781 = vrot.slane %v699, 4
      %v782 = vrot.slane %v700, 4
      %v783 = vrot.slane %v701, 4
      %v784 = vrot.slane %v702, 4
      %v785 = vrot.slane %v703, 4
      %v786 = vrot.slane %v704, 4
      %v787 = vrot.slane %v705, 4
      %v788 = vrot.slane %v706, 4
      %v789 = vrot.slane %v707, 4
      %v790 = vrot.slane %v708, 4
      %v791 = vrot.slane %v709, 4
      %v792 = vrot.slane %v710, 4
      %v793 = vrot.slane %v711, 4
      %v794 = vrot.slane %v712, 4
      %v795 = vrot.slane %v713, 4
      %v796 = vrot.slane %v714, 4
      %v797 = vrot.slane %v715, 4
      %v798 = vrot.slane %v716, 4
      %v799 = vrot.slane %v717, 4
      %v800 = vrot.slane %v718, 4
      %v801 = vrot.slane %v719, 4
      %v802 = vrot.slane %v720, 4
      %v803 = vrot.slane %v721, 4
      %v804 = vrot.slane %v722, 4
      %v805 = vrot.slane %v723, 4
      %v806 = vrot.slane %v724, 4
      %v807 = vlaneseq
      %v808 = vshrl.u32 %v807, 7
      %vm809 = vcmp.lt.s32.totalorder %v808, 4
      %v810 = vsel %vm809, %v805, %v806
      %v811 = vsel %vm809, %v804, %v805
      %v812 = vsel %vm809, %v803, %v804
      %v813 = vsel %vm809, %v802, %v803
      %v814 = vsel %vm809, %v801, %v802
      %v815 = vsel %vm809, %v800, %v801
      %v816 = vsel %vm809, %v799, %v800
      %v817 = vsel %vm809, %v798, %v799
      %v818 = vsel %vm809, %v797, %v798
      %v819 = vsel %vm809, %v796, %v797
      %v820 = vsel %vm809, %v795, %v796
      %v821 = vsel %vm809, %v794, %v795
      %v822 = vsel %vm809, %v793, %v794
      %v823 = vsel %vm809, %v792, %v793
      %v824 = vsel %vm809, %v791, %v792
      %v825 = vsel %vm809, %v790, %v791
      %v826 = vsel %vm809, %v789, %v790
      %v827 = vsel %vm809, %v788, %v789
      %v828 = vsel %vm809, %v787, %v788
      %v829 = vsel %vm809, %v786, %v787
      %v830 = vsel %vm809, %v785, %v786
      %v831 = vsel %vm809, %v784, %v785
      %v832 = vsel %vm809, %v783, %v784
      %v833 = vsel %vm809, %v782, %v783
      %v834 = vsel %vm809, %v781, %v782
      %v835 = vsel %vm809, %v780, %v781
      %v836 = vsel %vm809, %v779, %v780
      %v837 = vsel %vm809, %v778, %v779
      %v838 = vsel %vm809, %v777, %v778
      %v839 = vsel %vm809, %v776, %v777
      %v840 = vsel %vm809, %v775, %v776
      %v841 = vsel %vm809, %v774, %v775
      %v842 = vsel %vm809, %v773, %v774
      %v843 = vsel %vm809, %v772, %v773
      %v844 = vsel %vm809, %v771, %v772
      %v845 = vsel %vm809, %v770, %v771
      %v846 = vsel %vm809, %v769, %v770
      %v847 = vsel %vm809, %v806, %v769
      %v848 = vlaneseq
      %v849 = vshrl.u32 %v848, 7
      %v850 = vsub.s32 0, %v849
      %v851 = vrot.slane %v725, %v850
      %v852 = vmul.f32 %v847, %v851
      %v853 = vmul.f32 %v846, %v851
      %v854 = vmul.f32 %v845, %v851
      %v855 = vmul.f32 %v844, %v851
      %v856 = vmul.f32 %v843, %v851
      %v857 = vmul.f32 %v842, %v851
      %v858 = vmul.f32 %v841, %v851
      %v859 = vmul.f32 %v840, %v851
      %v860 = vmul.f32 %v839, %v851
      %v861 = vmul.f32 %v838, %v851
      %v862 = vmul.f32 %v837, %v851
      %v863 = vmul.f32 %v836, %v851
      %v864 = vmul.f32 %v835, %v851
      %v865 = vmul.f32 %v834, %v851
      %v866 = vmul.f32 %v833, %v851
      %v867 = vmul.f32 %v832, %v851
      %v868 = vmul.f32 %v831, %v851
      %v869 = vmul.f32 %v830, %v851
      %v870 = vmul.f32 %v829, %v851
      %v871 = vmul.f32 %v828, %v851
      %v872 = vmul.f32 %v827, %v851
      %v873 = vmul.f32 %v826, %v851
      %v874 = vmul.f32 %v825, %v851
      %v875 = vmul.f32 %v824, %v851
      %v876 = vmul.f32 %v823, %v851
      %v877 = vmul.f32 %v822, %v851
      %v878 = vmul.f32 %v821, %v851
      %v879 = vmul.f32 %v820, %v851
      %v880 = vmul.f32 %v819, %v851
      %v881 = vmul.f32 %v818, %v851
      %v882 = vmul.f32 %v817, %v851
      %v883 = vmul.f32 %v816, %v851
      %v884 = vmul.f32 %v815, %v851
      %v885 = vmul.f32 %v814, %v851
      %v886 = vmul.f32 %v813, %v851
      %v887 = vmul.f32 %v812, %v851
      %v888 = vmul.f32 %v811, %v851
      %v889 = vmul.f32 %v810, %v851
      %v890 = vadd.f32 %v731, %v852
      %v891 = vadd.f32 %v732, %v853
      %v892 = vadd.f32 %v733, %v854
      %v893 = vadd.f32 %v734, %v855
      %v894 = vadd.f32 %v735, %v856
      %v895 = vadd.f32 %v736, %v857
      %v896 = vadd.f32 %v737, %v858
      %v897 = vadd.f32 %v738, %v859
      %v898 = vadd.f32 %v739, %v860
      %v899 = vadd.f32 %v740, %v861
      %v900 = vadd.f32 %v741, %v862
      %v901 = vadd.f32 %v742, %v863
      %v902 = vadd.f32 %v743, %v864
      %v903 = vadd.f32 %v744, %v865
      %v904 = vadd.f32 %v745, %v866
      %v905 = vadd.f32 %v746, %v867
      %v906 = vadd.f32 %v747, %v868
      %v907 = vadd.f32 %v748, %v869
      %v908 = vadd.f32 %v749, %v870
      %v909 = vadd.f32 %v750, %v871
      %v910 = vadd.f32 %v751, %v872
      %v911 = vadd.f32 %v752, %v873
      %v912 = vadd.f32 %v753, %v874
      %v913 = vadd.f32 %v754, %v875
      %v914 = vadd.f32 %v755, %v876
      %v915 = vadd.f32 %v756, %v877
      %v916 = vadd.f32 %v757, %v878
      %v917 = vadd.f32 %v758, %v879
      %v918 = vadd.f32 %v759, %v880
      %v919 = vadd.f32 %v760, %v881
      %v920 = vadd.f32 %v761, %v882
      %v921 = vadd.f32 %v762, %v883
      %v922 = vadd.f32 %v763, %v884
      %v923 = vadd.f32 %v764, %v885
      %v924 = vadd.f32 %v765, %v886
      %v925 = vadd.f32 %v766, %v887
      %v926 = vadd.f32 %v767, %v888
      %v927 = vadd.f32 %v768, %v889
      %v928 = vrot.slane %v687, 5
      %v929 = vrot.slane %v688, 5
      %v930 = vrot.slane %v689, 5
      %v931 = vrot.slane %v690, 5
      %v932 = vrot.slane %v691, 5
      %v933 = vrot.slane %v692, 5
      %v934 = vrot.slane %v693, 5
      %v935 = vrot.slane %v694, 5
      %v936 = vrot.slane %v695, 5
      %v937 = vrot.slane %v696, 5
      %v938 = vrot.slane %v697, 5
      %v939 = vrot.slane %v698, 5
      %v940 = vrot.slane %v699, 5
      %v941 = vrot.slane %v700, 5
      %v942 = vrot.slane %v701, 5
      %v943 = vrot.slane %v702, 5
      %v944 = vrot.slane %v703, 5
      %v945 = vrot.slane %v704, 5
      %v946 = vrot.slane %v705, 5
      %v947 = vrot.slane %v706, 5
      %v948 = vrot.slane %v707, 5
      %v949 = vrot.slane %v708, 5
      %v950 = vrot.slane %v709, 5
      %v951 = vrot.slane %v710, 5
      %v952 = vrot.slane %v711, 5
      %v953 = vrot.slane %v712, 5
      %v954 = vrot.slane %v713, 5
      %v955 = vrot.slane %v714, 5
      %v956 = vrot.slane %v715, 5
      %v957 = vrot.slane %v716, 5
      %v958 = vrot.slane %v717, 5
      %v959 = vrot.slane %v718, 5
      %v960 = vrot.slane %v719, 5
      %v961 = vrot.slane %v720, 5
      %v962 = vrot.slane %v721, 5
      %v963 = vrot.slane %v722, 5
      %v964 = vrot.slane %v723, 5
      %v965 = vrot.slane %v724, 5
      %vm966 = vcmp.lt.s32.totalorder %v808, 3
      %v967 = vsel %vm966, %v964, %v965
      %v968 = vsel %vm966, %v963, %v964
      %v969 = vsel %vm966, %v962, %v963
      %v970 = vsel %vm966, %v961, %v962
      %v971 = vsel %vm966, %v960, %v961
      %v972 = vsel %vm966, %v959, %v960
      %v973 = vsel %vm966, %v958, %v959
      %v974 = vsel %vm966, %v957, %v958
      %v975 = vsel %vm966, %v956, %v957
      %v976 = vsel %vm966, %v955, %v956
      %v977 = vsel %vm966, %v954, %v955
      %v978 = vsel %vm966, %v953, %v954
      %v979 = vsel %vm966, %v952, %v953
      %v980 = vsel %vm966, %v951, %v952
      %v981 = vsel %vm966, %v950, %v951
      %v982 = vsel %vm966, %v949, %v950
      %v983 = vsel %vm966, %v948, %v949
      %v984 = vsel %vm966, %v947, %v948
      %v985 = vsel %vm966, %v946, %v947
      %v986 = vsel %vm966, %v945, %v946
      %v987 = vsel %vm966, %v944, %v945
      %v988 = vsel %vm966, %v943, %v944
      %v989 = vsel %vm966, %v942, %v943
      %v990 = vsel %vm966, %v941, %v942
      %v991 = vsel %vm966, %v940, %v941
      %v992 = vsel %vm966, %v939, %v940
      %v993 = vsel %vm966, %v938, %v939
      %v994 = vsel %vm966, %v937, %v938
      %v995 = vsel %vm966, %v936, %v937
      %v996 = vsel %vm966, %v935, %v936
      %v997 = vsel %vm966, %v934, %v935
      %v998 = vsel %vm966, %v933, %v934
      %v999 = vsel %vm966, %v932, %v933
      %v1000 = vsel %vm966, %v931, %v932
      %v1001 = vsel %vm966, %v930, %v931
      %v1002 = vsel %vm966, %v929, %v930
      %v1003 = vsel %vm966, %v928, %v929
      %v1004 = vsel %vm966, %v965, %v928
      %v1005 = vlaneseq
      %v1006 = vshrl.u32 %v1005, 7
      %v1007 = vsub.s32 1, %v1006
      %v1008 = vrot.slane %v725, %v1007
      %v1009 = vmul.f32 %v1004, %v1008
      %v1010 = vmul.f32 %v1003, %v1008
      %v1011 = vmul.f32 %v1002, %v1008
      %v1012 = vmul.f32 %v1001, %v1008
      %v1013 = vmul.f32 %v1000, %v1008
      %v1014 = vmul.f32 %v999, %v1008
      %v1015 = vmul.f32 %v998, %v1008
      %v1016 = vmul.f32 %v997, %v1008
      %v1017 = vmul.f32 %v996, %v1008
      %v1018 = vmul.f32 %v995, %v1008
      %v1019 = vmul.f32 %v994, %v1008
      %v1020 = vmul.f32 %v993, %v1008
      %v1021 = vmul.f32 %v992, %v1008
      %v1022 = vmul.f32 %v991, %v1008
      %v1023 = vmul.f32 %v990, %v1008
      %v1024 = vmul.f32 %v989, %v1008
      %v1025 = vmul.f32 %v988, %v1008
      %v1026 = vmul.f32 %v987, %v1008
      %v1027 = vmul.f32 %v986, %v1008
      %v1028 = vmul.f32 %v985, %v1008
      %v1029 = vmul.f32 %v984, %v1008
      %v1030 = vmul.f32 %v983, %v1008
      %v1031 = vmul.f32 %v982, %v1008
      %v1032 = vmul.f32 %v981, %v1008
      %v1033 = vmul.f32 %v980, %v1008
      %v1034 = vmul.f32 %v979, %v1008
      %v1035 = vmul.f32 %v978, %v1008
      %v1036 = vmul.f32 %v977, %v1008
      %v1037 = vmul.f32 %v976, %v1008
      %v1038 = vmul.f32 %v975, %v1008
      %v1039 = vmul.f32 %v974, %v1008
      %v1040 = vmul.f32 %v973, %v1008
      %v1041 = vmul.f32 %v972, %v1008
      %v1042 = vmul.f32 %v971, %v1008
      %v1043 = vmul.f32 %v970, %v1008
      %v1044 = vmul.f32 %v969, %v1008
      %v1045 = vmul.f32 %v968, %v1008
      %v1046 = vmul.f32 %v967, %v1008
      %v1047 = vadd.f32 %v890, %v1009
      %v1048 = vadd.f32 %v891, %v1010
      %v1049 = vadd.f32 %v892, %v1011
      %v1050 = vadd.f32 %v893, %v1012
      %v1051 = vadd.f32 %v894, %v1013
      %v1052 = vadd.f32 %v895, %v1014
      %v1053 = vadd.f32 %v896, %v1015
      %v1054 = vadd.f32 %v897, %v1016
      %v1055 = vadd.f32 %v898, %v1017
      %v1056 = vadd.f32 %v899, %v1018
      %v1057 = vadd.f32 %v900, %v1019
      %v1058 = vadd.f32 %v901, %v1020
      %v1059 = vadd.f32 %v902, %v1021
      %v1060 = vadd.f32 %v903, %v1022
      %v1061 = vadd.f32 %v904, %v1023
      %v1062 = vadd.f32 %v905, %v1024
      %v1063 = vadd.f32 %v906, %v1025
      %v1064 = vadd.f32 %v907, %v1026
      %v1065 = vadd.f32 %v908, %v1027
      %v1066 = vadd.f32 %v909, %v1028
      %v1067 = vadd.f32 %v910, %v1029
      %v1068 = vadd.f32 %v911, %v1030
      %v1069 = vadd.f32 %v912, %v1031
      %v1070 = vadd.f32 %v913, %v1032
      %v1071 = vadd.f32 %v914, %v1033
      %v1072 = vadd.f32 %v915, %v1034
      %v1073 = vadd.f32 %v916, %v1035
      %v1074 = vadd.f32 %v917, %v1036
      %v1075 = vadd.f32 %v918, %v1037
      %v1076 = vadd.f32 %v919, %v1038
      %v1077 = vadd.f32 %v920, %v1039
      %v1078 = vadd.f32 %v921, %v1040
      %v1079 = vadd.f32 %v922, %v1041
      %v1080 = vadd.f32 %v923, %v1042
      %v1081 = vadd.f32 %v924, %v1043
      %v1082 = vadd.f32 %v925, %v1044
      %v1083 = vadd.f32 %v926, %v1045
      %v1084 = vadd.f32 %v927, %v1046
      %v1085 = vrot.slane %v687, 6
      %v1086 = vrot.slane %v688, 6
      %v1087 = vrot.slane %v689, 6
      %v1088 = vrot.slane %v690, 6
      %v1089 = vrot.slane %v691, 6
      %v1090 = vrot.slane %v692, 6
      %v1091 = vrot.slane %v693, 6
      %v1092 = vrot.slane %v694, 6
      %v1093 = vrot.slane %v695, 6
      %v1094 = vrot.slane %v696, 6
      %v1095 = vrot.slane %v697, 6
      %v1096 = vrot.slane %v698, 6
      %v1097 = vrot.slane %v699, 6
      %v1098 = vrot.slane %v700, 6
      %v1099 = vrot.slane %v701, 6
      %v1100 = vrot.slane %v702, 6
      %v1101 = vrot.slane %v703, 6
      %v1102 = vrot.slane %v704, 6
      %v1103 = vrot.slane %v705, 6
      %v1104 = vrot.slane %v706, 6
      %v1105 = vrot.slane %v707, 6
      %v1106 = vrot.slane %v708, 6
      %v1107 = vrot.slane %v709, 6
      %v1108 = vrot.slane %v710, 6
      %v1109 = vrot.slane %v711, 6
      %v1110 = vrot.slane %v712, 6
      %v1111 = vrot.slane %v713, 6
      %v1112 = vrot.slane %v714, 6
      %v1113 = vrot.slane %v715, 6
      %v1114 = vrot.slane %v716, 6
      %v1115 = vrot.slane %v717, 6
      %v1116 = vrot.slane %v718, 6
      %v1117 = vrot.slane %v719, 6
      %v1118 = vrot.slane %v720, 6
      %v1119 = vrot.slane %v721, 6
      %v1120 = vrot.slane %v722, 6
      %v1121 = vrot.slane %v723, 6
      %v1122 = vrot.slane %v724, 6
      %vm1123 = vcmp.lt.s32.totalorder %v808, 2
      %v1124 = vsel %vm1123, %v1121, %v1122
      %v1125 = vsel %vm1123, %v1120, %v1121
      %v1126 = vsel %vm1123, %v1119, %v1120
      %v1127 = vsel %vm1123, %v1118, %v1119
      %v1128 = vsel %vm1123, %v1117, %v1118
      %v1129 = vsel %vm1123, %v1116, %v1117
      %v1130 = vsel %vm1123, %v1115, %v1116
      %v1131 = vsel %vm1123, %v1114, %v1115
      %v1132 = vsel %vm1123, %v1113, %v1114
      %v1133 = vsel %vm1123, %v1112, %v1113
      %v1134 = vsel %vm1123, %v1111, %v1112
      %v1135 = vsel %vm1123, %v1110, %v1111
      %v1136 = vsel %vm1123, %v1109, %v1110
      %v1137 = vsel %vm1123, %v1108, %v1109
      %v1138 = vsel %vm1123, %v1107, %v1108
      %v1139 = vsel %vm1123, %v1106, %v1107
      %v1140 = vsel %vm1123, %v1105, %v1106
      %v1141 = vsel %vm1123, %v1104, %v1105
      %v1142 = vsel %vm1123, %v1103, %v1104
      %v1143 = vsel %vm1123, %v1102, %v1103
      %v1144 = vsel %vm1123, %v1101, %v1102
      %v1145 = vsel %vm1123, %v1100, %v1101
      %v1146 = vsel %vm1123, %v1099, %v1100
      %v1147 = vsel %vm1123, %v1098, %v1099
      %v1148 = vsel %vm1123, %v1097, %v1098
      %v1149 = vsel %vm1123, %v1096, %v1097
      %v1150 = vsel %vm1123, %v1095, %v1096
      %v1151 = vsel %vm1123, %v1094, %v1095
      %v1152 = vsel %vm1123, %v1093, %v1094
      %v1153 = vsel %vm1123, %v1092, %v1093
      %v1154 = vsel %vm1123, %v1091, %v1092
      %v1155 = vsel %vm1123, %v1090, %v1091
      %v1156 = vsel %vm1123, %v1089, %v1090
      %v1157 = vsel %vm1123, %v1088, %v1089
      %v1158 = vsel %vm1123, %v1087, %v1088
      %v1159 = vsel %vm1123, %v1086, %v1087
      %v1160 = vsel %vm1123, %v1085, %v1086
      %v1161 = vsel %vm1123, %v1122, %v1085
      %v1162 = vlaneseq
      %v1163 = vshrl.u32 %v1162, 7
      %v1164 = vsub.s32 2, %v1163
      %v1165 = vrot.slane %v725, %v1164
      %v1166 = vmul.f32 %v1161, %v1165
      %v1167 = vmul.f32 %v1160, %v1165
      %v1168 = vmul.f32 %v1159, %v1165
      %v1169 = vmul.f32 %v1158, %v1165
      %v1170 = vmul.f32 %v1157, %v1165
      %v1171 = vmul.f32 %v1156, %v1165
      %v1172 = vmul.f32 %v1155, %v1165
      %v1173 = vmul.f32 %v1154, %v1165
      %v1174 = vmul.f32 %v1153, %v1165
      %v1175 = vmul.f32 %v1152, %v1165
      %v1176 = vmul.f32 %v1151, %v1165
      %v1177 = vmul.f32 %v1150, %v1165
      %v1178 = vmul.f32 %v1149, %v1165
      %v1179 = vmul.f32 %v1148, %v1165
      %v1180 = vmul.f32 %v1147, %v1165
      %v1181 = vmul.f32 %v1146, %v1165
      %v1182 = vmul.f32 %v1145, %v1165
      %v1183 = vmul.f32 %v1144, %v1165
      %v1184 = vmul.f32 %v1143, %v1165
      %v1185 = vmul.f32 %v1142, %v1165
      %v1186 = vmul.f32 %v1141, %v1165
      %v1187 = vmul.f32 %v1140, %v1165
      %v1188 = vmul.f32 %v1139, %v1165
      %v1189 = vmul.f32 %v1138, %v1165
      %v1190 = vmul.f32 %v1137, %v1165
      %v1191 = vmul.f32 %v1136, %v1165
      %v1192 = vmul.f32 %v1135, %v1165
      %v1193 = vmul.f32 %v1134, %v1165
      %v1194 = vmul.f32 %v1133, %v1165
      %v1195 = vmul.f32 %v1132, %v1165
      %v1196 = vmul.f32 %v1131, %v1165
      %v1197 = vmul.f32 %v1130, %v1165
      %v1198 = vmul.f32 %v1129, %v1165
      %v1199 = vmul.f32 %v1128, %v1165
      %v1200 = vmul.f32 %v1127, %v1165
      %v1201 = vmul.f32 %v1126, %v1165
      %v1202 = vmul.f32 %v1125, %v1165
      %v1203 = vmul.f32 %v1124, %v1165
      %v1204 = vadd.f32 %v1047, %v1166
      %v1205 = vadd.f32 %v1048, %v1167
      %v1206 = vadd.f32 %v1049, %v1168
      %v1207 = vadd.f32 %v1050, %v1169
      %v1208 = vadd.f32 %v1051, %v1170
      %v1209 = vadd.f32 %v1052, %v1171
      %v1210 = vadd.f32 %v1053, %v1172
      %v1211 = vadd.f32 %v1054, %v1173
      %v1212 = vadd.f32 %v1055, %v1174
      %v1213 = vadd.f32 %v1056, %v1175
      %v1214 = vadd.f32 %v1057, %v1176
      %v1215 = vadd.f32 %v1058, %v1177
      %v1216 = vadd.f32 %v1059, %v1178
      %v1217 = vadd.f32 %v1060, %v1179
      %v1218 = vadd.f32 %v1061, %v1180
      %v1219 = vadd.f32 %v1062, %v1181
      %v1220 = vadd.f32 %v1063, %v1182
      %v1221 = vadd.f32 %v1064, %v1183
      %v1222 = vadd.f32 %v1065, %v1184
      %v1223 = vadd.f32 %v1066, %v1185
      %v1224 = vadd.f32 %v1067, %v1186
      %v1225 = vadd.f32 %v1068, %v1187
      %v1226 = vadd.f32 %v1069, %v1188
      %v1227 = vadd.f32 %v1070, %v1189
      %v1228 = vadd.f32 %v1071, %v1190
      %v1229 = vadd.f32 %v1072, %v1191
      %v1230 = vadd.f32 %v1073, %v1192
      %v1231 = vadd.f32 %v1074, %v1193
      %v1232 = vadd.f32 %v1075, %v1194
      %v1233 = vadd.f32 %v1076, %v1195
      %v1234 = vadd.f32 %v1077, %v1196
      %v1235 = vadd.f32 %v1078, %v1197
      %v1236 = vadd.f32 %v1079, %v1198
      %v1237 = vadd.f32 %v1080, %v1199
      %v1238 = vadd.f32 %v1081, %v1200
      %v1239 = vadd.f32 %v1082, %v1201
      %v1240 = vadd.f32 %v1083, %v1202
      %v1241 = vadd.f32 %v1084, %v1203
      %v1242 = vrot.slane %v687, 7
      %v1243 = vrot.slane %v688, 7
      %v1244 = vrot.slane %v689, 7
      %v1245 = vrot.slane %v690, 7
      %v1246 = vrot.slane %v691, 7
      %v1247 = vrot.slane %v692, 7
      %v1248 = vrot.slane %v693, 7
      %v1249 = vrot.slane %v694, 7
      %v1250 = vrot.slane %v695, 7
      %v1251 = vrot.slane %v696, 7
      %v1252 = vrot.slane %v697, 7
      %v1253 = vrot.slane %v698, 7
      %v1254 = vrot.slane %v699, 7
      %v1255 = vrot.slane %v700, 7
      %v1256 = vrot.slane %v701, 7
      %v1257 = vrot.slane %v702, 7
      %v1258 = vrot.slane %v703, 7
      %v1259 = vrot.slane %v704, 7
      %v1260 = vrot.slane %v705, 7
      %v1261 = vrot.slane %v706, 7
      %v1262 = vrot.slane %v707, 7
      %v1263 = vrot.slane %v708, 7
      %v1264 = vrot.slane %v709, 7
      %v1265 = vrot.slane %v710, 7
      %v1266 = vrot.slane %v711, 7
      %v1267 = vrot.slane %v712, 7
      %v1268 = vrot.slane %v713, 7
      %v1269 = vrot.slane %v714, 7
      %v1270 = vrot.slane %v715, 7
      %v1271 = vrot.slane %v716, 7
      %v1272 = vrot.slane %v717, 7
      %v1273 = vrot.slane %v718, 7
      %v1274 = vrot.slane %v719, 7
      %v1275 = vrot.slane %v720, 7
      %v1276 = vrot.slane %v721, 7
      %v1277 = vrot.slane %v722, 7
      %v1278 = vrot.slane %v723, 7
      %v1279 = vrot.slane %v724, 7
      %vm1280 = vcmp.lt.s32.totalorder %v808, 1
      %v1281 = vsel %vm1280, %v1278, %v1279
      %v1282 = vsel %vm1280, %v1277, %v1278
      %v1283 = vsel %vm1280, %v1276, %v1277
      %v1284 = vsel %vm1280, %v1275, %v1276
      %v1285 = vsel %vm1280, %v1274, %v1275
      %v1286 = vsel %vm1280, %v1273, %v1274
      %v1287 = vsel %vm1280, %v1272, %v1273
      %v1288 = vsel %vm1280, %v1271, %v1272
      %v1289 = vsel %vm1280, %v1270, %v1271
      %v1290 = vsel %vm1280, %v1269, %v1270
      %v1291 = vsel %vm1280, %v1268, %v1269
      %v1292 = vsel %vm1280, %v1267, %v1268
      %v1293 = vsel %vm1280, %v1266, %v1267
      %v1294 = vsel %vm1280, %v1265, %v1266
      %v1295 = vsel %vm1280, %v1264, %v1265
      %v1296 = vsel %vm1280, %v1263, %v1264
      %v1297 = vsel %vm1280, %v1262, %v1263
      %v1298 = vsel %vm1280, %v1261, %v1262
      %v1299 = vsel %vm1280, %v1260, %v1261
      %v1300 = vsel %vm1280, %v1259, %v1260
      %v1301 = vsel %vm1280, %v1258, %v1259
      %v1302 = vsel %vm1280, %v1257, %v1258
      %v1303 = vsel %vm1280, %v1256, %v1257
      %v1304 = vsel %vm1280, %v1255, %v1256
      %v1305 = vsel %vm1280, %v1254, %v1255
      %v1306 = vsel %vm1280, %v1253, %v1254
      %v1307 = vsel %vm1280, %v1252, %v1253
      %v1308 = vsel %vm1280, %v1251, %v1252
      %v1309 = vsel %vm1280, %v1250, %v1251
      %v1310 = vsel %vm1280, %v1249, %v1250
      %v1311 = vsel %vm1280, %v1248, %v1249
      %v1312 = vsel %vm1280, %v1247, %v1248
      %v1313 = vsel %vm1280, %v1246, %v1247
      %v1314 = vsel %vm1280, %v1245, %v1246
      %v1315 = vsel %vm1280, %v1244, %v1245
      %v1316 = vsel %vm1280, %v1243, %v1244
      %v1317 = vsel %vm1280, %v1242, %v1243
      %v1318 = vsel %vm1280, %v1279, %v1242
      %v1319 = vlaneseq
      %v1320 = vshrl.u32 %v1319, 7
      %v1321 = vsub.s32 3, %v1320
      %v1322 = vrot.slane %v725, %v1321
      %v1323 = vmul.f32 %v1318, %v1322
      %v1324 = vmul.f32 %v1317, %v1322
      %v1325 = vmul.f32 %v1316, %v1322
      %v1326 = vmul.f32 %v1315, %v1322
      %v1327 = vmul.f32 %v1314, %v1322
      %v1328 = vmul.f32 %v1313, %v1322
      %v1329 = vmul.f32 %v1312, %v1322
      %v1330 = vmul.f32 %v1311, %v1322
      %v1331 = vmul.f32 %v1310, %v1322
      %v1332 = vmul.f32 %v1309, %v1322
      %v1333 = vmul.f32 %v1308, %v1322
      %v1334 = vmul.f32 %v1307, %v1322
      %v1335 = vmul.f32 %v1306, %v1322
      %v1336 = vmul.f32 %v1305, %v1322
      %v1337 = vmul.f32 %v1304, %v1322
      %v1338 = vmul.f32 %v1303, %v1322
      %v1339 = vmul.f32 %v1302, %v1322
      %v1340 = vmul.f32 %v1301, %v1322
      %v1341 = vmul.f32 %v1300, %v1322
      %v1342 = vmul.f32 %v1299, %v1322
      %v1343 = vmul.f32 %v1298, %v1322
      %v1344 = vmul.f32 %v1297, %v1322
      %v1345 = vmul.f32 %v1296, %v1322
      %v1346 = vmul.f32 %v1295, %v1322
      %v1347 = vmul.f32 %v1294, %v1322
      %v1348 = vmul.f32 %v1293, %v1322
      %v1349 = vmul.f32 %v1292, %v1322
      %v1350 = vmul.f32 %v1291, %v1322
      %v1351 = vmul.f32 %v1290, %v1322
      %v1352 = vmul.f32 %v1289, %v1322
      %v1353 = vmul.f32 %v1288, %v1322
      %v1354 = vmul.f32 %v1287, %v1322
      %v1355 = vmul.f32 %v1286, %v1322
      %v1356 = vmul.f32 %v1285, %v1322
      %v1357 = vmul.f32 %v1284, %v1322
      %v1358 = vmul.f32 %v1283, %v1322
      %v1359 = vmul.f32 %v1282, %v1322
      %v1360 = vmul.f32 %v1281, %v1322
      %v1361 = vadd.f32 %v1204, %v1323
      %v1362 = vadd.f32 %v1205, %v1324
      %v1363 = vadd.f32 %v1206, %v1325
      %v1364 = vadd.f32 %v1207, %v1326
      %v1365 = vadd.f32 %v1208, %v1327
      %v1366 = vadd.f32 %v1209, %v1328
      %v1367 = vadd.f32 %v1210, %v1329
      %v1368 = vadd.f32 %v1211, %v1330
      %v1369 = vadd.f32 %v1212, %v1331
      %v1370 = vadd.f32 %v1213, %v1332
      %v1371 = vadd.f32 %v1214, %v1333
      %v1372 = vadd.f32 %v1215, %v1334
      %v1373 = vadd.f32 %v1216, %v1335
      %v1374 = vadd.f32 %v1217, %v1336
      %v1375 = vadd.f32 %v1218, %v1337
      %v1376 = vadd.f32 %v1219, %v1338
      %v1377 = vadd.f32 %v1220, %v1339
      %v1378 = vadd.f32 %v1221, %v1340
      %v1379 = vadd.f32 %v1222, %v1341
      %v1380 = vadd.f32 %v1223, %v1342
      %v1381 = vadd.f32 %v1224, %v1343
      %v1382 = vadd.f32 %v1225, %v1344
      %v1383 = vadd.f32 %v1226, %v1345
      %v1384 = vadd.f32 %v1227, %v1346
      %v1385 = vadd.f32 %v1228, %v1347
      %v1386 = vadd.f32 %v1229, %v1348
      %v1387 = vadd.f32 %v1230, %v1349
      %v1388 = vadd.f32 %v1231, %v1350
      %v1389 = vadd.f32 %v1232, %v1351
      %v1390 = vadd.f32 %v1233, %v1352
      %v1391 = vadd.f32 %v1234, %v1353
      %v1392 = vadd.f32 %v1235, %v1354
      %v1393 = vadd.f32 %v1236, %v1355
      %v1394 = vadd.f32 %v1237, %v1356
      %v1395 = vadd.f32 %v1238, %v1357
      %v1396 = vadd.f32 %v1239, %v1358
      %v1397 = vadd.f32 %v1240, %v1359
      %v1398 = vadd.f32 %v1241, %v1360
      %v1399 = vrot.slane %v687, 1
      %v1400 = vrot.slane %v688, 1
      %v1401 = vrot.slane %v689, 1
      %v1402 = vrot.slane %v690, 1
      %v1403 = vrot.slane %v691, 1
      %v1404 = vrot.slane %v692, 1
      %v1405 = vrot.slane %v693, 1
      %v1406 = vrot.slane %v694, 1
      %v1407 = vrot.slane %v695, 1
      %v1408 = vrot.slane %v696, 1
      %v1409 = vrot.slane %v697, 1
      %v1410 = vrot.slane %v698, 1
      %v1411 = vrot.slane %v699, 1
      %v1412 = vrot.slane %v700, 1
      %v1413 = vrot.slane %v701, 1
      %v1414 = vrot.slane %v702, 1
      %v1415 = vrot.slane %v703, 1
      %v1416 = vrot.slane %v704, 1
      %v1417 = vrot.slane %v705, 1
      %v1418 = vrot.slane %v706, 1
      %v1419 = vrot.slane %v707, 1
      %v1420 = vrot.slane %v708, 1
      %v1421 = vrot.slane %v709, 1
      %v1422 = vrot.slane %v710, 1
      %v1423 = vrot.slane %v711, 1
      %v1424 = vrot.slane %v712, 1
      %v1425 = vrot.slane %v713, 1
      %v1426 = vrot.slane %v714, 1
      %v1427 = vrot.slane %v715, 1
      %v1428 = vrot.slane %v716, 1
      %v1429 = vrot.slane %v717, 1
      %v1430 = vrot.slane %v718, 1
      %v1431 = vrot.slane %v719, 1
      %v1432 = vrot.slane %v720, 1
      %v1433 = vrot.slane %v721, 1
      %v1434 = vrot.slane %v722, 1
      %v1435 = vrot.slane %v723, 1
      %v1436 = vrot.slane %v724, 1
      %vm1437 = vcmp.lt.s32.totalorder %v808, 7
      %v1438 = vsel %vm1437, %v1435, %v1436
      %v1439 = vsel %vm1437, %v1434, %v1435
      %v1440 = vsel %vm1437, %v1433, %v1434
      %v1441 = vsel %vm1437, %v1432, %v1433
      %v1442 = vsel %vm1437, %v1431, %v1432
      %v1443 = vsel %vm1437, %v1430, %v1431
      %v1444 = vsel %vm1437, %v1429, %v1430
      %v1445 = vsel %vm1437, %v1428, %v1429
      %v1446 = vsel %vm1437, %v1427, %v1428
      %v1447 = vsel %vm1437, %v1426, %v1427
      %v1448 = vsel %vm1437, %v1425, %v1426
      %v1449 = vsel %vm1437, %v1424, %v1425
      %v1450 = vsel %vm1437, %v1423, %v1424
      %v1451 = vsel %vm1437, %v1422, %v1423
      %v1452 = vsel %vm1437, %v1421, %v1422
      %v1453 = vsel %vm1437, %v1420, %v1421
      %v1454 = vsel %vm1437, %v1419, %v1420
      %v1455 = vsel %vm1437, %v1418, %v1419
      %v1456 = vsel %vm1437, %v1417, %v1418
      %v1457 = vsel %vm1437, %v1416, %v1417
      %v1458 = vsel %vm1437, %v1415, %v1416
      %v1459 = vsel %vm1437, %v1414, %v1415
      %v1460 = vsel %vm1437, %v1413, %v1414
      %v1461 = vsel %vm1437, %v1412, %v1413
      %v1462 = vsel %vm1437, %v1411, %v1412
      %v1463 = vsel %vm1437, %v1410, %v1411
      %v1464 = vsel %vm1437, %v1409, %v1410
      %v1465 = vsel %vm1437, %v1408, %v1409
      %v1466 = vsel %vm1437, %v1407, %v1408
      %v1467 = vsel %vm1437, %v1406, %v1407
      %v1468 = vsel %vm1437, %v1405, %v1406
      %v1469 = vsel %vm1437, %v1404, %v1405
      %v1470 = vsel %vm1437, %v1403, %v1404
      %v1471 = vsel %vm1437, %v1402, %v1403
      %v1472 = vsel %vm1437, %v1401, %v1402
      %v1473 = vsel %vm1437, %v1400, %v1401
      %v1474 = vsel %vm1437, %v1399, %v1400
      %v1475 = vsel %vm1437, %v1436, %v1399
      %v1476 = vlaneseq
      %v1477 = vshrl.u32 %v1476, 7
      %v1478 = vsub.s32 5, %v1477
      %v1479 = vrot.slane %v725, %v1478
      %v1480 = vmul.f32 %v1474, %v1479
      %v1481 = vmul.f32 %v1473, %v1479
      %v1482 = vmul.f32 %v1472, %v1479
      %v1483 = vmul.f32 %v1471, %v1479
      %v1484 = vmul.f32 %v1470, %v1479
      %v1485 = vmul.f32 %v1469, %v1479
      %v1486 = vmul.f32 %v1468, %v1479
      %v1487 = vmul.f32 %v1467, %v1479
      %v1488 = vmul.f32 %v1466, %v1479
      %v1489 = vmul.f32 %v1465, %v1479
      %v1490 = vmul.f32 %v1464, %v1479
      %v1491 = vmul.f32 %v1463, %v1479
      %v1492 = vmul.f32 %v1462, %v1479
      %v1493 = vmul.f32 %v1461, %v1479
      %v1494 = vmul.f32 %v1460, %v1479
      %v1495 = vmul.f32 %v1459, %v1479
      %v1496 = vmul.f32 %v1458, %v1479
      %v1497 = vmul.f32 %v1457, %v1479
      %v1498 = vmul.f32 %v1456, %v1479
      %v1499 = vmul.f32 %v1455, %v1479
      %v1500 = vmul.f32 %v1454, %v1479
      %v1501 = vmul.f32 %v1453, %v1479
      %v1502 = vmul.f32 %v1452, %v1479
      %v1503 = vmul.f32 %v1451, %v1479
      %v1504 = vmul.f32 %v1450, %v1479
      %v1505 = vmul.f32 %v1449, %v1479
      %v1506 = vmul.f32 %v1448, %v1479
      %v1507 = vmul.f32 %v1447, %v1479
      %v1508 = vmul.f32 %v1446, %v1479
      %v1509 = vmul.f32 %v1445, %v1479
      %v1510 = vmul.f32 %v1444, %v1479
      %v1511 = vmul.f32 %v1443, %v1479
      %v1512 = vmul.f32 %v1442, %v1479
      %v1513 = vmul.f32 %v1441, %v1479
      %v1514 = vmul.f32 %v1440, %v1479
      %v1515 = vmul.f32 %v1439, %v1479
      %v1516 = vmul.f32 %v1438, %v1479
      %v1517 = vmul.f32 %v1475, %v1479
      %v1518 = vadd.f32 %v1361, %v1480
      %v1519 = vadd.f32 %v1362, %v1481
      %v1520 = vadd.f32 %v1363, %v1482
      %v1521 = vadd.f32 %v1364, %v1483
      %v1522 = vadd.f32 %v1365, %v1484
      %v1523 = vadd.f32 %v1366, %v1485
      %v1524 = vadd.f32 %v1367, %v1486
      %v1525 = vadd.f32 %v1368, %v1487
      %v1526 = vadd.f32 %v1369, %v1488
      %v1527 = vadd.f32 %v1370, %v1489
      %v1528 = vadd.f32 %v1371, %v1490
      %v1529 = vadd.f32 %v1372, %v1491
      %v1530 = vadd.f32 %v1373, %v1492
      %v1531 = vadd.f32 %v1374, %v1493
      %v1532 = vadd.f32 %v1375, %v1494
      %v1533 = vadd.f32 %v1376, %v1495
      %v1534 = vadd.f32 %v1377, %v1496
      %v1535 = vadd.f32 %v1378, %v1497
      %v1536 = vadd.f32 %v1379, %v1498
      %v1537 = vadd.f32 %v1380, %v1499
      %v1538 = vadd.f32 %v1381, %v1500
      %v1539 = vadd.f32 %v1382, %v1501
      %v1540 = vadd.f32 %v1383, %v1502
      %v1541 = vadd.f32 %v1384, %v1503
      %v1542 = vadd.f32 %v1385, %v1504
      %v1543 = vadd.f32 %v1386, %v1505
      %v1544 = vadd.f32 %v1387, %v1506
      %v1545 = vadd.f32 %v1388, %v1507
      %v1546 = vadd.f32 %v1389, %v1508
      %v1547 = vadd.f32 %v1390, %v1509
      %v1548 = vadd.f32 %v1391, %v1510
      %v1549 = vadd.f32 %v1392, %v1511
      %v1550 = vadd.f32 %v1393, %v1512
      %v1551 = vadd.f32 %v1394, %v1513
      %v1552 = vadd.f32 %v1395, %v1514
      %v1553 = vadd.f32 %v1396, %v1515
      %v1554 = vadd.f32 %v1397, %v1516
      %v1555 = vadd.f32 %v1398, %v1517
      %v1556 = vrot.slane %v687, 2
      %v1557 = vrot.slane %v688, 2
      %v1558 = vrot.slane %v689, 2
      %v1559 = vrot.slane %v690, 2
      %v1560 = vrot.slane %v691, 2
      %v1561 = vrot.slane %v692, 2
      %v1562 = vrot.slane %v693, 2
      %v1563 = vrot.slane %v694, 2
      %v1564 = vrot.slane %v695, 2
      %v1565 = vrot.slane %v696, 2
      %v1566 = vrot.slane %v697, 2
      %v1567 = vrot.slane %v698, 2
      %v1568 = vrot.slane %v699, 2
      %v1569 = vrot.slane %v700, 2
      %v1570 = vrot.slane %v701, 2
      %v1571 = vrot.slane %v702, 2
      %v1572 = vrot.slane %v703, 2
      %v1573 = vrot.slane %v704, 2
      %v1574 = vrot.slane %v705, 2
      %v1575 = vrot.slane %v706, 2
      %v1576 = vrot.slane %v707, 2
      %v1577 = vrot.slane %v708, 2
      %v1578 = vrot.slane %v709, 2
      %v1579 = vrot.slane %v710, 2
      %v1580 = vrot.slane %v711, 2
      %v1581 = vrot.slane %v712, 2
      %v1582 = vrot.slane %v713, 2
      %v1583 = vrot.slane %v714, 2
      %v1584 = vrot.slane %v715, 2
      %v1585 = vrot.slane %v716, 2
      %v1586 = vrot.slane %v717, 2
      %v1587 = vrot.slane %v718, 2
      %v1588 = vrot.slane %v719, 2
      %v1589 = vrot.slane %v720, 2
      %v1590 = vrot.slane %v721, 2
      %v1591 = vrot.slane %v722, 2
      %v1592 = vrot.slane %v723, 2
      %v1593 = vrot.slane %v724, 2
      %vm1594 = vcmp.lt.s32.totalorder %v808, 6
      %v1595 = vsel %vm1594, %v1592, %v1593
      %v1596 = vsel %vm1594, %v1591, %v1592
      %v1597 = vsel %vm1594, %v1590, %v1591
      %v1598 = vsel %vm1594, %v1589, %v1590
      %v1599 = vsel %vm1594, %v1588, %v1589
      %v1600 = vsel %vm1594, %v1587, %v1588
      %v1601 = vsel %vm1594, %v1586, %v1587
      %v1602 = vsel %vm1594, %v1585, %v1586
      %v1603 = vsel %vm1594, %v1584, %v1585
      %v1604 = vsel %vm1594, %v1583, %v1584
      %v1605 = vsel %vm1594, %v1582, %v1583
      %v1606 = vsel %vm1594, %v1581, %v1582
      %v1607 = vsel %vm1594, %v1580, %v1581
      %v1608 = vsel %vm1594, %v1579, %v1580
      %v1609 = vsel %vm1594, %v1578, %v1579
      %v1610 = vsel %vm1594, %v1577, %v1578
      %v1611 = vsel %vm1594, %v1576, %v1577
      %v1612 = vsel %vm1594, %v1575, %v1576
      %v1613 = vsel %vm1594, %v1574, %v1575
      %v1614 = vsel %vm1594, %v1573, %v1574
      %v1615 = vsel %vm1594, %v1572, %v1573
      %v1616 = vsel %vm1594, %v1571, %v1572
      %v1617 = vsel %vm1594, %v1570, %v1571
      %v1618 = vsel %vm1594, %v1569, %v1570
      %v1619 = vsel %vm1594, %v1568, %v1569
      %v1620 = vsel %vm1594, %v1567, %v1568
      %v1621 = vsel %vm1594, %v1566, %v1567
      %v1622 = vsel %vm1594, %v1565, %v1566
      %v1623 = vsel %vm1594, %v1564, %v1565
      %v1624 = vsel %vm1594, %v1563, %v1564
      %v1625 = vsel %vm1594, %v1562, %v1563
      %v1626 = vsel %vm1594, %v1561, %v1562
      %v1627 = vsel %vm1594, %v1560, %v1561
      %v1628 = vsel %vm1594, %v1559, %v1560
      %v1629 = vsel %vm1594, %v1558, %v1559
      %v1630 = vsel %vm1594, %v1557, %v1558
      %v1631 = vsel %vm1594, %v1556, %v1557
      %v1632 = vsel %vm1594, %v1593, %v1556
      %v1633 = vlaneseq
      %v1634 = vshrl.u32 %v1633, 7
      %v1635 = vsub.s32 6, %v1634
      %v1636 = vrot.slane %v725, %v1635
      %v1637 = vmul.f32 %v1631, %v1636
      %v1638 = vmul.f32 %v1630, %v1636
      %v1639 = vmul.f32 %v1629, %v1636
      %v1640 = vmul.f32 %v1628, %v1636
      %v1641 = vmul.f32 %v1627, %v1636
      %v1642 = vmul.f32 %v1626, %v1636
      %v1643 = vmul.f32 %v1625, %v1636
      %v1644 = vmul.f32 %v1624, %v1636
      %v1645 = vmul.f32 %v1623, %v1636
      %v1646 = vmul.f32 %v1622, %v1636
      %v1647 = vmul.f32 %v1621, %v1636
      %v1648 = vmul.f32 %v1620, %v1636
      %v1649 = vmul.f32 %v1619, %v1636
      %v1650 = vmul.f32 %v1618, %v1636
      %v1651 = vmul.f32 %v1617, %v1636
      %v1652 = vmul.f32 %v1616, %v1636
      %v1653 = vmul.f32 %v1615, %v1636
      %v1654 = vmul.f32 %v1614, %v1636
      %v1655 = vmul.f32 %v1613, %v1636
      %v1656 = vmul.f32 %v1612, %v1636
      %v1657 = vmul.f32 %v1611, %v1636
      %v1658 = vmul.f32 %v1610, %v1636
      %v1659 = vmul.f32 %v1609, %v1636
      %v1660 = vmul.f32 %v1608, %v1636
      %v1661 = vmul.f32 %v1607, %v1636
      %v1662 = vmul.f32 %v1606, %v1636
      %v1663 = vmul.f32 %v1605, %v1636
      %v1664 = vmul.f32 %v1604, %v1636
      %v1665 = vmul.f32 %v1603, %v1636
      %v1666 = vmul.f32 %v1602, %v1636
      %v1667 = vmul.f32 %v1601, %v1636
      %v1668 = vmul.f32 %v1600, %v1636
      %v1669 = vmul.f32 %v1599, %v1636
      %v1670 = vmul.f32 %v1598, %v1636
      %v1671 = vmul.f32 %v1597, %v1636
      %v1672 = vmul.f32 %v1596, %v1636
      %v1673 = vmul.f32 %v1595, %v1636
      %v1674 = vmul.f32 %v1632, %v1636
      %v1675 = vadd.f32 %v1518, %v1637
      %v1676 = vadd.f32 %v1519, %v1638
      %v1677 = vadd.f32 %v1520, %v1639
      %v1678 = vadd.f32 %v1521, %v1640
      %v1679 = vadd.f32 %v1522, %v1641
      %v1680 = vadd.f32 %v1523, %v1642
      %v1681 = vadd.f32 %v1524, %v1643
      %v1682 = vadd.f32 %v1525, %v1644
      %v1683 = vadd.f32 %v1526, %v1645
      %v1684 = vadd.f32 %v1527, %v1646
      %v1685 = vadd.f32 %v1528, %v1647
      %v1686 = vadd.f32 %v1529, %v1648
      %v1687 = vadd.f32 %v1530, %v1649
      %v1688 = vadd.f32 %v1531, %v1650
      %v1689 = vadd.f32 %v1532, %v1651
      %v1690 = vadd.f32 %v1533, %v1652
      %v1691 = vadd.f32 %v1534, %v1653
      %v1692 = vadd.f32 %v1535, %v1654
      %v1693 = vadd.f32 %v1536, %v1655
      %v1694 = vadd.f32 %v1537, %v1656
      %v1695 = vadd.f32 %v1538, %v1657
      %v1696 = vadd.f32 %v1539, %v1658
      %v1697 = vadd.f32 %v1540, %v1659
      %v1698 = vadd.f32 %v1541, %v1660
      %v1699 = vadd.f32 %v1542, %v1661
      %v1700 = vadd.f32 %v1543, %v1662
      %v1701 = vadd.f32 %v1544, %v1663
      %v1702 = vadd.f32 %v1545, %v1664
      %v1703 = vadd.f32 %v1546, %v1665
      %v1704 = vadd.f32 %v1547, %v1666
      %v1705 = vadd.f32 %v1548, %v1667
      %v1706 = vadd.f32 %v1549, %v1668
      %v1707 = vadd.f32 %v1550, %v1669
      %v1708 = vadd.f32 %v1551, %v1670
      %v1709 = vadd.f32 %v1552, %v1671
      %v1710 = vadd.f32 %v1553, %v1672
      %v1711 = vadd.f32 %v1554, %v1673
      %v1712 = vadd.f32 %v1555, %v1674
      %v1713 = vrot.slane %v687, 3
      %v1714 = vrot.slane %v688, 3
      %v1715 = vrot.slane %v689, 3
      %v1716 = vrot.slane %v690, 3
      %v1717 = vrot.slane %v691, 3
      %v1718 = vrot.slane %v692, 3
      %v1719 = vrot.slane %v693, 3
      %v1720 = vrot.slane %v694, 3
      %v1721 = vrot.slane %v695, 3
      %v1722 = vrot.slane %v696, 3
      %v1723 = vrot.slane %v697, 3
      %v1724 = vrot.slane %v698, 3
      %v1725 = vrot.slane %v699, 3
      %v1726 = vrot.slane %v700, 3
      %v1727 = vrot.slane %v701, 3
      %v1728 = vrot.slane %v702, 3
      %v1729 = vrot.slane %v703, 3
      %v1730 = vrot.slane %v704, 3
      %v1731 = vrot.slane %v705, 3
      %v1732 = vrot.slane %v706, 3
      %v1733 = vrot.slane %v707, 3
      %v1734 = vrot.slane %v708, 3
      %v1735 = vrot.slane %v709, 3
      %v1736 = vrot.slane %v710, 3
      %v1737 = vrot.slane %v711, 3
      %v1738 = vrot.slane %v712, 3
      %v1739 = vrot.slane %v713, 3
      %v1740 = vrot.slane %v714, 3
      %v1741 = vrot.slane %v715, 3
      %v1742 = vrot.slane %v716, 3
      %v1743 = vrot.slane %v717, 3
      %v1744 = vrot.slane %v718, 3
      %v1745 = vrot.slane %v719, 3
      %v1746 = vrot.slane %v720, 3
      %v1747 = vrot.slane %v721, 3
      %v1748 = vrot.slane %v722, 3
      %v1749 = vrot.slane %v723, 3
      %v1750 = vrot.slane %v724, 3
      %vm1751 = vcmp.lt.s32.totalorder %v808, 5
      %v1752 = vsel %vm1751, %v1749, %v1750
      %v1753 = vsel %vm1751, %v1748, %v1749
      %v1754 = vsel %vm1751, %v1747, %v1748
      %v1755 = vsel %vm1751, %v1746, %v1747
      %v1756 = vsel %vm1751, %v1745, %v1746
      %v1757 = vsel %vm1751, %v1744, %v1745
      %v1758 = vsel %vm1751, %v1743, %v1744
      %v1759 = vsel %vm1751, %v1742, %v1743
      %v1760 = vsel %vm1751, %v1741, %v1742
      %v1761 = vsel %vm1751, %v1740, %v1741
      %v1762 = vsel %vm1751, %v1739, %v1740
      %v1763 = vsel %vm1751, %v1738, %v1739
      %v1764 = vsel %vm1751, %v1737, %v1738
      %v1765 = vsel %vm1751, %v1736, %v1737
      %v1766 = vsel %vm1751, %v1735, %v1736
      %v1767 = vsel %vm1751, %v1734, %v1735
      %v1768 = vsel %vm1751, %v1733, %v1734
      %v1769 = vsel %vm1751, %v1732, %v1733
      %v1770 = vsel %vm1751, %v1731, %v1732
      %v1771 = vsel %vm1751, %v1730, %v1731
      %v1772 = vsel %vm1751, %v1729, %v1730
      %v1773 = vsel %vm1751, %v1728, %v1729
      %v1774 = vsel %vm1751, %v1727, %v1728
      %v1775 = vsel %vm1751, %v1726, %v1727
      %v1776 = vsel %vm1751, %v1725, %v1726
      %v1777 = vsel %vm1751, %v1724, %v1725
      %v1778 = vsel %vm1751, %v1723, %v1724
      %v1779 = vsel %vm1751, %v1722, %v1723
      %v1780 = vsel %vm1751, %v1721, %v1722
      %v1781 = vsel %vm1751, %v1720, %v1721
      %v1782 = vsel %vm1751, %v1719, %v1720
      %v1783 = vsel %vm1751, %v1718, %v1719
      %v1784 = vsel %vm1751, %v1717, %v1718
      %v1785 = vsel %vm1751, %v1716, %v1717
      %v1786 = vsel %vm1751, %v1715, %v1716
      %v1787 = vsel %vm1751, %v1714, %v1715
      %v1788 = vsel %vm1751, %v1713, %v1714
      %v1789 = vsel %vm1751, %v1750, %v1713
      %v1790 = vlaneseq
      %v1791 = vshrl.u32 %v1790, 7
      %v1792 = vsub.s32 7, %v1791
      %v1793 = vrot.slane %v725, %v1792
      %v1794 = vmul.f32 %v1788, %v1793
      %v1795 = vmul.f32 %v1787, %v1793
      %v1796 = vmul.f32 %v1786, %v1793
      %v1797 = vmul.f32 %v1785, %v1793
      %v1798 = vmul.f32 %v1784, %v1793
      %v1799 = vmul.f32 %v1783, %v1793
      %v1800 = vmul.f32 %v1782, %v1793
      %v1801 = vmul.f32 %v1781, %v1793
      %v1802 = vmul.f32 %v1780, %v1793
      %v1803 = vmul.f32 %v1779, %v1793
      %v1804 = vmul.f32 %v1778, %v1793
      %v1805 = vmul.f32 %v1777, %v1793
      %v1806 = vmul.f32 %v1776, %v1793
      %v1807 = vmul.f32 %v1775, %v1793
      %v1808 = vmul.f32 %v1774, %v1793
      %v1809 = vmul.f32 %v1773, %v1793
      %v1810 = vmul.f32 %v1772, %v1793
      %v1811 = vmul.f32 %v1771, %v1793
      %v1812 = vmul.f32 %v1770, %v1793
      %v1813 = vmul.f32 %v1769, %v1793
      %v1814 = vmul.f32 %v1768, %v1793
      %v1815 = vmul.f32 %v1767, %v1793
      %v1816 = vmul.f32 %v1766, %v1793
      %v1817 = vmul.f32 %v1765, %v1793
      %v1818 = vmul.f32 %v1764, %v1793
      %v1819 = vmul.f32 %v1763, %v1793
      %v1820 = vmul.f32 %v1762, %v1793
      %v1821 = vmul.f32 %v1761, %v1793
      %v1822 = vmul.f32 %v1760, %v1793
      %v1823 = vmul.f32 %v1759, %v1793
      %v1824 = vmul.f32 %v1758, %v1793
      %v1825 = vmul.f32 %v1757, %v1793
      %v1826 = vmul.f32 %v1756, %v1793
      %v1827 = vmul.f32 %v1755, %v1793
      %v1828 = vmul.f32 %v1754, %v1793
      %v1829 = vmul.f32 %v1753, %v1793
      %v1830 = vmul.f32 %v1752, %v1793
      %v1831 = vmul.f32 %v1789, %v1793
      %v1832 = vadd.f32 %v1675, %v1794
      %v1833 = vadd.f32 %v1676, %v1795
      %v1834 = vadd.f32 %v1677, %v1796
      %v1835 = vadd.f32 %v1678, %v1797
      %v1836 = vadd.f32 %v1679, %v1798
      %v1837 = vadd.f32 %v1680, %v1799
      %v1838 = vadd.f32 %v1681, %v1800
      %v1839 = vadd.f32 %v1682, %v1801
      %v1840 = vadd.f32 %v1683, %v1802
      %v1841 = vadd.f32 %v1684, %v1803
      %v1842 = vadd.f32 %v1685, %v1804
      %v1843 = vadd.f32 %v1686, %v1805
      %v1844 = vadd.f32 %v1687, %v1806
      %v1845 = vadd.f32 %v1688, %v1807
      %v1846 = vadd.f32 %v1689, %v1808
      %v1847 = vadd.f32 %v1690, %v1809
      %v1848 = vadd.f32 %v1691, %v1810
      %v1849 = vadd.f32 %v1692, %v1811
      %v1850 = vadd.f32 %v1693, %v1812
      %v1851 = vadd.f32 %v1694, %v1813
      %v1852 = vadd.f32 %v1695, %v1814
      %v1853 = vadd.f32 %v1696, %v1815
      %v1854 = vadd.f32 %v1697, %v1816
      %v1855 = vadd.f32 %v1698, %v1817
      %v1856 = vadd.f32 %v1699, %v1818
      %v1857 = vadd.f32 %v1700, %v1819
      %v1858 = vadd.f32 %v1701, %v1820
      %v1859 = vadd.f32 %v1702, %v1821
      %v1860 = vadd.f32 %v1703, %v1822
      %v1861 = vadd.f32 %v1704, %v1823
      %v1862 = vadd.f32 %v1705, %v1824
      %v1863 = vadd.f32 %v1706, %v1825
      %v1864 = vadd.f32 %v1707, %v1826
      %v1865 = vadd.f32 %v1708, %v1827
      %v1866 = vadd.f32 %v1709, %v1828
      %v1867 = vadd.f32 %v1710, %v1829
      %v1868 = vadd.f32 %v1711, %v1830
      %v1869 = vadd.f32 %v1712, %v1831
      %v1870 = vlaneseq
      %v1871 = vshrl.u32 %v1870, 7
      %v1872 = vsub.s32 0, %v1871
      %v1873 = vrot.slane %v726, %v1872
      %v1874 = vmul.f32 %v846, %v1873
      %v1875 = vmul.f32 %v845, %v1873
      %v1876 = vmul.f32 %v844, %v1873
      %v1877 = vmul.f32 %v843, %v1873
      %v1878 = vmul.f32 %v842, %v1873
      %v1879 = vmul.f32 %v841, %v1873
      %v1880 = vmul.f32 %v840, %v1873
      %v1881 = vmul.f32 %v839, %v1873
      %v1882 = vmul.f32 %v838, %v1873
      %v1883 = vmul.f32 %v837, %v1873
      %v1884 = vmul.f32 %v836, %v1873
      %v1885 = vmul.f32 %v835, %v1873
      %v1886 = vmul.f32 %v834, %v1873
      %v1887 = vmul.f32 %v833, %v1873
      %v1888 = vmul.f32 %v832, %v1873
      %v1889 = vmul.f32 %v831, %v1873
      %v1890 = vmul.f32 %v830, %v1873
      %v1891 = vmul.f32 %v829, %v1873
      %v1892 = vmul.f32 %v828, %v1873
      %v1893 = vmul.f32 %v827, %v1873
      %v1894 = vmul.f32 %v826, %v1873
      %v1895 = vmul.f32 %v825, %v1873
      %v1896 = vmul.f32 %v824, %v1873
      %v1897 = vmul.f32 %v823, %v1873
      %v1898 = vmul.f32 %v822, %v1873
      %v1899 = vmul.f32 %v821, %v1873
      %v1900 = vmul.f32 %v820, %v1873
      %v1901 = vmul.f32 %v819, %v1873
      %v1902 = vmul.f32 %v818, %v1873
      %v1903 = vmul.f32 %v817, %v1873
      %v1904 = vmul.f32 %v816, %v1873
      %v1905 = vmul.f32 %v815, %v1873
      %v1906 = vmul.f32 %v814, %v1873
      %v1907 = vmul.f32 %v813, %v1873
      %v1908 = vmul.f32 %v812, %v1873
      %v1909 = vmul.f32 %v811, %v1873
      %v1910 = vmul.f32 %v810, %v1873
      %v1911 = vmul.f32 %v847, %v1873
      %v1912 = vadd.f32 %v1832, %v1874
      %v1913 = vadd.f32 %v1833, %v1875
      %v1914 = vadd.f32 %v1834, %v1876
      %v1915 = vadd.f32 %v1835, %v1877
      %v1916 = vadd.f32 %v1836, %v1878
      %v1917 = vadd.f32 %v1837, %v1879
      %v1918 = vadd.f32 %v1838, %v1880
      %v1919 = vadd.f32 %v1839, %v1881
      %v1920 = vadd.f32 %v1840, %v1882
      %v1921 = vadd.f32 %v1841, %v1883
      %v1922 = vadd.f32 %v1842, %v1884
      %v1923 = vadd.f32 %v1843, %v1885
      %v1924 = vadd.f32 %v1844, %v1886
      %v1925 = vadd.f32 %v1845, %v1887
      %v1926 = vadd.f32 %v1846, %v1888
      %v1927 = vadd.f32 %v1847, %v1889
      %v1928 = vadd.f32 %v1848, %v1890
      %v1929 = vadd.f32 %v1849, %v1891
      %v1930 = vadd.f32 %v1850, %v1892
      %v1931 = vadd.f32 %v1851, %v1893
      %v1932 = vadd.f32 %v1852, %v1894
      %v1933 = vadd.f32 %v1853, %v1895
      %v1934 = vadd.f32 %v1854, %v1896
      %v1935 = vadd.f32 %v1855, %v1897
      %v1936 = vadd.f32 %v1856, %v1898
      %v1937 = vadd.f32 %v1857, %v1899
      %v1938 = vadd.f32 %v1858, %v1900
      %v1939 = vadd.f32 %v1859, %v1901
      %v1940 = vadd.f32 %v1860, %v1902
      %v1941 = vadd.f32 %v1861, %v1903
      %v1942 = vadd.f32 %v1862, %v1904
      %v1943 = vadd.f32 %v1863, %v1905
      %v1944 = vadd.f32 %v1864, %v1906
      %v1945 = vadd.f32 %v1865, %v1907
      %v1946 = vadd.f32 %v1866, %v1908
      %v1947 = vadd.f32 %v1867, %v1909
      %v1948 = vadd.f32 %v1868, %v1910
      %v1949 = vadd.f32 %v1869, %v1911
      %v1950 = vld [vmem:[%s5] sm:$0x1]
      %v1952 = vlaneseq
      %v1953 = vshrl.u32 %v1952, 7
      %v1954 = vsub.s32 0, %v1953
      %v1955 = vrot.slane %v1950, %v1954
      %v1957 = vadd.f32 %v1912, %v1955
      %v1958 = vadd.f32 %v1913, %v1955
      %v1959 = vadd.f32 %v1914, %v1955
      %v1960 = vadd.f32 %v1915, %v1955
      %v1961 = vadd.f32 %v1916, %v1955
      %v1962 = vadd.f32 %v1917, %v1955
      %v1963 = vadd.f32 %v1918, %v1955
      %v1964 = vadd.f32 %v1919, %v1955
      %v1965 = vadd.f32 %v1920, %v1955
      %v1966 = vadd.f32 %v1921, %v1955
      %v1967 = vadd.f32 %v1922, %v1955
      %v1968 = vadd.f32 %v1923, %v1955
      %v1969 = vadd.f32 %v1924, %v1955
      %v1970 = vadd.f32 %v1925, %v1955
      %v1971 = vadd.f32 %v1926, %v1955
      %v1972 = vadd.f32 %v1927, %v1955
      %v1973 = vadd.f32 %v1928, %v1955
      %v1974 = vadd.f32 %v1929, %v1955
      %v1975 = vadd.f32 %v1930, %v1955
      %v1976 = vadd.f32 %v1931, %v1955
      %v1977 = vadd.f32 %v1932, %v1955
      %v1978 = vadd.f32 %v1933, %v1955
      %v1979 = vadd.f32 %v1934, %v1955
      %v1980 = vadd.f32 %v1935, %v1955
      %v1981 = vadd.f32 %v1936, %v1955
      %v1982 = vadd.f32 %v1937, %v1955
      %v1983 = vadd.f32 %v1938, %v1955
      %v1984 = vadd.f32 %v1939, %v1955
      %v1985 = vadd.f32 %v1940, %v1955
      %v1986 = vadd.f32 %v1941, %v1955
      %v1987 = vadd.f32 %v1942, %v1955
      %v1988 = vadd.f32 %v1943, %v1955
      %v1989 = vadd.f32 %v1944, %v1955
      %v1990 = vadd.f32 %v1945, %v1955
      %v1991 = vadd.f32 %v1946, %v1955
      %v1992 = vadd.f32 %v1947, %v1955
      %v1993 = vadd.f32 %v1948, %v1955
      %v1994 = vadd.f32 %v1949, %v1955
      %v1995 = vmul.f32 %v1957, 0.5
      %v1996 = vmul.f32 %v1958, 0.5
      %v1997 = vmul.f32 %v1959, 0.5
      %v1998 = vmul.f32 %v1960, 0.5
      %v1999 = vmul.f32 %v1961, 0.5
      %v2000 = vmul.f32 %v1962, 0.5
      %v2001 = vmul.f32 %v1963, 0.5
      %v2002 = vmul.f32 %v1964, 0.5
      %v2003 = vmul.f32 %v1965, 0.5
      %v2004 = vmul.f32 %v1966, 0.5
      %v2005 = vmul.f32 %v1967, 0.5
      %v2006 = vmul.f32 %v1968, 0.5
      %v2007 = vmul.f32 %v1969, 0.5
      %v2008 = vmul.f32 %v1970, 0.5
      %v2009 = vmul.f32 %v1971, 0.5
      %v2010 = vmul.f32 %v1972, 0.5
      %v2011 = vmul.f32 %v1973, 0.5
      %v2012 = vmul.f32 %v1974, 0.5
      %v2013 = vmul.f32 %v1975, 0.5
      %v2014 = vmul.f32 %v1976, 0.5
      %v2015 = vmul.f32 %v1977, 0.5
      %v2016 = vmul.f32 %v1978, 0.5
      %v2017 = vmul.f32 %v1979, 0.5
      %v2018 = vmul.f32 %v1980, 0.5
      %v2019 = vmul.f32 %v1981, 0.5
      %v2020 = vmul.f32 %v1982, 0.5
      %v2021 = vmul.f32 %v1983, 0.5
      %v2022 = vmul.f32 %v1984, 0.5
      %v2023 = vmul.f32 %v1985, 0.5
      %v2024 = vmul.f32 %v1986, 0.5
      %v2025 = vmul.f32 %v1987, 0.5
      %v2026 = vmul.f32 %v1988, 0.5
      %v2027 = vmul.f32 %v1989, 0.5
      %v2028 = vmul.f32 %v1990, 0.5
      %v2029 = vmul.f32 %v1991, 0.5
      %v2030 = vmul.f32 %v1992, 0.5
      %v2031 = vmul.f32 %v1993, 0.5
      %v2032 = vmul.f32 %v1994, 0.5
      %v2033 = vmul.f32 %v1957, 0.70710677
      %v2034 = vmul.f32 %v1958, 0.70710677
      %v2035 = vmul.f32 %v1959, 0.70710677
      %v2036 = vmul.f32 %v1960, 0.70710677
      %v2037 = vmul.f32 %v1961, 0.70710677
      %v2038 = vmul.f32 %v1962, 0.70710677
      %v2039 = vmul.f32 %v1963, 0.70710677
      %v2040 = vmul.f32 %v1964, 0.70710677
      %v2041 = vmul.f32 %v1965, 0.70710677
      %v2042 = vmul.f32 %v1966, 0.70710677
      %v2043 = vmul.f32 %v1967, 0.70710677
      %v2044 = vmul.f32 %v1968, 0.70710677
      %v2045 = vmul.f32 %v1969, 0.70710677
      %v2046 = vmul.f32 %v1970, 0.70710677
      %v2047 = vmul.f32 %v1971, 0.70710677
      %v2048 = vmul.f32 %v1972, 0.70710677
      %v2049 = vmul.f32 %v1973, 0.70710677
      %v2050 = vmul.f32 %v1974, 0.70710677
      %v2051 = vmul.f32 %v1975, 0.70710677
      %v2052 = vmul.f32 %v1976, 0.70710677
      %v2053 = vmul.f32 %v1977, 0.70710677
      %v2054 = vmul.f32 %v1978, 0.70710677
      %v2055 = vmul.f32 %v1979, 0.70710677
      %v2056 = vmul.f32 %v1980, 0.70710677
      %v2057 = vmul.f32 %v1981, 0.70710677
      %v2058 = vmul.f32 %v1982, 0.70710677
      %v2059 = vmul.f32 %v1983, 0.70710677
      %v2060 = vmul.f32 %v1984, 0.70710677
      %v2061 = vmul.f32 %v1985, 0.70710677
      %v2062 = vmul.f32 %v1986, 0.70710677
      %v2063 = vmul.f32 %v1987, 0.70710677
      %v2064 = vmul.f32 %v1988, 0.70710677
      %v2065 = vmul.f32 %v1989, 0.70710677
      %v2066 = vmul.f32 %v1990, 0.70710677
      %v2067 = vmul.f32 %v1991, 0.70710677
      %v2068 = vmul.f32 %v1992, 0.70710677
      %v2069 = vmul.f32 %v1993, 0.70710677
      %v2070 = vmul.f32 %v1994, 0.70710677
      %v2071 = verf.f32.pop %v2033
      %v2072 = verf.f32.pop %v2034
      %v2073 = verf.f32.pop %v2035
      %v2074 = verf.f32.pop %v2036
      %v2075 = verf.f32.pop %v2037
      %v2076 = verf.f32.pop %v2038
      %v2077 = verf.f32.pop %v2039
      %v2078 = verf.f32.pop %v2040
      %v2079 = verf.f32.pop %v2041
      %v2080 = verf.f32.pop %v2042
      %v2081 = verf.f32.pop %v2043
      %v2082 = verf.f32.pop %v2044
      %v2083 = verf.f32.pop %v2045
      %v2084 = verf.f32.pop %v2046
      %v2085 = verf.f32.pop %v2047
      %v2086 = verf.f32.pop %v2048
      %v2087 = verf.f32.pop %v2049
      %v2088 = verf.f32.pop %v2050
      %v2089 = verf.f32.pop %v2051
      %v2090 = verf.f32.pop %v2052
      %v2091 = verf.f32.pop %v2053
      %v2092 = verf.f32.pop %v2054
      %v2093 = verf.f32.pop %v2055
      %v2094 = verf.f32.pop %v2056
      %v2095 = verf.f32.pop %v2057
      %v2096 = verf.f32.pop %v2058
      %v2097 = verf.f32.pop %v2059
      %v2098 = verf.f32.pop %v2060
      %v2099 = verf.f32.pop %v2061
      %v2100 = verf.f32.pop %v2062
      %v2101 = verf.f32.pop %v2063
      %v2102 = verf.f32.pop %v2064
      %v2103 = verf.f32.pop %v2065
      %v2104 = verf.f32.pop %v2066
      %v2105 = verf.f32.pop %v2067
      %v2106 = verf.f32.pop %v2068
      %v2107 = verf.f32.pop %v2069
      %v2108 = verf.f32.pop %v2070
      %v2109 = vadd.f32 %v2071, 1.0
      %v2110 = vadd.f32 %v2072, 1.0
      %v2111 = vadd.f32 %v2073, 1.0
      %v2112 = vadd.f32 %v2074, 1.0
      %v2113 = vadd.f32 %v2075, 1.0
      %v2114 = vadd.f32 %v2076, 1.0
      %v2115 = vadd.f32 %v2077, 1.0
      %v2116 = vadd.f32 %v2078, 1.0
      %v2117 = vadd.f32 %v2079, 1.0
      %v2118 = vadd.f32 %v2080, 1.0
      %v2119 = vadd.f32 %v2081, 1.0
      %v2120 = vadd.f32 %v2082, 1.0
      %v2121 = vadd.f32 %v2083, 1.0
      %v2122 = vadd.f32 %v2084, 1.0
      %v2123 = vadd.f32 %v2085, 1.0
      %v2124 = vadd.f32 %v2086, 1.0
      %v2125 = vadd.f32 %v2087, 1.0
      %v2126 = vadd.f32 %v2088, 1.0
      %v2127 = vadd.f32 %v2089, 1.0
      %v2128 = vadd.f32 %v2090, 1.0
      %v2129 = vadd.f32 %v2091, 1.0
      %v2130 = vadd.f32 %v2092, 1.0
      %v2131 = vadd.f32 %v2093, 1.0
      %v2132 = vadd.f32 %v2094, 1.0
      %v2133 = vadd.f32 %v2095, 1.0
      %v2134 = vadd.f32 %v2096, 1.0
      %v2135 = vadd.f32 %v2097, 1.0
      %v2136 = vadd.f32 %v2098, 1.0
      %v2137 = vadd.f32 %v2099, 1.0
      %v2138 = vadd.f32 %v2100, 1.0
      %v2139 = vadd.f32 %v2101, 1.0
      %v2140 = vadd.f32 %v2102, 1.0
      %v2141 = vadd.f32 %v2103, 1.0
      %v2142 = vadd.f32 %v2104, 1.0
      %v2143 = vadd.f32 %v2105, 1.0
      %v2144 = vadd.f32 %v2106, 1.0
      %v2145 = vadd.f32 %v2107, 1.0
      %v2146 = vadd.f32 %v2108, 1.0
      %v2147 = vmul.f32 %v1995, %v2109
      %v2148 = vmul.f32 %v1996, %v2110
      %v2149 = vmul.f32 %v1997, %v2111
      %v2150 = vmul.f32 %v1998, %v2112
      %v2151 = vmul.f32 %v1999, %v2113
      %v2152 = vmul.f32 %v2000, %v2114
      %v2153 = vmul.f32 %v2001, %v2115
      %v2154 = vmul.f32 %v2002, %v2116
      %v2155 = vmul.f32 %v2003, %v2117
      %v2156 = vmul.f32 %v2004, %v2118
      %v2157 = vmul.f32 %v2005, %v2119
      %v2158 = vmul.f32 %v2006, %v2120
      %v2159 = vmul.f32 %v2007, %v2121
      %v2160 = vmul.f32 %v2008, %v2122
      %v2161 = vmul.f32 %v2009, %v2123
      %v2162 = vmul.f32 %v2010, %v2124
      %v2163 = vmul.f32 %v2011, %v2125
      %v2164 = vmul.f32 %v2012, %v2126
      %v2165 = vmul.f32 %v2013, %v2127
      %v2166 = vmul.f32 %v2014, %v2128
      %v2167 = vmul.f32 %v2015, %v2129
      %v2168 = vmul.f32 %v2016, %v2130
      %v2169 = vmul.f32 %v2017, %v2131
      %v2170 = vmul.f32 %v2018, %v2132
      %v2171 = vmul.f32 %v2019, %v2133
      %v2172 = vmul.f32 %v2020, %v2134
      %v2173 = vmul.f32 %v2021, %v2135
      %v2174 = vmul.f32 %v2022, %v2136
      %v2175 = vmul.f32 %v2023, %v2137
      %v2176 = vmul.f32 %v2024, %v2138
      %v2177 = vmul.f32 %v2025, %v2139
      %v2178 = vmul.f32 %v2026, %v2140
      %v2179 = vmul.f32 %v2027, %v2141
      %v2180 = vmul.f32 %v2028, %v2142
      %v2181 = vmul.f32 %v2029, %v2143
      %v2182 = vmul.f32 %v2030, %v2144
      %v2183 = vmul.f32 %v2031, %v2145
      %v2184 = vmul.f32 %v2032, %v2146
      %v2185 = vpack.c.bf16 %v2148, %v2147
      %v2186 = vpack.c.bf16 %v2150, %v2149
      %v2187 = vpack.c.bf16 %v2152, %v2151
      %v2188 = vpack.c.bf16 %v2154, %v2153
      %v2189 = vpack.c.bf16 %v2156, %v2155
      %v2190 = vpack.c.bf16 %v2158, %v2157
      %v2191 = vpack.c.bf16 %v2160, %v2159
      %v2192 = vpack.c.bf16 %v2162, %v2161
      %v2193 = vpack.c.bf16 %v2164, %v2163
      %v2194 = vpack.c.bf16 %v2166, %v2165
      %v2195 = vpack.c.bf16 %v2168, %v2167
      %v2196 = vpack.c.bf16 %v2170, %v2169
      %v2197 = vpack.c.bf16 %v2172, %v2171
      %v2198 = vpack.c.bf16 %v2174, %v2173
      %v2199 = vpack.c.bf16 %v2176, %v2175
      %v2200 = vpack.c.bf16 %v2178, %v2177
      %v2201 = vpack.c.bf16 %v2180, %v2179
      %v2202 = vpack.c.bf16 %v2182, %v2181
      %v2203 = vpack.c.bf16 %v2184, %v2183
      %v2223 = vunpack.c.l.b16 %v2185
      %v2224 = vunpack.c.h.b16 %v2185
      %v2225 = vunpack.c.l.b16 %v2186
      %v2226 = vunpack.c.h.b16 %v2186
      %v2227 = vunpack.c.l.b16 %v2187
      %v2228 = vunpack.c.h.b16 %v2187
      %v2229 = vunpack.c.l.b16 %v2188
      %v2230 = vunpack.c.h.b16 %v2188
      %v2231 = vunpack.c.l.b16 %v2189
      %v2232 = vunpack.c.h.b16 %v2189
      %v2233 = vunpack.c.l.b16 %v2190
      %v2234 = vunpack.c.h.b16 %v2190
      %v2235 = vunpack.c.l.b16 %v2191
      %v2236 = vunpack.c.h.b16 %v2191
      %v2237 = vunpack.c.l.b16 %v2192
      %v2238 = vunpack.c.h.b16 %v2192
      %v2239 = vunpack.c.l.b16 %v2193
      %v2240 = vunpack.c.h.b16 %v2193
      %v2241 = vunpack.c.l.b16 %v2194
      %v2242 = vunpack.c.h.b16 %v2194
      %v2243 = vunpack.c.l.b16 %v2195
      %v2244 = vunpack.c.h.b16 %v2195
      %v2245 = vunpack.c.l.b16 %v2196
      %v2246 = vunpack.c.h.b16 %v2196
      %v2247 = vunpack.c.l.b16 %v2197
      %v2248 = vunpack.c.h.b16 %v2197
      %v2249 = vunpack.c.l.b16 %v2198
      %v2250 = vunpack.c.h.b16 %v2198
      %v2251 = vunpack.c.l.b16 %v2199
      %v2252 = vunpack.c.h.b16 %v2199
      %v2253 = vunpack.c.l.b16 %v2200
      %v2254 = vunpack.c.h.b16 %v2200
      %v2255 = vunpack.c.l.b16 %v2201
      %v2256 = vunpack.c.h.b16 %v2201
      %v2257 = vunpack.c.l.b16 %v2202
      %v2258 = vunpack.c.h.b16 %v2202
      %v2259 = vunpack.c.l.b16 %v2203
      %v2260 = vunpack.c.h.b16 %v2203
      %v2261 = vpack.c.b16 %v2223, %v2223
      %v2262 = vpack.c.b16 %v2224, %v2224
      %v2263 = vpack.c.b16 %v2225, %v2225
      %v2264 = vpack.c.b16 %v2226, %v2226
      %v2265 = vpack.c.b16 %v2227, %v2227
      %v2266 = vpack.c.b16 %v2228, %v2228
      %v2267 = vpack.c.b16 %v2229, %v2229
      %v2268 = vpack.c.b16 %v2230, %v2230
      %v2269 = vpack.c.b16 %v2231, %v2231
      %v2270 = vpack.c.b16 %v2232, %v2232
      %v2271 = vpack.c.b16 %v2233, %v2233
      %v2272 = vpack.c.b16 %v2234, %v2234
      %v2273 = vpack.c.b16 %v2235, %v2235
      %v2274 = vpack.c.b16 %v2236, %v2236
      %v2275 = vpack.c.b16 %v2237, %v2237
      %v2276 = vpack.c.b16 %v2238, %v2238
      %v2277 = vpack.c.b16 %v2239, %v2239
      %v2278 = vpack.c.b16 %v2240, %v2240
      %v2279 = vpack.c.b16 %v2241, %v2241
      %v2280 = vpack.c.b16 %v2242, %v2242
      %v2281 = vpack.c.b16 %v2243, %v2243
      %v2282 = vpack.c.b16 %v2244, %v2244
      %v2283 = vpack.c.b16 %v2245, %v2245
      %v2284 = vpack.c.b16 %v2246, %v2246
      %v2285 = vpack.c.b16 %v2247, %v2247
      %v2286 = vpack.c.b16 %v2248, %v2248
      %v2287 = vpack.c.b16 %v2249, %v2249
      %v2288 = vpack.c.b16 %v2250, %v2250
      %v2289 = vpack.c.b16 %v2251, %v2251
      %v2290 = vpack.c.b16 %v2252, %v2252
      %v2291 = vpack.c.b16 %v2253, %v2253
      %v2292 = vpack.c.b16 %v2254, %v2254
      %v2293 = vpack.c.b16 %v2255, %v2255
      %v2294 = vpack.c.b16 %v2256, %v2256
      %v2295 = vpack.c.b16 %v2257, %v2257
      %v2296 = vpack.c.b16 %v2258, %v2258
      %v2297 = vpack.c.b16 %v2259, %v2259
      %v2298 = vpack.c.b16 %v2260, %v2260
      %vm2337 = vcmask 257024
      %2338 = vst.msk [vmem:[%s287] sm:$0xf] %vm2337, %v2261
      %2339 = vst.msk [vmem:[%s287 + $0x4] sm:$0xf] %vm2337, %v2262
      %2340 = vst.msk [vmem:[%s287 + $0x8] sm:$0xf] %vm2337, %v2263
      %2341 = vst.msk [vmem:[%s287 + $0xc] sm:$0xf] %vm2337, %v2264
      %2342 = vst.msk [vmem:[%s287 + $0x10] sm:$0xf] %vm2337, %v2265
      %2343 = vst.msk [vmem:[%s287 + $0x14] sm:$0xf] %vm2337, %v2266
      %2344 = vst.msk [vmem:[%s287 + $0x18] sm:$0xf] %vm2337, %v2267
      %2345 = vst.msk [vmem:[%s287 + $0x1c] sm:$0xf] %vm2337, %v2268
      %2346 = vst.msk [vmem:[%s287 + $0x20] sm:$0xf] %vm2337, %v2269
      %2347 = vst.msk [vmem:[%s287 + $0x24] sm:$0xf] %vm2337, %v2270
      %2348 = vst.msk [vmem:[%s287 + $0x28] sm:$0xf] %vm2337, %v2271
      %2349 = vst.msk [vmem:[%s287 + $0x2c] sm:$0xf] %vm2337, %v2272
      %2350 = vst.msk [vmem:[%s287 + $0x30] sm:$0xf] %vm2337, %v2273
      %2351 = vst.msk [vmem:[%s287 + $0x34] sm:$0xf] %vm2337, %v2274
      %2352 = vst.msk [vmem:[%s287 + $0x38] sm:$0xf] %vm2337, %v2275
      %2353 = vst.msk [vmem:[%s287 + $0x3c] sm:$0xf] %vm2337, %v2276
      %2354 = vst.msk [vmem:[%s287 + $0x40] sm:$0xf] %vm2337, %v2277
      %2355 = vst.msk [vmem:[%s287 + $0x44] sm:$0xf] %vm2337, %v2278
      %2356 = vst.msk [vmem:[%s287 + $0x48] sm:$0xf] %vm2337, %v2279
      %2357 = vst.msk [vmem:[%s287 + $0x4c] sm:$0xf] %vm2337, %v2280
      %2358 = vst.msk [vmem:[%s287 + $0x50] sm:$0xf] %vm2337, %v2281
      %2359 = vst.msk [vmem:[%s287 + $0x54] sm:$0xf] %vm2337, %v2282
      %2360 = vst.msk [vmem:[%s287 + $0x58] sm:$0xf] %vm2337, %v2283
      %2361 = vst.msk [vmem:[%s287 + $0x5c] sm:$0xf] %vm2337, %v2284
      %2362 = vst.msk [vmem:[%s287 + $0x60] sm:$0xf] %vm2337, %v2285
      %2363 = vst.msk [vmem:[%s287 + $0x64] sm:$0xf] %vm2337, %v2286
      %2364 = vst.msk [vmem:[%s287 + $0x68] sm:$0xf] %vm2337, %v2287
      %2365 = vst.msk [vmem:[%s287 + $0x6c] sm:$0xf] %vm2337, %v2288
      %2366 = vst.msk [vmem:[%s287 + $0x70] sm:$0xf] %vm2337, %v2289
      %2367 = vst.msk [vmem:[%s287 + $0x74] sm:$0xf] %vm2337, %v2290
      %2368 = vst.msk [vmem:[%s287 + $0x78] sm:$0xf] %vm2337, %v2291
      %2369 = vst.msk [vmem:[%s287 + $0x7c] sm:$0xf] %vm2337, %v2292
      %2370 = vst.msk [vmem:[%s287 + $0x80] sm:$0xf] %vm2337, %v2293
      %2371 = vst.msk [vmem:[%s287 + $0x84] sm:$0xf] %vm2337, %v2294
      %2372 = vst.msk [vmem:[%s287 + $0x88] sm:$0xf] %vm2337, %v2295
      %2373 = vst.msk [vmem:[%s287 + $0x8c] sm:$0xf] %vm2337, %v2296
      %2374 = vst.msk [vmem:[%s287 + $0x90] sm:$0xf] %vm2337, %v2297
      %2375 = vst.msk [vmem:[%s287 + $0x94] sm:$0xf] %vm2337, %v2298
      %v2376 = vmul.f32 %v2147, %v500
      %v2377 = vmul.f32 %v2148, %v505
      %v2378 = vmul.f32 %v2149, %v510
      %v2379 = vmul.f32 %v2150, %v515
      %v2380 = vmul.f32 %v2151, %v520
      %v2381 = vmul.f32 %v2152, %v525
      %v2382 = vmul.f32 %v2153, %v530
      %v2383 = vmul.f32 %v2154, %v535
      %v2384 = vmul.f32 %v2155, %v540
      %v2385 = vmul.f32 %v2156, %v545
      %v2386 = vmul.f32 %v2157, %v550
      %v2387 = vmul.f32 %v2158, %v555
      %v2388 = vmul.f32 %v2159, %v560
      %v2389 = vmul.f32 %v2160, %v565
      %v2390 = vmul.f32 %v2161, %v570
      %v2391 = vmul.f32 %v2162, %v575
      %v2392 = vmul.f32 %v2163, %v580
      %v2393 = vmul.f32 %v2164, %v585
      %v2394 = vmul.f32 %v2165, %v590
      %v2395 = vmul.f32 %v2166, %v595
      %v2396 = vmul.f32 %v2167, %v600
      %v2397 = vmul.f32 %v2168, %v605
      %v2398 = vmul.f32 %v2169, %v610
      %v2399 = vmul.f32 %v2170, %v615
      %v2400 = vmul.f32 %v2171, %v620
      %v2401 = vmul.f32 %v2172, %v625
      %v2402 = vmul.f32 %v2173, %v630
      %v2403 = vmul.f32 %v2174, %v635
      %v2404 = vmul.f32 %v2175, %v640
      %v2405 = vmul.f32 %v2176, %v645
      %v2406 = vmul.f32 %v2177, %v650
      %v2407 = vmul.f32 %v2178, %v655
      %v2408 = vmul.f32 %v2179, %v660
      %v2409 = vmul.f32 %v2180, %v665
      %v2410 = vmul.f32 %v2181, %v670
      %v2411 = vmul.f32 %v2182, %v675
      %v2412 = vmul.f32 %v2183, %v680
      %v2413 = vmul.f32 %v2184, %v685
      %vm2414 = vcmask 261120
      %v2415 = vsel %vm2414, %v2376, 0.0
      %v2416 = vsel %vm2414, %v2377, 0.0
      %v2417 = vadd.f32 %v2415, %v2416
      %v2418 = vsel %vm2414, %v2378, 0.0
      %v2419 = vadd.f32 %v2417, %v2418
      %v2420 = vsel %vm2414, %v2379, 0.0
      %v2421 = vadd.f32 %v2419, %v2420
      %v2422 = vsel %vm2414, %v2380, 0.0
      %v2423 = vadd.f32 %v2421, %v2422
      %v2424 = vsel %vm2414, %v2381, 0.0
      %v2425 = vadd.f32 %v2423, %v2424
      %v2426 = vsel %vm2414, %v2382, 0.0
      %v2427 = vadd.f32 %v2425, %v2426
      %v2428 = vsel %vm2414, %v2383, 0.0
      %v2429 = vadd.f32 %v2427, %v2428
      %v2430 = vsel %vm2414, %v2384, 0.0
      %v2431 = vadd.f32 %v2429, %v2430
      %v2432 = vsel %vm2414, %v2385, 0.0
      %v2433 = vadd.f32 %v2431, %v2432
      %v2434 = vsel %vm2414, %v2386, 0.0
      %v2435 = vadd.f32 %v2433, %v2434
      %v2436 = vsel %vm2414, %v2387, 0.0
      %v2437 = vadd.f32 %v2435, %v2436
      %v2438 = vsel %vm2414, %v2388, 0.0
      %v2439 = vadd.f32 %v2437, %v2438
      %v2440 = vsel %vm2414, %v2389, 0.0
      %v2441 = vadd.f32 %v2439, %v2440
      %v2442 = vsel %vm2414, %v2390, 0.0
      %v2443 = vadd.f32 %v2441, %v2442
      %v2444 = vsel %vm2414, %v2391, 0.0
      %v2445 = vadd.f32 %v2443, %v2444
      %v2446 = vsel %vm2414, %v2392, 0.0
      %v2447 = vadd.f32 %v2445, %v2446
      %v2448 = vsel %vm2414, %v2393, 0.0
      %v2449 = vadd.f32 %v2447, %v2448
      %v2450 = vsel %vm2414, %v2394, 0.0
      %v2451 = vadd.f32 %v2449, %v2450
      %v2452 = vsel %vm2414, %v2395, 0.0
      %v2453 = vadd.f32 %v2451, %v2452
      %v2454 = vsel %vm2414, %v2396, 0.0
      %v2455 = vadd.f32 %v2453, %v2454
      %v2456 = vsel %vm2414, %v2397, 0.0
      %v2457 = vadd.f32 %v2455, %v2456
      %v2458 = vsel %vm2414, %v2398, 0.0
      %v2459 = vadd.f32 %v2457, %v2458
      %v2460 = vsel %vm2414, %v2399, 0.0
      %v2461 = vadd.f32 %v2459, %v2460
      %v2462 = vsel %vm2414, %v2400, 0.0
      %v2463 = vadd.f32 %v2461, %v2462
      %v2464 = vsel %vm2414, %v2401, 0.0
      %v2465 = vadd.f32 %v2463, %v2464
      %v2466 = vsel %vm2414, %v2402, 0.0
      %v2467 = vadd.f32 %v2465, %v2466
      %v2468 = vsel %vm2414, %v2403, 0.0
      %v2469 = vadd.f32 %v2467, %v2468
      %v2470 = vsel %vm2414, %v2404, 0.0
      %v2471 = vadd.f32 %v2469, %v2470
      %v2472 = vsel %vm2414, %v2405, 0.0
      %v2473 = vadd.f32 %v2471, %v2472
      %v2474 = vsel %vm2414, %v2406, 0.0
      %v2475 = vadd.f32 %v2473, %v2474
      %v2476 = vsel %vm2414, %v2407, 0.0
      %v2477 = vadd.f32 %v2475, %v2476
      %v2478 = vsel %vm2414, %v2408, 0.0
      %v2479 = vadd.f32 %v2477, %v2478
      %v2480 = vsel %vm2414, %v2409, 0.0
      %v2481 = vadd.f32 %v2479, %v2480
      %v2482 = vsel %vm2414, %v2410, 0.0
      %v2483 = vadd.f32 %v2481, %v2482
      %v2484 = vsel %vm2414, %v2411, 0.0
      %v2485 = vadd.f32 %v2483, %v2484
      %v2486 = vsel %vm2414, %v2412, 0.0
      %v2487 = vadd.f32 %v2485, %v2486
      %v2488 = vsel %vm2414, %v2413, 0.0
      %v2489 = vadd.f32 %v2487, %v2488
      %v2490 = vrot.slane %v2489, 4
      %v2491 = vadd.f32 %v2489, %v2490
      %v2492 = vrot.slane %v2491, 2
      %v2493 = vadd.f32 %v2491, %v2492
      %v2494 = vrot.slane %v2493, 1
      %v2495 = vadd.f32 %v2493, %v2494
      %vm2496 = vcmask 253952
      %2497 = vst.msk [vmem:[%s292] sm:$0x1] %vm2496, %v2495
      %v2498 = vmul.f32 %v2376, %v2376
      %v2499 = vmul.f32 %v2377, %v2377
      %v2500 = vmul.f32 %v2378, %v2378
      %v2501 = vmul.f32 %v2379, %v2379
      %v2502 = vmul.f32 %v2380, %v2380
      %v2503 = vmul.f32 %v2381, %v2381
      %v2504 = vmul.f32 %v2382, %v2382
      %v2505 = vmul.f32 %v2383, %v2383
      %v2506 = vmul.f32 %v2384, %v2384
      %v2507 = vmul.f32 %v2385, %v2385
      %v2508 = vmul.f32 %v2386, %v2386
      %v2509 = vmul.f32 %v2387, %v2387
      %v2510 = vmul.f32 %v2388, %v2388
      %v2511 = vmul.f32 %v2389, %v2389
      %v2512 = vmul.f32 %v2390, %v2390
      %v2513 = vmul.f32 %v2391, %v2391
      %v2514 = vmul.f32 %v2392, %v2392
      %v2515 = vmul.f32 %v2393, %v2393
      %v2516 = vmul.f32 %v2394, %v2394
      %v2517 = vmul.f32 %v2395, %v2395
      %v2518 = vmul.f32 %v2396, %v2396
      %v2519 = vmul.f32 %v2397, %v2397
      %v2520 = vmul.f32 %v2398, %v2398
      %v2521 = vmul.f32 %v2399, %v2399
      %v2522 = vmul.f32 %v2400, %v2400
      %v2523 = vmul.f32 %v2401, %v2401
      %v2524 = vmul.f32 %v2402, %v2402
      %v2525 = vmul.f32 %v2403, %v2403
      %v2526 = vmul.f32 %v2404, %v2404
      %v2527 = vmul.f32 %v2405, %v2405
      %v2528 = vmul.f32 %v2406, %v2406
      %v2529 = vmul.f32 %v2407, %v2407
      %v2530 = vmul.f32 %v2408, %v2408
      %v2531 = vmul.f32 %v2409, %v2409
      %v2532 = vmul.f32 %v2410, %v2410
      %v2533 = vmul.f32 %v2411, %v2411
      %v2534 = vmul.f32 %v2412, %v2412
      %v2535 = vmul.f32 %v2413, %v2413
      %v2536 = vsel %vm2414, %v2498, 0.0
      %v2537 = vsel %vm2414, %v2499, 0.0
      %v2538 = vadd.f32 %v2536, %v2537
      %v2539 = vsel %vm2414, %v2500, 0.0
      %v2540 = vadd.f32 %v2538, %v2539
      %v2541 = vsel %vm2414, %v2501, 0.0
      %v2542 = vadd.f32 %v2540, %v2541
      %v2543 = vsel %vm2414, %v2502, 0.0
      %v2544 = vadd.f32 %v2542, %v2543
      %v2545 = vsel %vm2414, %v2503, 0.0
      %v2546 = vadd.f32 %v2544, %v2545
      %v2547 = vsel %vm2414, %v2504, 0.0
      %v2548 = vadd.f32 %v2546, %v2547
      %v2549 = vsel %vm2414, %v2505, 0.0
      %v2550 = vadd.f32 %v2548, %v2549
      %v2551 = vsel %vm2414, %v2506, 0.0
      %v2552 = vadd.f32 %v2550, %v2551
      %v2553 = vsel %vm2414, %v2507, 0.0
      %v2554 = vadd.f32 %v2552, %v2553
      %v2555 = vsel %vm2414, %v2508, 0.0
      %v2556 = vadd.f32 %v2554, %v2555
      %v2557 = vsel %vm2414, %v2509, 0.0
      %v2558 = vadd.f32 %v2556, %v2557
      %v2559 = vsel %vm2414, %v2510, 0.0
      %v2560 = vadd.f32 %v2558, %v2559
      %v2561 = vsel %vm2414, %v2511, 0.0
      %v2562 = vadd.f32 %v2560, %v2561
      %v2563 = vsel %vm2414, %v2512, 0.0
      %v2564 = vadd.f32 %v2562, %v2563
      %v2565 = vsel %vm2414, %v2513, 0.0
      %v2566 = vadd.f32 %v2564, %v2565
      %v2567 = vsel %vm2414, %v2514, 0.0
      %v2568 = vadd.f32 %v2566, %v2567
      %v2569 = vsel %vm2414, %v2515, 0.0
      %v2570 = vadd.f32 %v2568, %v2569
      %v2571 = vsel %vm2414, %v2516, 0.0
      %v2572 = vadd.f32 %v2570, %v2571
      %v2573 = vsel %vm2414, %v2517, 0.0
      %v2574 = vadd.f32 %v2572, %v2573
      %v2575 = vsel %vm2414, %v2518, 0.0
      %v2576 = vadd.f32 %v2574, %v2575
      %v2577 = vsel %vm2414, %v2519, 0.0
      %v2578 = vadd.f32 %v2576, %v2577
      %v2579 = vsel %vm2414, %v2520, 0.0
      %v2580 = vadd.f32 %v2578, %v2579
      %v2581 = vsel %vm2414, %v2521, 0.0
      %v2582 = vadd.f32 %v2580, %v2581
      %v2583 = vsel %vm2414, %v2522, 0.0
      %v2584 = vadd.f32 %v2582, %v2583
      %v2585 = vsel %vm2414, %v2523, 0.0
      %v2586 = vadd.f32 %v2584, %v2585
      %v2587 = vsel %vm2414, %v2524, 0.0
      %v2588 = vadd.f32 %v2586, %v2587
      %v2589 = vsel %vm2414, %v2525, 0.0
      %v2590 = vadd.f32 %v2588, %v2589
      %v2591 = vsel %vm2414, %v2526, 0.0
      %v2592 = vadd.f32 %v2590, %v2591
      %v2593 = vsel %vm2414, %v2527, 0.0
      %v2594 = vadd.f32 %v2592, %v2593
      %v2595 = vsel %vm2414, %v2528, 0.0
      %v2596 = vadd.f32 %v2594, %v2595
      %v2597 = vsel %vm2414, %v2529, 0.0
      %v2598 = vadd.f32 %v2596, %v2597
      %v2599 = vsel %vm2414, %v2530, 0.0
      %v2600 = vadd.f32 %v2598, %v2599
      %v2601 = vsel %vm2414, %v2531, 0.0
      %v2602 = vadd.f32 %v2600, %v2601
      %v2603 = vsel %vm2414, %v2532, 0.0
      %v2604 = vadd.f32 %v2602, %v2603
      %v2605 = vsel %vm2414, %v2533, 0.0
      %v2606 = vadd.f32 %v2604, %v2605
      %v2607 = vsel %vm2414, %v2534, 0.0
      %v2608 = vadd.f32 %v2606, %v2607
      %v2609 = vsel %vm2414, %v2535, 0.0
      %v2610 = vadd.f32 %v2608, %v2609
      %v2611 = vrot.slane %v2610, 4
      %v2612 = vadd.f32 %v2610, %v2611
      %v2613 = vrot.slane %v2612, 2
      %v2614 = vadd.f32 %v2612, %v2613
      %v2615 = vrot.slane %v2614, 1
      %v2616 = vadd.f32 %v2614, %v2615
      %2617 = vst.msk [vmem:[%s292 + $0x1] sm:$0x1] %vm2496, %v2616
      %s2618 = smul.u32 38, %s19
      %p2619 = scmp.lt.s32.totalorder %s2618, 151
      %s2620 = scalar_select %p2619, %s2618, 151
      %s2621 = smul.addr %s2620, 4
      %s2622 = scalar_lea.vmem %s6, %s2621
      %p2623 = scmp.lt.s32.totalorder %s19, 3
      %s2624 = scalar_select %p2623, %s19, 3
      %s2625 = smul.addr %s2624, 8
      %s2626 = scalar_lea.vmem %s7, %s2625
      // Predicated region
      $region45: #{convmixer_forward.4} parent=43 // pred_check
        %p2627 = pneg %p168
      $region46: #{convmixer_forward.4} parent=43 // pred_check_branch
        %2629 = sbr.rel (%p2627) target = $region48
      $region47: #{convmixer_forward.4} parent=43 // pred_region
        %s2630 = smul.u32 38, %s19
      $region48: #{convmixer_forward.4} parent=43 // pred_fallthru
        _
      // Predicated region
      $region49: #{convmixer_forward.4} parent=43 // pred_check
        %p2631 = pneg %p194
      $region50: #{convmixer_forward.4} parent=43 // pred_check_branch
        %2633 = sbr.rel (%p2631) target = $region52
      $region51: #{convmixer_forward.4} parent=43 // pred_region
        _
      $region52: #{convmixer_forward.4} parent=43 // pred_fallthru
        _
    $region44: #{convmixer_forward.4} parent=5 // pred_fallthru
      _
    %p2634 = scmp.le.s32.totalorder 2, %s14
    // Predicated region
    $region53: #{convmixer_forward.4} parent=5 // pred_check
      %p2635 = pneg %p2634
    $region54: #{convmixer_forward.4} parent=5 // pred_check_branch
      %2637 = sbr.rel (%p2635) target = $region56
    $region55: #{convmixer_forward.4} parent=5 // pred_region
      %s2638 = ssub.s32 %s14, 2
      // Predicated region
      $region57: #{convmixer_forward.4} parent=55 // pred_check
        %p2639 = pneg %p174
      $region58: #{convmixer_forward.4} parent=55 // pred_check_branch
        %2641 = sbr.rel (%p2639) target = $region60
      $region59: #{convmixer_forward.4} parent=55 // pred_region
        %s2642 = smul.u32 38, %s20
        %p2643 = scmp.lt.s32.totalorder %s2642, 151
        %s2644 = scalar_select %p2643, %s2642, 151
        %s2645 = smul.addr %s2644, 4
        %s2646 = scalar_lea.vmem %s6, %s2645
      $region60: #{convmixer_forward.4} parent=55 // pred_fallthru
        _
      // Predicated region
      $region61: #{convmixer_forward.4} parent=55 // pred_check
        %p2647 = pneg %p200
      $region62: #{convmixer_forward.4} parent=55 // pred_check_branch
        %2649 = sbr.rel (%p2647) target = $region64
      $region63: #{convmixer_forward.4} parent=55 // pred_region
        %p2650 = scmp.lt.s32.totalorder %s20, 3
        %s2651 = scalar_select %p2650, %s20, 3
        %s2652 = smul.addr %s2651, 8
        %s2653 = scalar_lea.vmem %s7, %s2652
      $region64: #{convmixer_forward.4} parent=55 // pred_fallthru
        _
    $region56: #{convmixer_forward.4} parent=5 // pred_fallthru
      _
  $region6: #{convmixer_forward.4} parent=0 // loop_footer
    %s18 = sadd.s32 1, %s14
  $region7: #{convmixer_forward.4} parent=0 // loop_footer_branch
    %13 = sbr.rel target = $region3
  $region8: #{convmixer_forward.4} parent=0 // loop_exit
    _

// kernel: convmixer_forward.5
$region0: #{convmixer_forward.5}
  #allocation0 [shape = 'u32[]', space=smem, size = 0x4, offset = 0x4, fixed_abs, tag = 'smem constant byte address 0x4 - core index']
  #allocation1 [shape = 'u32[144,128]{1,0:T(1,128)}', space=vmem, size = 0x12000, scoped, tag = 'internal scratch']
  %s0 = inlined_call_operand.vmem [shape: bf16[1216,32], index: 0, kind: input, shape index: {}]
  %s1 = inlined_call_operand.vmem [shape: bf16[1216,32], index: 1, kind: input, shape index: {}]
  %s2 = inlined_call_operand.vmem [shape: f32[1216,1], index: 2, kind: input, shape index: {}]
  %s3 = inlined_call_operand.vmem [shape: f32[1,32], index: 3, kind: input, shape index: {}]
  %s4 = inlined_call_operand.vmem [shape: f32[1,32], index: 4, kind: input, shape index: {}]
  %s5 = inlined_call_operand.vmem [shape: f32[1,32], index: 5, kind: input, shape index: {}]
  %s6 = inlined_call_operand.vmem [shape: f32[1,32], index: 6, kind: input, shape index: {}]
  %s7 = inlined_call_operand.vmem [shape: bf16[32,32], index: 7, kind: input, shape index: {}]
  %s8 = inlined_call_operand.vmem [shape: f32[1,32], index: 8, kind: input, shape index: {}]
  %s9 = inlined_call_operand.vmem [shape: bf16[1216,32], index: 9, kind: output, shape index: {0}]
  %s10 = inlined_call_operand.vmem [shape: f32[16,32], index: 10, kind: output, shape index: {1}]
  %11 = xla_tuple %s9, %s10
  %s12 = sld [smem:[#allocation0]]
  $region77: #{convmixer_forward.5} parent=0
    _
  %s14 = ssub.s32 1, %s12
  %s15 = scalar_select 0, %s14, %s12
  loop: start=0, step=1, limit=4
  $region2: #{convmixer_forward.5} parent=0 // loop_pre_header
    _
  $region3: #{convmixer_forward.5} parent=0 // loop_header
    %s17 = sphi 0, %s21
    %p18 = scmp.ge.s32.totalorder %s17, 4
    %s27 = sphi 0, %s29
    %s30 = sphi 0, %s27
    %s31 = sphi 0, %s30
    %s47 = sphi 0, %s31
    %s53 = sphi 0, %s55
    %s56 = sphi 0, %s53
    %s57 = sphi 0, %s56
    %s73 = sphi 0, %s57
    %s79 = sphi 0, %s81
    %s82 = sphi 0, %s79
    %s83 = sphi 0, %s82
    %s99 = sphi 0, %s83
    %s103 = sphi 0, %s103
    %s105 = sphi 0, %s103
    %s106 = sphi 0, %s105
    %s120 = sphi 0, %s106
    %s124 = sphi 0, %s124
    %s126 = sphi 0, %s124
    %s127 = sphi 0, %s126
    %s141 = sphi 0, %s127
    %s145 = sphi 0, %s145
    %s147 = sphi 0, %s145
    %s148 = sphi 0, %s147
    %s162 = sphi 0, %s148
    %s166 = sphi 0, %s166
    %s168 = sphi 0, %s166
    %s169 = sphi 0, %s168
    %s183 = sphi 0, %s169
    %s187 = sphi 0, %s187
    %s189 = sphi 0, %s187
    %s190 = sphi 0, %s189
    %s204 = sphi 0, %s190
    %s208 = sphi 0, %s208
    %s210 = sphi 0, %s208
    %s211 = sphi 0, %s210
    %s225 = sphi 0, %s211
    %s231 = sphi 0, %s233
    %s234 = sphi 0, %s231
    %s235 = sphi 0, %s234
    %s251 = sphi 0, %s235
    %s257 = sphi 0, %s259
    %s260 = sphi 0, %s257
    %s261 = sphi 0, %s260
    %s277 = sphi 0, %s261
  $region4: #{convmixer_forward.5} parent=0 // loop_header_branch
    %20 = sbr.rel (%p18) target = $region8
  $region5: #{convmixer_forward.5} parent=0 // loop_body
    %s22 = ssub.s32 %s17, 1
    %s23 = ssub.s32 %s17, 2
    %s24 = sadd.s32 %s17, 1
    %s25 = ssub.s32 %s17, %s24
    %p26 = scmp.eq.s32.totalorder %s25, 0
    %s28 = sadd.s32 %s27, 1
    %s29 = scalar_select %p26, %s27, %s28
    %p32 = pneg %p26
    %p33 = scmp.eq.s32.totalorder %s17, 1
    %p34 = por %p32, %p33
    %p35 = scmp.ne.s32.totalorder %s27, %s30
    %p36 = scmp.eq.s32.totalorder %s17, 0
    %p37 = por %p35, %p36
    %p38 = scmp.ne.s32.totalorder %s27, %s30
    %p39 = scmp.eq.s32.totalorder %s22, 1
    %p40 = por %p38, %p39
    %p41 = scmp.ne.s32.totalorder %s30, %s31
    %p42 = scmp.eq.s32.totalorder %s22, 0
    %p43 = por %p41, %p42
    %p44 = scmp.ne.s32.totalorder %s30, %s31
    %p45 = scmp.eq.s32.totalorder %s23, 1
    %p46 = por %p44, %p45
    %p48 = scmp.ne.s32.totalorder %s31, %s47
    %p49 = scmp.eq.s32.totalorder %s23, 0
    %p50 = por %p48, %p49
    %s51 = ssub.s32 %s17, %s24
    %p52 = scmp.eq.s32.totalorder %s51, 0
    %s54 = sadd.s32 %s53, 1
    %s55 = scalar_select %p52, %s53, %s54
    %p58 = pneg %p52
    %p59 = scmp.eq.s32.totalorder %s17, 1
    %p60 = por %p58, %p59
    %p61 = scmp.ne.s32.totalorder %s53, %s56
    %p62 = scmp.eq.s32.totalorder %s17, 0
    %p63 = por %p61, %p62
    %p64 = scmp.ne.s32.totalorder %s53, %s56
    %p65 = scmp.eq.s32.totalorder %s22, 1
    %p66 = por %p64, %p65
    %p67 = scmp.ne.s32.totalorder %s56, %s57
    %p68 = scmp.eq.s32.totalorder %s22, 0
    %p69 = por %p67, %p68
    %p70 = scmp.ne.s32.totalorder %s56, %s57
    %p71 = scmp.eq.s32.totalorder %s23, 1
    %p72 = por %p70, %p71
    %p74 = scmp.ne.s32.totalorder %s57, %s73
    %p75 = scmp.eq.s32.totalorder %s23, 0
    %p76 = por %p74, %p75
    %s77 = ssub.s32 %s17, %s24
    %p78 = scmp.eq.s32.totalorder %s77, 0
    %s80 = sadd.s32 %s79, 1
    %s81 = scalar_select %p78, %s79, %s80
    %p84 = pneg %p78
    %p85 = scmp.eq.s32.totalorder %s17, 1
    %p86 = por %p84, %p85
    %p87 = scmp.ne.s32.totalorder %s79, %s82
    %p88 = scmp.eq.s32.totalorder %s17, 0
    %p89 = por %p87, %p88
    %p90 = scmp.ne.s32.totalorder %s79, %s82
    %p91 = scmp.eq.s32.totalorder %s22, 1
    %p92 = por %p90, %p91
    %p93 = scmp.ne.s32.totalorder %s82, %s83
    %p94 = scmp.eq.s32.totalorder %s22, 0
    %p95 = por %p93, %p94
    %p96 = scmp.ne.s32.totalorder %s82, %s83
    %p97 = scmp.eq.s32.totalorder %s23, 1
    %p98 = por %p96, %p97
    %p100 = scmp.ne.s32.totalorder %s83, %s99
    %p101 = scmp.eq.s32.totalorder %s23, 0
    %p102 = por %p100, %p101
    %s104 = sadd.s32 %s103, 1
    %p107 = scmp.eq.s32.totalorder %s17, 1
    %p108 = scmp.ne.s32.totalorder %s103, %s105
    %p109 = scmp.eq.s32.totalorder %s17, 0
    %p110 = por %p108, %p109
    %p111 = scmp.ne.s32.totalorder %s103, %s105
    %p112 = scmp.eq.s32.totalorder %s22, 1
    %p113 = por %p111, %p112
    %p114 = scmp.ne.s32.totalorder %s105, %s106
    %p115 = scmp.eq.s32.totalorder %s22, 0
    %p116 = por %p114, %p115
    %p117 = scmp.ne.s32.totalorder %s105, %s106
    %p118 = scmp.eq.s32.totalorder %s23, 1
    %p119 = por %p117, %p118
    %p121 = scmp.ne.s32.totalorder %s106, %s120
    %p122 = scmp.eq.s32.totalorder %s23, 0
    %p123 = por %p121, %p122
    %s125 = sadd.s32 %s124, 1
    %p128 = scmp.eq.s32.totalorder %s17, 1
    %p129 = scmp.ne.s32.totalorder %s124, %s126
    %p130 = scmp.eq.s32.totalorder %s17, 0
    %p131 = por %p129, %p130
    %p132 = scmp.ne.s32.totalorder %s124, %s126
    %p133 = scmp.eq.s32.totalorder %s22, 1
    %p134 = por %p132, %p133
    %p135 = scmp.ne.s32.totalorder %s126, %s127
    %p136 = scmp.eq.s32.totalorder %s22, 0
    %p137 = por %p135, %p136
    %p138 = scmp.ne.s32.totalorder %s126, %s127
    %p139 = scmp.eq.s32.totalorder %s23, 1
    %p140 = por %p138, %p139
    %p142 = scmp.ne.s32.totalorder %s127, %s141
    %p143 = scmp.eq.s32.totalorder %s23, 0
    %p144 = por %p142, %p143
    %s146 = sadd.s32 %s145, 1
    %p149 = scmp.eq.s32.totalorder %s17, 1
    %p150 = scmp.ne.s32.totalorder %s145, %s147
    %p151 = scmp.eq.s32.totalorder %s17, 0
    %p152 = por %p150, %p151
    %p153 = scmp.ne.s32.totalorder %s145, %s147
    %p154 = scmp.eq.s32.totalorder %s22, 1
    %p155 = por %p153, %p154
    %p156 = scmp.ne.s32.totalorder %s147, %s148
    %p157 = scmp.eq.s32.totalorder %s22, 0
    %p158 = por %p156, %p157
    %p159 = scmp.ne.s32.totalorder %s147, %s148
    %p160 = scmp.eq.s32.totalorder %s23, 1
    %p161 = por %p159, %p160
    %p163 = scmp.ne.s32.totalorder %s148, %s162
    %p164 = scmp.eq.s32.totalorder %s23, 0
    %p165 = por %p163, %p164
    %s167 = sadd.s32 %s166, 1
    %p170 = scmp.eq.s32.totalorder %s17, 1
    %p171 = scmp.ne.s32.totalorder %s166, %s168
    %p172 = scmp.eq.s32.totalorder %s17, 0
    %p173 = por %p171, %p172
    %p174 = scmp.ne.s32.totalorder %s166, %s168
    %p175 = scmp.eq.s32.totalorder %s22, 1
    %p176 = por %p174, %p175
    %p177 = scmp.ne.s32.totalorder %s168, %s169
    %p178 = scmp.eq.s32.totalorder %s22, 0
    %p179 = por %p177, %p178
    %p180 = scmp.ne.s32.totalorder %s168, %s169
    %p181 = scmp.eq.s32.totalorder %s23, 1
    %p182 = por %p180, %p181
    %p184 = scmp.ne.s32.totalorder %s169, %s183
    %p185 = scmp.eq.s32.totalorder %s23, 0
    %p186 = por %p184, %p185
    %s188 = sadd.s32 %s187, 1
    %p191 = scmp.eq.s32.totalorder %s17, 1
    %p192 = scmp.ne.s32.totalorder %s187, %s189
    %p193 = scmp.eq.s32.totalorder %s17, 0
    %p194 = por %p192, %p193
    %p195 = scmp.ne.s32.totalorder %s187, %s189
    %p196 = scmp.eq.s32.totalorder %s22, 1
    %p197 = por %p195, %p196
    %p198 = scmp.ne.s32.totalorder %s189, %s190
    %p199 = scmp.eq.s32.totalorder %s22, 0
    %p200 = por %p198, %p199
    %p201 = scmp.ne.s32.totalorder %s189, %s190
    %p202 = scmp.eq.s32.totalorder %s23, 1
    %p203 = por %p201, %p202
    %p205 = scmp.ne.s32.totalorder %s190, %s204
    %p206 = scmp.eq.s32.totalorder %s23, 0
    %p207 = por %p205, %p206
    %s209 = sadd.s32 %s208, 1
    %p212 = scmp.eq.s32.totalorder %s17, 1
    %p213 = scmp.ne.s32.totalorder %s208, %s210
    %p214 = scmp.eq.s32.totalorder %s17, 0
    %p215 = por %p213, %p214
    %p216 = scmp.ne.s32.totalorder %s208, %s210
    %p217 = scmp.eq.s32.totalorder %s22, 1
    %p218 = por %p216, %p217
    %p219 = scmp.ne.s32.totalorder %s210, %s211
    %p220 = scmp.eq.s32.totalorder %s22, 0
    %p221 = por %p219, %p220
    %p222 = scmp.ne.s32.totalorder %s210, %s211
    %p223 = scmp.eq.s32.totalorder %s23, 1
    %p224 = por %p222, %p223
    %p226 = scmp.ne.s32.totalorder %s211, %s225
    %p227 = scmp.eq.s32.totalorder %s23, 0
    %p228 = por %p226, %p227
    %s229 = ssub.s32 %s17, %s24
    %p230 = scmp.eq.s32.totalorder %s229, 0
    %s232 = sadd.s32 %s231, 1
    %s233 = scalar_select %p230, %s231, %s232
    %p236 = pneg %p230
    %p237 = scmp.eq.s32.totalorder %s17, 1
    %p238 = por %p236, %p237
    %p239 = scmp.ne.s32.totalorder %s231, %s234
    %p240 = scmp.eq.s32.totalorder %s17, 0
    %p241 = por %p239, %p240
    %p242 = scmp.ne.s32.totalorder %s231, %s234
    %p243 = scmp.eq.s32.totalorder %s22, 1
    %p244 = por %p242, %p243
    %p245 = scmp.ne.s32.totalorder %s234, %s235
    %p246 = scmp.eq.s32.totalorder %s22, 0
    %p247 = por %p245, %p246
    %p248 = scmp.ne.s32.totalorder %s234, %s235
    %p249 = scmp.eq.s32.totalorder %s23, 1
    %p250 = por %p248, %p249
    %p252 = scmp.ne.s32.totalorder %s235, %s251
    %p253 = scmp.eq.s32.totalorder %s23, 0
    %p254 = por %p252, %p253
    %s255 = ssub.s32 %s17, %s24
    %p256 = scmp.eq.s32.totalorder %s255, 0
    %s258 = sadd.s32 %s257, 1
    %s259 = scalar_select %p256, %s257, %s258
    %p262 = pneg %p256
    %p263 = scmp.eq.s32.totalorder %s17, 1
    %p264 = por %p262, %p263
    %p265 = scmp.ne.s32.totalorder %s257, %s260
    %p266 = scmp.eq.s32.totalorder %s17, 0
    %p267 = por %p265, %p266
    %p268 = scmp.ne.s32.totalorder %s257, %s260
    %p269 = scmp.eq.s32.totalorder %s22, 1
    %p270 = por %p268, %p269
    %p271 = scmp.ne.s32.totalorder %s260, %s261
    %p272 = scmp.eq.s32.totalorder %s22, 0
    %p273 = por %p271, %p272
    %p274 = scmp.ne.s32.totalorder %s260, %s261
    %p275 = scmp.eq.s32.totalorder %s23, 1
    %p276 = por %p274, %p275
    %p278 = scmp.ne.s32.totalorder %s261, %s277
    %p279 = scmp.eq.s32.totalorder %s23, 0
    %p280 = por %p278, %p279
    %p281 = scmp.le.s32.totalorder 1, %s17
    %p282 = scmp.lt.s32.totalorder %s17, 3
    %p283 = pnand %p281, %p282
    %p284 = pneg %p283
    // Predicated region
    $region9: #{convmixer_forward.5} parent=5 // pred_check
      _
    $region10: #{convmixer_forward.5} parent=5 // pred_check_branch
      %286 = sbr.rel (%p283) target = $region12
    $region11: #{convmixer_forward.5} parent=5 // pred_region
      %s287 = ssub.s32 %s17, 1
      // Predicated region
      $region13: #{convmixer_forward.5} parent=11 // pred_check
        %p288 = pneg %p116
      $region14: #{convmixer_forward.5} parent=11 // pred_check_branch
        %290 = sbr.rel (%p288) target = $region16
      $region15: #{convmixer_forward.5} parent=11 // pred_region
        _
      $region16: #{convmixer_forward.5} parent=11 // pred_fallthru
        _
      // Predicated region
      $region17: #{convmixer_forward.5} parent=11 // pred_check
        %p291 = pneg %p137
      $region18: #{convmixer_forward.5} parent=11 // pred_check_branch
        %293 = sbr.rel (%p291) target = $region20
      $region19: #{convmixer_forward.5} parent=11 // pred_region
        _
      $region20: #{convmixer_forward.5} parent=11 // pred_fallthru
        _
      // Predicated region
      $region21: #{convmixer_forward.5} parent=11 // pred_check
        %p294 = pneg %p158
      $region22: #{convmixer_forward.5} parent=11 // pred_check_branch
        %296 = sbr.rel (%p294) target = $region24
      $region23: #{convmixer_forward.5} parent=11 // pred_region
        _
      $region24: #{convmixer_forward.5} parent=11 // pred_fallthru
        _
      // Predicated region
      $region25: #{convmixer_forward.5} parent=11 // pred_check
        %p297 = pneg %p179
      $region26: #{convmixer_forward.5} parent=11 // pred_check_branch
        %299 = sbr.rel (%p297) target = $region28
      $region27: #{convmixer_forward.5} parent=11 // pred_region
        _
      $region28: #{convmixer_forward.5} parent=11 // pred_fallthru
        _
      // Predicated region
      $region29: #{convmixer_forward.5} parent=11 // pred_check
        %p300 = pneg %p200
      $region30: #{convmixer_forward.5} parent=11 // pred_check_branch
        %302 = sbr.rel (%p300) target = $region32
      $region31: #{convmixer_forward.5} parent=11 // pred_region
        _
      $region32: #{convmixer_forward.5} parent=11 // pred_fallthru
        _
      // Predicated region
      $region33: #{convmixer_forward.5} parent=11 // pred_check
        %p303 = pneg %p221
      $region34: #{convmixer_forward.5} parent=11 // pred_check_branch
        %305 = sbr.rel (%p303) target = $region36
      $region35: #{convmixer_forward.5} parent=11 // pred_region
        _
      $region36: #{convmixer_forward.5} parent=11 // pred_fallthru
        _
    $region12: #{convmixer_forward.5} parent=5 // pred_fallthru
      _
    %p306 = scmp.lt.s32.totalorder %s17, 2
    // Predicated region
    $region37: #{convmixer_forward.5} parent=5 // pred_check
      %p307 = pneg %p306
    $region38: #{convmixer_forward.5} parent=5 // pred_check_branch
      %309 = sbr.rel (%p307) target = $region40
    $region39: #{convmixer_forward.5} parent=5 // pred_region
      // Predicated region
      $region41: #{convmixer_forward.5} parent=39 // pred_check
        %p310 = pneg %p37
      $region42: #{convmixer_forward.5} parent=39 // pred_check_branch
        %312 = sbr.rel (%p310) target = $region44
      $region43: #{convmixer_forward.5} parent=39 // pred_region
        %s313 = smul.u32 76, %s17
        %p314 = scmp.lt.s32.totalorder %s313, 151
        %s315 = scalar_select %p314, %s313, 151
        %s316 = smul.addr %s315, 4
        %s317 = scalar_lea.vmem %s0, %s316
        %s318 = smul.u32 76, %s17
      $region44: #{convmixer_forward.5} parent=39 // pred_fallthru
        _
      // Predicated region
      $region45: #{convmixer_forward.5} parent=39 // pred_check
        %p319 = pneg %p63
      $region46: #{convmixer_forward.5} parent=39 // pred_check_branch
        %321 = sbr.rel (%p319) target = $region48
      $region47: #{convmixer_forward.5} parent=39 // pred_region
        %s322 = smul.u32 76, %s17
        %p323 = scmp.lt.s32.totalorder %s322, 151
        %s324 = scalar_select %p323, %s322, 151
        %s325 = smul.addr %s324, 4
        %s326 = scalar_lea.vmem %s1, %s325
        %s327 = smul.u32 76, %s17
      $region48: #{convmixer_forward.5} parent=39 // pred_fallthru
        _
      // Predicated region
      $region49: #{convmixer_forward.5} parent=39 // pred_check
        %p328 = pneg %p89
      $region50: #{convmixer_forward.5} parent=39 // pred_check_branch
        %330 = sbr.rel (%p328) target = $region52
      $region51: #{convmixer_forward.5} parent=39 // pred_region
        %s331 = smul.u32 76, %s17
        %p332 = scmp.lt.s32.totalorder %s331, 151
        %s333 = scalar_select %p332, %s331, 151
        %s334 = smul.addr %s333, 8
        %s335 = scalar_lea.vmem %s2, %s334
        %s336 = smul.u32 76, %s17
      $region52: #{convmixer_forward.5} parent=39 // pred_fallthru
        _
    $region40: #{convmixer_forward.5} parent=5 // pred_fallthru
      _
    %p337 = scmp.le.s32.totalorder 1, %s17
    %p338 = scmp.lt.s32.totalorder %s17, 3
    %p339 = pnand %p337, %p338
    %p340 = pneg %p339
    // Predicated region
    $region53: #{convmixer_forward.5} parent=5 // pred_check
      _
    $region54: #{convmixer_forward.5} parent=5 // pred_check_branch
      %342 = sbr.rel (%p339) target = $region56
    $region55: #{convmixer_forward.5} parent=5 // pred_region
      %s343 = ssub.s32 %s17, 1
      %s344 = smul.u32 76, %s22
      %p345 = scmp.lt.s32.totalorder %s344, 151
      %s346 = scalar_select %p345, %s344, 151
      %s347 = smul.addr %s346, 4
      %s348 = scalar_lea.vmem %s0, %s347
      %p349 = pneg %p43
      %p350 = pneg %p40
      %s351 = smul.u32 76, %s22
      %p352 = scmp.lt.s32.totalorder %s351, 151
      %s353 = scalar_select %p352, %s351, 151
      %s354 = smul.addr %s353, 4
      %s355 = scalar_lea.vmem %s1, %s354
      %p356 = pneg %p69
      %p357 = pneg %p66
      %s358 = smul.u32 76, %s22
      %p359 = scmp.lt.s32.totalorder %s358, 151
      %s360 = scalar_select %p359, %s358, 151
      %s361 = smul.addr %s360, 8
      %s362 = scalar_lea.vmem %s2, %s361
      %p363 = pneg %p95
      %p364 = pneg %p92
      %p365 = pneg %p116
      %p366 = pneg %p113
      %p367 = pneg %p137
      %p368 = pneg %p134
      %p369 = pneg %p158
      %p370 = pneg %p155
      %p371 = pneg %p179
      %p372 = pneg %p176
      %p373 = pneg %p200
      %p374 = pneg %p197
      %p375 = pneg %p221
      %p376 = pneg %p218
      %p377 = pneg %p247
      %p378 = pneg %p244
      %s379 = smul.u32 76, %s22
      %p380 = scmp.lt.s32.totalorder %s379, 151
      %s381 = scalar_select %p380, %s379, 151
      %s382 = smul.addr %s381, 4
      %s383 = scalar_lea.vmem %s9, %s382
      %p384 = pneg %p273
      %p385 = pneg %p270
      %p386 = scmp.lt.s32.totalorder %s22, 1
      %s387 = scalar_select %p386, %s22, 1
      %s388 = smul.addr %s387, 8
      %s389 = scalar_lea.vmem %s10, %s388
      %s390 = smul.u32 76, %s22
      %p391 = scmp.lt.s32.totalorder %s390, 151
      %s392 = scalar_select %p391, %s390, 151
      %s393 = smul.addr %s392, 4
      %s394 = scalar_lea.vmem %s0, %s393
      %s395 = smul.u32 76, %s22
      %s396 = smul.u32 76, %s22
      %p397 = scmp.lt.s32.totalorder %s396, 151
      %s398 = scalar_select %p397, %s396, 151
      %s399 = smul.addr %s398, 4
      %s400 = scalar_lea.vmem %s1, %s399
      %s401 = smul.u32 76, %s22
      %s402 = smul.u32 76, %s22
      %p403 = scmp.lt.s32.totalorder %s402, 151
      %s404 = scalar_select %p403, %s402, 151
      %s405 = smul.addr %s404, 8
      %s406 = scalar_lea.vmem %s2, %s405
      %s407 = smul.u32 76, %s22
      %s408 = smul.u32 76, %s22
      %p409 = scmp.lt.s32.totalorder %s408, 151
      %s410 = scalar_select %p409, %s408, 151
      %s411 = smul.addr %s410, 4
      %s412 = scalar_lea.vmem %s9, %s411
      %s413 = smul.u32 76, %s22
      %p414 = scmp.lt.s32.totalorder %s22, 1
      %s415 = scalar_select %p414, %s22, 1
      %s416 = smul.addr %s415, 8
      %s417 = scalar_lea.vmem %s10, %s416
      %v419 = vld [vmem:[%s406] sm:$0xff]
      %v420 = vld [vmem:[%s406 + $0x8] sm:$0xff]
      %v421 = vld [vmem:[%s406 + $0x10] sm:$0xff]
      %v422 = vld [vmem:[%s406 + $0x18] sm:$0xff]
      %v423 = vld [vmem:[%s406 + $0x20] sm:$0xff]
      %v424 = vld [vmem:[%s406 + $0x28] sm:$0xff]
      %v425 = vld [vmem:[%s406 + $0x30] sm:$0xff]
      %v426 = vld [vmem:[%s406 + $0x38] sm:$0xff]
      %v427 = vld [vmem:[%s406 + $0x40] sm:$0xff]
      %v428 = vld [vmem:[%s406 + $0x48] sm:$0xff]
      %v429 = vld [vmem:[%s406 + $0x50] sm:$0xff]
      %v430 = vld [vmem:[%s406 + $0x58] sm:$0xff]
      %v431 = vld [vmem:[%s406 + $0x60] sm:$0xff]
      %v432 = vld [vmem:[%s406 + $0x68] sm:$0xff]
      %v433 = vld [vmem:[%s406 + $0x70] sm:$0xff]
      %v434 = vld [vmem:[%s406 + $0x78] sm:$0xff]
      %v435 = vld [vmem:[%s406 + $0x80] sm:$0xff]
      %v436 = vld [vmem:[%s406 + $0x88] sm:$0xff]
      %v437 = vld [vmem:[%s406 + $0x90] sm:$0xff]
      %v438 = vld [vmem:[%s406 + $0x98] sm:$0xff]
      %v439 = vld [vmem:[%s406 + $0xa0] sm:$0xff]
      %v440 = vld [vmem:[%s406 + $0xa8] sm:$0xff]
      %v441 = vld [vmem:[%s406 + $0xb0] sm:$0xff]
      %v442 = vld [vmem:[%s406 + $0xb8] sm:$0xff]
      %v443 = vld [vmem:[%s406 + $0xc0] sm:$0xff]
      %v444 = vld [vmem:[%s406 + $0xc8] sm:$0xff]
      %v445 = vld [vmem:[%s406 + $0xd0] sm:$0xff]
      %v446 = vld [vmem:[%s406 + $0xd8] sm:$0xff]
      %v447 = vld [vmem:[%s406 + $0xe0] sm:$0xff]
      %v448 = vld [vmem:[%s406 + $0xe8] sm:$0xff]
      %v449 = vld [vmem:[%s406 + $0xf0] sm:$0xff]
      %v450 = vld [vmem:[%s406 + $0xf8] sm:$0xff]
      %v451 = vld [vmem:[%s406 + $0x100] sm:$0xff]
      %v452 = vld [vmem:[%s406 + $0x108] sm:$0xff]
      %v453 = vld [vmem:[%s406 + $0x110] sm:$0xff]
      %v454 = vld [vmem:[%s406 + $0x118] sm:$0xff]
      %v455 = vld [vmem:[%s406 + $0x120] sm:$0xff]
      %v456 = vld [vmem:[%s406 + $0x128] sm:$0xff]
      %v457 = vld [vmem:[%s406 + $0x130] sm:$0xff]
      %v458 = vld [vmem:[%s406 + $0x138] sm:$0xff]
      %v459 = vld [vmem:[%s406 + $0x140] sm:$0xff]
      %v460 = vld [vmem:[%s406 + $0x148] sm:$0xff]
      %v461 = vld [vmem:[%s406 + $0x150] sm:$0xff]
      %v462 = vld [vmem:[%s406 + $0x158] sm:$0xff]
      %v463 = vld [vmem:[%s406 + $0x160] sm:$0xff]
      %v464 = vld [vmem:[%s406 + $0x168] sm:$0xff]
      %v465 = vld [vmem:[%s406 + $0x170] sm:$0xff]
      %v466 = vld [vmem:[%s406 + $0x178] sm:$0xff]
      %v467 = vld [vmem:[%s406 + $0x180] sm:$0xff]
      %v468 = vld [vmem:[%s406 + $0x188] sm:$0xff]
      %v469 = vld [vmem:[%s406 + $0x190] sm:$0xff]
      %v470 = vld [vmem:[%s406 + $0x198] sm:$0xff]
      %v471 = vld [vmem:[%s406 + $0x1a0] sm:$0xff]
      %v472 = vld [vmem:[%s406 + $0x1a8] sm:$0xff]
      %v473 = vld [vmem:[%s406 + $0x1b0] sm:$0xff]
      %v474 = vld [vmem:[%s406 + $0x1b8] sm:$0xff]
      %v475 = vld [vmem:[%s406 + $0x1c0] sm:$0xff]
      %v476 = vld [vmem:[%s406 + $0x1c8] sm:$0xff]
      %v477 = vld [vmem:[%s406 + $0x1d0] sm:$0xff]
      %v478 = vld [vmem:[%s406 + $0x1d8] sm:$0xff]
      %v479 = vld [vmem:[%s406 + $0x1e0] sm:$0xff]
      %v480 = vld [vmem:[%s406 + $0x1e8] sm:$0xff]
      %v481 = vld [vmem:[%s406 + $0x1f0] sm:$0xff]
      %v482 = vld [vmem:[%s406 + $0x1f8] sm:$0xff]
      %v483 = vld [vmem:[%s406 + $0x200] sm:$0xff]
      %v484 = vld [vmem:[%s406 + $0x208] sm:$0xff]
      %v485 = vld [vmem:[%s406 + $0x210] sm:$0xff]
      %v486 = vld [vmem:[%s406 + $0x218] sm:$0xff]
      %v487 = vld [vmem:[%s406 + $0x220] sm:$0xff]
      %v488 = vld [vmem:[%s406 + $0x228] sm:$0xff]
      %v489 = vld [vmem:[%s406 + $0x230] sm:$0xff]
      %v490 = vld [vmem:[%s406 + $0x238] sm:$0xff]
      %v491 = vld [vmem:[%s406 + $0x240] sm:$0xff]
      %v492 = vld [vmem:[%s406 + $0x248] sm:$0xff]
      %v493 = vld [vmem:[%s406 + $0x250] sm:$0xff]
      %v494 = vld [vmem:[%s406 + $0x258] sm:$0xff]
      %v495 = vld [vmem:[%s400] sm:$0xf]
      %v496 = vld [vmem:[%s400 + $0x4] sm:$0xf]
      %v497 = vld [vmem:[%s400 + $0x8] sm:$0xf]
      %v498 = vld [vmem:[%s400 + $0xc] sm:$0xf]
      %v499 = vld [vmem:[%s400 + $0x10] sm:$0xf]
      %v500 = vld [vmem:[%s400 + $0x14] sm:$0xf]
      %v501 = vld [vmem:[%s400 + $0x18] sm:$0xf]
      %v502 = vld [vmem:[%s400 + $0x1c] sm:$0xf]
      %v503 = vld [vmem:[%s400 + $0x20] sm:$0xf]
      %v504 = vld [vmem:[%s400 + $0x24] sm:$0xf]
      %v505 = vld [vmem:[%s400 + $0x28] sm:$0xf]
      %v506 = vld [vmem:[%s400 + $0x2c] sm:$0xf]
      %v507 = vld [vmem:[%s400 + $0x30] sm:$0xf]
      %v508 = vld [vmem:[%s400 + $0x34] sm:$0xf]
      %v509 = vld [vmem:[%s400 + $0x38] sm:$0xf]
      %v510 = vld [vmem:[%s400 + $0x3c] sm:$0xf]
      %v511 = vld [vmem:[%s400 + $0x40] sm:$0xf]
      %v512 = vld [vmem:[%s400 + $0x44] sm:$0xf]
      %v513 = vld [vmem:[%s400 + $0x48] sm:$0xf]
      %v514 = vld [vmem:[%s400 + $0x4c] sm:$0xf]
      %v515 = vld [vmem:[%s400 + $0x50] sm:$0xf]
      %v516 = vld [vmem:[%s400 + $0x54] sm:$0xf]
      %v517 = vld [vmem:[%s400 + $0x58] sm:$0xf]
      %v518 = vld [vmem:[%s400 + $0x5c] sm:$0xf]
      %v519 = vld [vmem:[%s400 + $0x60] sm:$0xf]
      %v520 = vld [vmem:[%s400 + $0x64] sm:$0xf]
      %v521 = vld [vmem:[%s400 + $0x68] sm:$0xf]
      %v522 = vld [vmem:[%s400 + $0x6c] sm:$0xf]
      %v523 = vld [vmem:[%s400 + $0x70] sm:$0xf]
      %v524 = vld [vmem:[%s400 + $0x74] sm:$0xf]
      %v525 = vld [vmem:[%s400 + $0x78] sm:$0xf]
      %v526 = vld [vmem:[%s400 + $0x7c] sm:$0xf]
      %v527 = vld [vmem:[%s400 + $0x80] sm:$0xf]
      %v528 = vld [vmem:[%s400 + $0x84] sm:$0xf]
      %v529 = vld [vmem:[%s400 + $0x88] sm:$0xf]
      %v530 = vld [vmem:[%s400 + $0x8c] sm:$0xf]
      %v531 = vld [vmem:[%s400 + $0x90] sm:$0xf]
      %v532 = vld [vmem:[%s400 + $0x94] sm:$0xf]
      %v533 = vld [vmem:[%s400 + $0x98] sm:$0xf]
      %v534 = vld [vmem:[%s400 + $0x9c] sm:$0xf]
      %v535 = vld [vmem:[%s400 + $0xa0] sm:$0xf]
      %v536 = vld [vmem:[%s400 + $0xa4] sm:$0xf]
      %v537 = vld [vmem:[%s400 + $0xa8] sm:$0xf]
      %v538 = vld [vmem:[%s400 + $0xac] sm:$0xf]
      %v539 = vld [vmem:[%s400 + $0xb0] sm:$0xf]
      %v540 = vld [vmem:[%s400 + $0xb4] sm:$0xf]
      %v541 = vld [vmem:[%s400 + $0xb8] sm:$0xf]
      %v542 = vld [vmem:[%s400 + $0xbc] sm:$0xf]
      %v543 = vld [vmem:[%s400 + $0xc0] sm:$0xf]
      %v544 = vld [vmem:[%s400 + $0xc4] sm:$0xf]
      %v545 = vld [vmem:[%s400 + $0xc8] sm:$0xf]
      %v546 = vld [vmem:[%s400 + $0xcc] sm:$0xf]
      %v547 = vld [vmem:[%s400 + $0xd0] sm:$0xf]
      %v548 = vld [vmem:[%s400 + $0xd4] sm:$0xf]
      %v549 = vld [vmem:[%s400 + $0xd8] sm:$0xf]
      %v550 = vld [vmem:[%s400 + $0xdc] sm:$0xf]
      %v551 = vld [vmem:[%s400 + $0xe0] sm:$0xf]
      %v552 = vld [vmem:[%s400 + $0xe4] sm:$0xf]
      %v553 = vld [vmem:[%s400 + $0xe8] sm:$0xf]
      %v554 = vld [vmem:[%s400 + $0xec] sm:$0xf]
      %v555 = vld [vmem:[%s400 + $0xf0] sm:$0xf]
      %v556 = vld [vmem:[%s400 + $0xf4] sm:$0xf]
      %v557 = vld [vmem:[%s400 + $0xf8] sm:$0xf]
      %v558 = vld [vmem:[%s400 + $0xfc] sm:$0xf]
      %v559 = vld [vmem:[%s400 + $0x100] sm:$0xf]
      %v560 = vld [vmem:[%s400 + $0x104] sm:$0xf]
      %v561 = vld [vmem:[%s400 + $0x108] sm:$0xf]
      %v562 = vld [vmem:[%s400 + $0x10c] sm:$0xf]
      %v563 = vld [vmem:[%s400 + $0x110] sm:$0xf]
      %v564 = vld [vmem:[%s400 + $0x114] sm:$0xf]
      %v565 = vld [vmem:[%s400 + $0x118] sm:$0xf]
      %v566 = vld [vmem:[%s400 + $0x11c] sm:$0xf]
      %v567 = vld [vmem:[%s400 + $0x120] sm:$0xf]
      %v568 = vld [vmem:[%s400 + $0x124] sm:$0xf]
      %v569 = vld [vmem:[%s400 + $0x128] sm:$0xf]
      %v570 = vld [vmem:[%s400 + $0x12c] sm:$0xf]
      %v571 = vunpack.c.l.bf16 %v495
      %v572 = vunpack.c.l.bf16 %v496
      %v573 = vunpack.c.l.bf16 %v497
      %v574 = vunpack.c.l.bf16 %v498
      %v575 = vunpack.c.l.bf16 %v499
      %v576 = vunpack.c.l.bf16 %v500
      %v577 = vunpack.c.l.bf16 %v501
      %v578 = vunpack.c.l.bf16 %v502
      %v579 = vunpack.c.l.bf16 %v503
      %v580 = vunpack.c.l.bf16 %v504
      %v581 = vunpack.c.l.bf16 %v505
      %v582 = vunpack.c.l.bf16 %v506
      %v583 = vunpack.c.l.bf16 %v507
      %v584 = vunpack.c.l.bf16 %v508
      %v585 = vunpack.c.l.bf16 %v509
      %v586 = vunpack.c.l.bf16 %v510
      %v587 = vunpack.c.l.bf16 %v511
      %v588 = vunpack.c.l.bf16 %v512
      %v589 = vunpack.c.l.bf16 %v513
      %v590 = vunpack.c.l.bf16 %v514
      %v591 = vunpack.c.l.bf16 %v515
      %v592 = vunpack.c.l.bf16 %v516
      %v593 = vunpack.c.l.bf16 %v517
      %v594 = vunpack.c.l.bf16 %v518
      %v595 = vunpack.c.l.bf16 %v519
      %v596 = vunpack.c.l.bf16 %v520
      %v597 = vunpack.c.l.bf16 %v521
      %v598 = vunpack.c.l.bf16 %v522
      %v599 = vunpack.c.l.bf16 %v523
      %v600 = vunpack.c.l.bf16 %v524
      %v601 = vunpack.c.l.bf16 %v525
      %v602 = vunpack.c.l.bf16 %v526
      %v603 = vunpack.c.l.bf16 %v527
      %v604 = vunpack.c.l.bf16 %v528
      %v605 = vunpack.c.l.bf16 %v529
      %v606 = vunpack.c.l.bf16 %v530
      %v607 = vunpack.c.l.bf16 %v531
      %v608 = vunpack.c.l.bf16 %v532
      %v609 = vunpack.c.l.bf16 %v533
      %v610 = vunpack.c.l.bf16 %v534
      %v611 = vunpack.c.l.bf16 %v535
      %v612 = vunpack.c.l.bf16 %v536
      %v613 = vunpack.c.l.bf16 %v537
      %v614 = vunpack.c.l.bf16 %v538
      %v615 = vunpack.c.l.bf16 %v539
      %v616 = vunpack.c.l.bf16 %v540
      %v617 = vunpack.c.l.bf16 %v541
      %v618 = vunpack.c.l.bf16 %v542
      %v619 = vunpack.c.l.bf16 %v543
      %v620 = vunpack.c.l.bf16 %v544
      %v621 = vunpack.c.l.bf16 %v545
      %v622 = vunpack.c.l.bf16 %v546
      %v623 = vunpack.c.l.bf16 %v547
      %v624 = vunpack.c.l.bf16 %v548
      %v625 = vunpack.c.l.bf16 %v549
      %v626 = vunpack.c.l.bf16 %v550
      %v627 = vunpack.c.l.bf16 %v551
      %v628 = vunpack.c.l.bf16 %v552
      %v629 = vunpack.c.l.bf16 %v553
      %v630 = vunpack.c.l.bf16 %v554
      %v631 = vunpack.c.l.bf16 %v555
      %v632 = vunpack.c.l.bf16 %v556
      %v633 = vunpack.c.l.bf16 %v557
      %v634 = vunpack.c.l.bf16 %v558
      %v635 = vunpack.c.l.bf16 %v559
      %v636 = vunpack.c.l.bf16 %v560
      %v637 = vunpack.c.l.bf16 %v561
      %v638 = vunpack.c.l.bf16 %v562
      %v639 = vunpack.c.l.bf16 %v563
      %v640 = vunpack.c.l.bf16 %v564
      %v641 = vunpack.c.l.bf16 %v565
      %v642 = vunpack.c.l.bf16 %v566
      %v643 = vunpack.c.l.bf16 %v567
      %v644 = vunpack.c.l.bf16 %v568
      %v645 = vunpack.c.l.bf16 %v569
      %v646 = vunpack.c.l.bf16 %v570
      %v647 = vld [vmem:[%s3] sm:$0x1]
      %v649 = vlaneseq
      %v650 = vshrl.u32 %v649, 7
      %v651 = vsub.s32 0, %v650
      %v652 = vrot.slane %v647, %v651
      %v654 = vmul.f32 %v571, %v652
      %v655 = vmul.f32 %v572, %v652
      %v656 = vmul.f32 %v573, %v652
      %v657 = vmul.f32 %v574, %v652
      %v658 = vmul.f32 %v575, %v652
      %v659 = vmul.f32 %v576, %v652
      %v660 = vmul.f32 %v577, %v652
      %v661 = vmul.f32 %v578, %v652
      %v662 = vmul.f32 %v579, %v652
      %v663 = vmul.f32 %v580, %v652
      %v664 = vmul.f32 %v581, %v652
      %v665 = vmul.f32 %v582, %v652
      %v666 = vmul.f32 %v583, %v652
      %v667 = vmul.f32 %v584, %v652
      %v668 = vmul.f32 %v585, %v652
      %v669 = vmul.f32 %v586, %v652
      %v670 = vmul.f32 %v587, %v652
      %v671 = vmul.f32 %v588, %v652
      %v672 = vmul.f32 %v589, %v652
      %v673 = vmul.f32 %v590, %v652
      %v674 = vmul.f32 %v591, %v652
      %v675 = vmul.f32 %v592, %v652
      %v676 = vmul.f32 %v593, %v652
      %v677 = vmul.f32 %v594, %v652
      %v678 = vmul.f32 %v595, %v652
      %v679 = vmul.f32 %v596, %v652
      %v680 = vmul.f32 %v597, %v652
      %v681 = vmul.f32 %v598, %v652
      %v682 = vmul.f32 %v599, %v652
      %v683 = vmul.f32 %v600, %v652
      %v684 = vmul.f32 %v601, %v652
      %v685 = vmul.f32 %v602, %v652
      %v686 = vmul.f32 %v603, %v652
      %v687 = vmul.f32 %v604, %v652
      %v688 = vmul.f32 %v605, %v652
      %v689 = vmul.f32 %v606, %v652
      %v690 = vmul.f32 %v607, %v652
      %v691 = vmul.f32 %v608, %v652
      %v692 = vmul.f32 %v609, %v652
      %v693 = vmul.f32 %v610, %v652
      %v694 = vmul.f32 %v611, %v652
      %v695 = vmul.f32 %v612, %v652
      %v696 = vmul.f32 %v613, %v652
      %v697 = vmul.f32 %v614, %v652
      %v698 = vmul.f32 %v615, %v652
      %v699 = vmul.f32 %v616, %v652
      %v700 = vmul.f32 %v617, %v652
      %v701 = vmul.f32 %v618, %v652
      %v702 = vmul.f32 %v619, %v652
      %v703 = vmul.f32 %v620, %v652
      %v704 = vmul.f32 %v621, %v652
      %v705 = vmul.f32 %v622, %v652
      %v706 = vmul.f32 %v623, %v652
      %v707 = vmul.f32 %v624, %v652
      %v708 = vmul.f32 %v625, %v652
      %v709 = vmul.f32 %v626, %v652
      %v710 = vmul.f32 %v627, %v652
      %v711 = vmul.f32 %v628, %v652
      %v712 = vmul.f32 %v629, %v652
      %v713 = vmul.f32 %v630, %v652
      %v714 = vmul.f32 %v631, %v652
      %v715 = vmul.f32 %v632, %v652
      %v716 = vmul.f32 %v633, %v652
      %v717 = vmul.f32 %v634, %v652
      %v718 = vmul.f32 %v635, %v652
      %v719 = vmul.f32 %v636, %v652
      %v720 = vmul.f32 %v637, %v652
      %v721 = vmul.f32 %v638, %v652
      %v722 = vmul.f32 %v639, %v652
      %v723 = vmul.f32 %v640, %v652
      %v724 = vmul.f32 %v641, %v652
      %v725 = vmul.f32 %v642, %v652
      %v726 = vmul.f32 %v643, %v652
      %v727 = vmul.f32 %v644, %v652
      %v728 = vmul.f32 %v645, %v652
      %v729 = vmul.f32 %v646, %v652
      %v730 = vld [vmem:[%s4] sm:$0x1]
      %v732 = vlaneseq
      %v733 = vshrl.u32 %v732, 7
      %v734 = vsub.s32 0, %v733
      %v735 = vrot.slane %v730, %v734
      %v737 = vadd.f32 %v654, %v735
      %v738 = vadd.f32 %v655, %v735
      %v739 = vadd.f32 %v656, %v735
      %v740 = vadd.f32 %v657, %v735
      %v741 = vadd.f32 %v658, %v735
      %v742 = vadd.f32 %v659, %v735
      %v743 = vadd.f32 %v660, %v735
      %v744 = vadd.f32 %v661, %v735
      %v745 = vadd.f32 %v662, %v735
      %v746 = vadd.f32 %v663, %v735
      %v747 = vadd.f32 %v664, %v735
      %v748 = vadd.f32 %v665, %v735
      %v749 = vadd.f32 %v666, %v735
      %v750 = vadd.f32 %v667, %v735
      %v751 = vadd.f32 %v668, %v735
      %v752 = vadd.f32 %v669, %v735
      %v753 = vadd.f32 %v670, %v735
      %v754 = vadd.f32 %v671, %v735
      %v755 = vadd.f32 %v672, %v735
      %v756 = vadd.f32 %v673, %v735
      %v757 = vadd.f32 %v674, %v735
      %v758 = vadd.f32 %v675, %v735
      %v759 = vadd.f32 %v676, %v735
      %v760 = vadd.f32 %v677, %v735
      %v761 = vadd.f32 %v678, %v735
      %v762 = vadd.f32 %v679, %v735
      %v763 = vadd.f32 %v680, %v735
      %v764 = vadd.f32 %v681, %v735
      %v765 = vadd.f32 %v682, %v735
      %v766 = vadd.f32 %v683, %v735
      %v767 = vadd.f32 %v684, %v735
      %v768 = vadd.f32 %v685, %v735
      %v769 = vadd.f32 %v686, %v735
      %v770 = vadd.f32 %v687, %v735
      %v771 = vadd.f32 %v688, %v735
      %v772 = vadd.f32 %v689, %v735
      %v773 = vadd.f32 %v690, %v735
      %v774 = vadd.f32 %v691, %v735
      %v775 = vadd.f32 %v692, %v735
      %v776 = vadd.f32 %v693, %v735
      %v777 = vadd.f32 %v694, %v735
      %v778 = vadd.f32 %v695, %v735
      %v779 = vadd.f32 %v696, %v735
      %v780 = vadd.f32 %v697, %v735
      %v781 = vadd.f32 %v698, %v735
      %v782 = vadd.f32 %v699, %v735
      %v783 = vadd.f32 %v700, %v735
      %v784 = vadd.f32 %v701, %v735
      %v785 = vadd.f32 %v702, %v735
      %v786 = vadd.f32 %v703, %v735
      %v787 = vadd.f32 %v704, %v735
      %v788 = vadd.f32 %v705, %v735
      %v789 = vadd.f32 %v706, %v735
      %v790 = vadd.f32 %v707, %v735
      %v791 = vadd.f32 %v708, %v735
      %v792 = vadd.f32 %v709, %v735
      %v793 = vadd.f32 %v710, %v735
      %v794 = vadd.f32 %v711, %v735
      %v795 = vadd.f32 %v712, %v735
      %v796 = vadd.f32 %v713, %v735
      %v797 = vadd.f32 %v714, %v735
      %v798 = vadd.f32 %v715, %v735
      %v799 = vadd.f32 %v716, %v735
      %v800 = vadd.f32 %v717, %v735
      %v801 = vadd.f32 %v718, %v735
      %v802 = vadd.f32 %v719, %v735
      %v803 = vadd.f32 %v720, %v735
      %v804 = vadd.f32 %v721, %v735
      %v805 = vadd.f32 %v722, %v735
      %v806 = vadd.f32 %v723, %v735
      %v807 = vadd.f32 %v724, %v735
      %v808 = vadd.f32 %v725, %v735
      %v809 = vadd.f32 %v726, %v735
      %v810 = vadd.f32 %v727, %v735
      %v811 = vadd.f32 %v728, %v735
      %v812 = vadd.f32 %v729, %v735
      %v813 = vld [vmem:[%s394] sm:$0xf]
      %v814 = vld [vmem:[%s394 + $0x4] sm:$0xf]
      %v815 = vld [vmem:[%s394 + $0x8] sm:$0xf]
      %v816 = vld [vmem:[%s394 + $0xc] sm:$0xf]
      %v817 = vld [vmem:[%s394 + $0x10] sm:$0xf]
      %v818 = vld [vmem:[%s394 + $0x14] sm:$0xf]
      %v819 = vld [vmem:[%s394 + $0x18] sm:$0xf]
      %v820 = vld [vmem:[%s394 + $0x1c] sm:$0xf]
      %v821 = vld [vmem:[%s394 + $0x20] sm:$0xf]
      %v822 = vld [vmem:[%s394 + $0x24] sm:$0xf]
      %v823 = vld [vmem:[%s394 + $0x28] sm:$0xf]
      %v824 = vld [vmem:[%s394 + $0x2c] sm:$0xf]
      %v825 = vld [vmem:[%s394 + $0x30] sm:$0xf]
      %v826 = vld [vmem:[%s394 + $0x34] sm:$0xf]
      %v827 = vld [vmem:[%s394 + $0x38] sm:$0xf]
      %v828 = vld [vmem:[%s394 + $0x3c] sm:$0xf]
      %v829 = vld [vmem:[%s394 + $0x40] sm:$0xf]
      %v830 = vld [vmem:[%s394 + $0x44] sm:$0xf]
      %v831 = vld [vmem:[%s394 + $0x48] sm:$0xf]
      %v832 = vld [vmem:[%s394 + $0x4c] sm:$0xf]
      %v833 = vld [vmem:[%s394 + $0x50] sm:$0xf]
      %v834 = vld [vmem:[%s394 + $0x54] sm:$0xf]
      %v835 = vld [vmem:[%s394 + $0x58] sm:$0xf]
      %v836 = vld [vmem:[%s394 + $0x5c] sm:$0xf]
      %v837 = vld [vmem:[%s394 + $0x60] sm:$0xf]
      %v838 = vld [vmem:[%s394 + $0x64] sm:$0xf]
      %v839 = vld [vmem:[%s394 + $0x68] sm:$0xf]
      %v840 = vld [vmem:[%s394 + $0x6c] sm:$0xf]
      %v841 = vld [vmem:[%s394 + $0x70] sm:$0xf]
      %v842 = vld [vmem:[%s394 + $0x74] sm:$0xf]
      %v843 = vld [vmem:[%s394 + $0x78] sm:$0xf]
      %v844 = vld [vmem:[%s394 + $0x7c] sm:$0xf]
      %v845 = vld [vmem:[%s394 + $0x80] sm:$0xf]
      %v846 = vld [vmem:[%s394 + $0x84] sm:$0xf]
      %v847 = vld [vmem:[%s394 + $0x88] sm:$0xf]
      %v848 = vld [vmem:[%s394 + $0x8c] sm:$0xf]
      %v849 = vld [vmem:[%s394 + $0x90] sm:$0xf]
      %v850 = vld [vmem:[%s394 + $0x94] sm:$0xf]
      %v851 = vld [vmem:[%s394 + $0x98] sm:$0xf]
      %v852 = vld [vmem:[%s394 + $0x9c] sm:$0xf]
      %v853 = vld [vmem:[%s394 + $0xa0] sm:$0xf]
      %v854 = vld [vmem:[%s394 + $0xa4] sm:$0xf]
      %v855 = vld [vmem:[%s394 + $0xa8] sm:$0xf]
      %v856 = vld [vmem:[%s394 + $0xac] sm:$0xf]
      %v857 = vld [vmem:[%s394 + $0xb0] sm:$0xf]
      %v858 = vld [vmem:[%s394 + $0xb4] sm:$0xf]
      %v859 = vld [vmem:[%s394 + $0xb8] sm:$0xf]
      %v860 = vld [vmem:[%s394 + $0xbc] sm:$0xf]
      %v861 = vld [vmem:[%s394 + $0xc0] sm:$0xf]
      %v862 = vld [vmem:[%s394 + $0xc4] sm:$0xf]
      %v863 = vld [vmem:[%s394 + $0xc8] sm:$0xf]
      %v864 = vld [vmem:[%s394 + $0xcc] sm:$0xf]
      %v865 = vld [vmem:[%s394 + $0xd0] sm:$0xf]
      %v866 = vld [vmem:[%s394 + $0xd4] sm:$0xf]
      %v867 = vld [vmem:[%s394 + $0xd8] sm:$0xf]
      %v868 = vld [vmem:[%s394 + $0xdc] sm:$0xf]
      %v869 = vld [vmem:[%s394 + $0xe0] sm:$0xf]
      %v870 = vld [vmem:[%s394 + $0xe4] sm:$0xf]
      %v871 = vld [vmem:[%s394 + $0xe8] sm:$0xf]
      %v872 = vld [vmem:[%s394 + $0xec] sm:$0xf]
      %v873 = vld [vmem:[%s394 + $0xf0] sm:$0xf]
      %v874 = vld [vmem:[%s394 + $0xf4] sm:$0xf]
      %v875 = vld [vmem:[%s394 + $0xf8] sm:$0xf]
      %v876 = vld [vmem:[%s394 + $0xfc] sm:$0xf]
      %v877 = vld [vmem:[%s394 + $0x100] sm:$0xf]
      %v878 = vld [vmem:[%s394 + $0x104] sm:$0xf]
      %v879 = vld [vmem:[%s394 + $0x108] sm:$0xf]
      %v880 = vld [vmem:[%s394 + $0x10c] sm:$0xf]
      %v881 = vld [vmem:[%s394 + $0x110] sm:$0xf]
      %v882 = vld [vmem:[%s394 + $0x114] sm:$0xf]
      %v883 = vld [vmem:[%s394 + $0x118] sm:$0xf]
      %v884 = vld [vmem:[%s394 + $0x11c] sm:$0xf]
      %v885 = vld [vmem:[%s394 + $0x120] sm:$0xf]
      %v886 = vld [vmem:[%s394 + $0x124] sm:$0xf]
      %v887 = vld [vmem:[%s394 + $0x128] sm:$0xf]
      %v888 = vld [vmem:[%s394 + $0x12c] sm:$0xf]
      %v889 = vunpack.c.l.bf16 %v813
      %v890 = vunpack.c.l.bf16 %v814
      %v891 = vunpack.c.l.bf16 %v815
      %v892 = vunpack.c.l.bf16 %v816
      %v893 = vunpack.c.l.bf16 %v817
      %v894 = vunpack.c.l.bf16 %v818
      %v895 = vunpack.c.l.bf16 %v819
      %v896 = vunpack.c.l.bf16 %v820
      %v897 = vunpack.c.l.bf16 %v821
      %v898 = vunpack.c.l.bf16 %v822
      %v899 = vunpack.c.l.bf16 %v823
      %v900 = vunpack.c.l.bf16 %v824
      %v901 = vunpack.c.l.bf16 %v825
      %v902 = vunpack.c.l.bf16 %v826
      %v903 = vunpack.c.l.bf16 %v827
      %v904 = vunpack.c.l.bf16 %v828
      %v905 = vunpack.c.l.bf16 %v829
      %v906 = vunpack.c.l.bf16 %v830
      %v907 = vunpack.c.l.bf16 %v831
      %v908 = vunpack.c.l.bf16 %v832
      %v909 = vunpack.c.l.bf16 %v833
      %v910 = vunpack.c.l.bf16 %v834
      %v911 = vunpack.c.l.bf16 %v835
      %v912 = vunpack.c.l.bf16 %v836
      %v913 = vunpack.c.l.bf16 %v837
      %v914 = vunpack.c.l.bf16 %v838
      %v915 = vunpack.c.l.bf16 %v839
      %v916 = vunpack.c.l.bf16 %v840
      %v917 = vunpack.c.l.bf16 %v841
      %v918 = vunpack.c.l.bf16 %v842
      %v919 = vunpack.c.l.bf16 %v843
      %v920 = vunpack.c.l.bf16 %v844
      %v921 = vunpack.c.l.bf16 %v845
      %v922 = vunpack.c.l.bf16 %v846
      %v923 = vunpack.c.l.bf16 %v847
      %v924 = vunpack.c.l.bf16 %v848
      %v925 = vunpack.c.l.bf16 %v849
      %v926 = vunpack.c.l.bf16 %v850
      %v927 = vunpack.c.l.bf16 %v851
      %v928 = vunpack.c.l.bf16 %v852
      %v929 = vunpack.c.l.bf16 %v853
      %v930 = vunpack.c.l.bf16 %v854
      %v931 = vunpack.c.l.bf16 %v855
      %v932 = vunpack.c.l.bf16 %v856
      %v933 = vunpack.c.l.bf16 %v857
      %v934 = vunpack.c.l.bf16 %v858
      %v935 = vunpack.c.l.bf16 %v859
      %v936 = vunpack.c.l.bf16 %v860
      %v937 = vunpack.c.l.bf16 %v861
      %v938 = vunpack.c.l.bf16 %v862
      %v939 = vunpack.c.l.bf16 %v863
      %v940 = vunpack.c.l.bf16 %v864
      %v941 = vunpack.c.l.bf16 %v865
      %v942 = vunpack.c.l.bf16 %v866
      %v943 = vunpack.c.l.bf16 %v867
      %v944 = vunpack.c.l.bf16 %v868
      %v945 = vunpack.c.l.bf16 %v869
      %v946 = vunpack.c.l.bf16 %v870
      %v947 = vunpack.c.l.bf16 %v871
      %v948 = vunpack.c.l.bf16 %v872
      %v949 = vunpack.c.l.bf16 %v873
      %v950 = vunpack.c.l.bf16 %v874
      %v951 = vunpack.c.l.bf16 %v875
      %v952 = vunpack.c.l.bf16 %v876
      %v953 = vunpack.c.l.bf16 %v877
      %v954 = vunpack.c.l.bf16 %v878
      %v955 = vunpack.c.l.bf16 %v879
      %v956 = vunpack.c.l.bf16 %v880
      %v957 = vunpack.c.l.bf16 %v881
      %v958 = vunpack.c.l.bf16 %v882
      %v959 = vunpack.c.l.bf16 %v883
      %v960 = vunpack.c.l.bf16 %v884
      %v961 = vunpack.c.l.bf16 %v885
      %v962 = vunpack.c.l.bf16 %v886
      %v963 = vunpack.c.l.bf16 %v887
      %v964 = vunpack.c.l.bf16 %v888
      %v965 = vld [vmem:[%s5] sm:$0x1]
      %v967 = vlaneseq
      %v968 = vshrl.u32 %v967, 7
      %v969 = vsub.s32 0, %v968
      %v970 = vrot.slane %v965, %v969
      %v972 = vmul.f32 %v889, %v970
      %v973 = vmul.f32 %v890, %v970
      %v974 = vmul.f32 %v891, %v970
      %v975 = vmul.f32 %v892, %v970
      %v976 = vmul.f32 %v893, %v970
      %v977 = vmul.f32 %v894, %v970
      %v978 = vmul.f32 %v895, %v970
      %v979 = vmul.f32 %v896, %v970
      %v980 = vmul.f32 %v897, %v970
      %v981 = vmul.f32 %v898, %v970
      %v982 = vmul.f32 %v899, %v970
      %v983 = vmul.f32 %v900, %v970
      %v984 = vmul.f32 %v901, %v970
      %v985 = vmul.f32 %v902, %v970
      %v986 = vmul.f32 %v903, %v970
      %v987 = vmul.f32 %v904, %v970
      %v988 = vmul.f32 %v905, %v970
      %v989 = vmul.f32 %v906, %v970
      %v990 = vmul.f32 %v907, %v970
      %v991 = vmul.f32 %v908, %v970
      %v992 = vmul.f32 %v909, %v970
      %v993 = vmul.f32 %v910, %v970
      %v994 = vmul.f32 %v911, %v970
      %v995 = vmul.f32 %v912, %v970
      %v996 = vmul.f32 %v913, %v970
      %v997 = vmul.f32 %v914, %v970
      %v998 = vmul.f32 %v915, %v970
      %v999 = vmul.f32 %v916, %v970
      %v1000 = vmul.f32 %v917, %v970
      %v1001 = vmul.f32 %v918, %v970
      %v1002 = vmul.f32 %v919, %v970
      %v1003 = vmul.f32 %v920, %v970
      %v1004 = vmul.f32 %v921, %v970
      %v1005 = vmul.f32 %v922, %v970
      %v1006 = vmul.f32 %v923, %v970
      %v1007 = vmul.f32 %v924, %v970
      %v1008 = vmul.f32 %v925, %v970
      %v1009 = vmul.f32 %v926, %v970
      %v1010 = vmul.f32 %v927, %v970
      %v1011 = vmul.f32 %v928, %v970
      %v1012 = vmul.f32 %v929, %v970
      %v1013 = vmul.f32 %v930, %v970
      %v1014 = vmul.f32 %v931, %v970
      %v1015 = vmul.f32 %v932, %v970
      %v1016 = vmul.f32 %v933, %v970
      %v1017 = vmul.f32 %v934, %v970
      %v1018 = vmul.f32 %v935, %v970
      %v1019 = vmul.f32 %v936, %v970
      %v1020 = vmul.f32 %v937, %v970
      %v1021 = vmul.f32 %v938, %v970
      %v1022 = vmul.f32 %v939, %v970
      %v1023 = vmul.f32 %v940, %v970
      %v1024 = vmul.f32 %v941, %v970
      %v1025 = vmul.f32 %v942, %v970
      %v1026 = vmul.f32 %v943, %v970
      %v1027 = vmul.f32 %v944, %v970
      %v1028 = vmul.f32 %v945, %v970
      %v1029 = vmul.f32 %v946, %v970
      %v1030 = vmul.f32 %v947, %v970
      %v1031 = vmul.f32 %v948, %v970
      %v1032 = vmul.f32 %v949, %v970
      %v1033 = vmul.f32 %v950, %v970
      %v1034 = vmul.f32 %v951, %v970
      %v1035 = vmul.f32 %v952, %v970
      %v1036 = vmul.f32 %v953, %v970
      %v1037 = vmul.f32 %v954, %v970
      %v1038 = vmul.f32 %v955, %v970
      %v1039 = vmul.f32 %v956, %v970
      %v1040 = vmul.f32 %v957, %v970
      %v1041 = vmul.f32 %v958, %v970
      %v1042 = vmul.f32 %v959, %v970
      %v1043 = vmul.f32 %v960, %v970
      %v1044 = vmul.f32 %v961, %v970
      %v1045 = vmul.f32 %v962, %v970
      %v1046 = vmul.f32 %v963, %v970
      %v1047 = vmul.f32 %v964, %v970
      %v1048 = vld [vmem:[%s6] sm:$0x1]
      %v1050 = vlaneseq
      %v1051 = vshrl.u32 %v1050, 7
      %v1052 = vsub.s32 0, %v1051
      %v1053 = vrot.slane %v1048, %v1052
      %v1055 = vadd.f32 %v972, %v1053
      %v1056 = vadd.f32 %v973, %v1053
      %v1057 = vadd.f32 %v974, %v1053
      %v1058 = vadd.f32 %v975, %v1053
      %v1059 = vadd.f32 %v976, %v1053
      %v1060 = vadd.f32 %v977, %v1053
      %v1061 = vadd.f32 %v978, %v1053
      %v1062 = vadd.f32 %v979, %v1053
      %v1063 = vadd.f32 %v980, %v1053
      %v1064 = vadd.f32 %v981, %v1053
      %v1065 = vadd.f32 %v982, %v1053
      %v1066 = vadd.f32 %v983, %v1053
      %v1067 = vadd.f32 %v984, %v1053
      %v1068 = vadd.f32 %v985, %v1053
      %v1069 = vadd.f32 %v986, %v1053
      %v1070 = vadd.f32 %v987, %v1053
      %v1071 = vadd.f32 %v988, %v1053
      %v1072 = vadd.f32 %v989, %v1053
      %v1073 = vadd.f32 %v990, %v1053
      %v1074 = vadd.f32 %v991, %v1053
      %v1075 = vadd.f32 %v992, %v1053
      %v1076 = vadd.f32 %v993, %v1053
      %v1077 = vadd.f32 %v994, %v1053
      %v1078 = vadd.f32 %v995, %v1053
      %v1079 = vadd.f32 %v996, %v1053
      %v1080 = vadd.f32 %v997, %v1053
      %v1081 = vadd.f32 %v998, %v1053
      %v1082 = vadd.f32 %v999, %v1053
      %v1083 = vadd.f32 %v1000, %v1053
      %v1084 = vadd.f32 %v1001, %v1053
      %v1085 = vadd.f32 %v1002, %v1053
      %v1086 = vadd.f32 %v1003, %v1053
      %v1087 = vadd.f32 %v1004, %v1053
      %v1088 = vadd.f32 %v1005, %v1053
      %v1089 = vadd.f32 %v1006, %v1053
      %v1090 = vadd.f32 %v1007, %v1053
      %v1091 = vadd.f32 %v1008, %v1053
      %v1092 = vadd.f32 %v1009, %v1053
      %v1093 = vadd.f32 %v1010, %v1053
      %v1094 = vadd.f32 %v1011, %v1053
      %v1095 = vadd.f32 %v1012, %v1053
      %v1096 = vadd.f32 %v1013, %v1053
      %v1097 = vadd.f32 %v1014, %v1053
      %v1098 = vadd.f32 %v1015, %v1053
      %v1099 = vadd.f32 %v1016, %v1053
      %v1100 = vadd.f32 %v1017, %v1053
      %v1101 = vadd.f32 %v1018, %v1053
      %v1102 = vadd.f32 %v1019, %v1053
      %v1103 = vadd.f32 %v1020, %v1053
      %v1104 = vadd.f32 %v1021, %v1053
      %v1105 = vadd.f32 %v1022, %v1053
      %v1106 = vadd.f32 %v1023, %v1053
      %v1107 = vadd.f32 %v1024, %v1053
      %v1108 = vadd.f32 %v1025, %v1053
      %v1109 = vadd.f32 %v1026, %v1053
      %v1110 = vadd.f32 %v1027, %v1053
      %v1111 = vadd.f32 %v1028, %v1053
      %v1112 = vadd.f32 %v1029, %v1053
      %v1113 = vadd.f32 %v1030, %v1053
      %v1114 = vadd.f32 %v1031, %v1053
      %v1115 = vadd.f32 %v1032, %v1053
      %v1116 = vadd.f32 %v1033, %v1053
      %v1117 = vadd.f32 %v1034, %v1053
      %v1118 = vadd.f32 %v1035, %v1053
      %v1119 = vadd.f32 %v1036, %v1053
      %v1120 = vadd.f32 %v1037, %v1053
      %v1121 = vadd.f32 %v1038, %v1053
      %v1122 = vadd.f32 %v1039, %v1053
      %v1123 = vadd.f32 %v1040, %v1053
      %v1124 = vadd.f32 %v1041, %v1053
      %v1125 = vadd.f32 %v1042, %v1053
      %v1126 = vadd.f32 %v1043, %v1053
      %v1127 = vadd.f32 %v1044, %v1053
      %v1128 = vadd.f32 %v1045, %v1053
      %v1129 = vadd.f32 %v1046, %v1053
      %v1130 = vadd.f32 %v1047, %v1053
      %v1131 = vadd.f32 %v1055, %v737
      %v1132 = vadd.f32 %v1056, %v738
      %v1133 = vadd.f32 %v1057, %v739
      %v1134 = vadd.f32 %v1058, %v740
      %v1135 = vadd.f32 %v1059, %v741
      %v1136 = vadd.f32 %v1060, %v742
      %v1137 = vadd.f32 %v1061, %v743
      %v1138 = vadd.f32 %v1062, %v744
      %v1139 = vadd.f32 %v1063, %v745
      %v1140 = vadd.f32 %v1064, %v746
      %v1141 = vadd.f32 %v1065, %v747
      %v1142 = vadd.f32 %v1066, %v748
      %v1143 = vadd.f32 %v1067, %v749
      %v1144 = vadd.f32 %v1068, %v750
      %v1145 = vadd.f32 %v1069, %v751
      %v1146 = vadd.f32 %v1070, %v752
      %v1147 = vadd.f32 %v1071, %v753
      %v1148 = vadd.f32 %v1072, %v754
      %v1149 = vadd.f32 %v1073, %v755
      %v1150 = vadd.f32 %v1074, %v756
      %v1151 = vadd.f32 %v1075, %v757
      %v1152 = vadd.f32 %v1076, %v758
      %v1153 = vadd.f32 %v1077, %v759
      %v1154 = vadd.f32 %v1078, %v760
      %v1155 = vadd.f32 %v1079, %v761
      %v1156 = vadd.f32 %v1080, %v762
      %v1157 = vadd.f32 %v1081, %v763
      %v1158 = vadd.f32 %v1082, %v764
      %v1159 = vadd.f32 %v1083, %v765
      %v1160 = vadd.f32 %v1084, %v766
      %v1161 = vadd.f32 %v1085, %v767
      %v1162 = vadd.f32 %v1086, %v768
      %v1163 = vadd.f32 %v1087, %v769
      %v1164 = vadd.f32 %v1088, %v770
      %v1165 = vadd.f32 %v1089, %v771
      %v1166 = vadd.f32 %v1090, %v772
      %v1167 = vadd.f32 %v1091, %v773
      %v1168 = vadd.f32 %v1092, %v774
      %v1169 = vadd.f32 %v1093, %v775
      %v1170 = vadd.f32 %v1094, %v776
      %v1171 = vadd.f32 %v1095, %v777
      %v1172 = vadd.f32 %v1096, %v778
      %v1173 = vadd.f32 %v1097, %v779
      %v1174 = vadd.f32 %v1098, %v780
      %v1175 = vadd.f32 %v1099, %v781
      %v1176 = vadd.f32 %v1100, %v782
      %v1177 = vadd.f32 %v1101, %v783
      %v1178 = vadd.f32 %v1102, %v784
      %v1179 = vadd.f32 %v1103, %v785
      %v1180 = vadd.f32 %v1104, %v786
      %v1181 = vadd.f32 %v1105, %v787
      %v1182 = vadd.f32 %v1106, %v788
      %v1183 = vadd.f32 %v1107, %v789
      %v1184 = vadd.f32 %v1108, %v790
      %v1185 = vadd.f32 %v1109, %v791
      %v1186 = vadd.f32 %v1110, %v792
      %v1187 = vadd.f32 %v1111, %v793
      %v1188 = vadd.f32 %v1112, %v794
      %v1189 = vadd.f32 %v1113, %v795
      %v1190 = vadd.f32 %v1114, %v796
      %v1191 = vadd.f32 %v1115, %v797
      %v1192 = vadd.f32 %v1116, %v798
      %v1193 = vadd.f32 %v1117, %v799
      %v1194 = vadd.f32 %v1118, %v800
      %v1195 = vadd.f32 %v1119, %v801
      %v1196 = vadd.f32 %v1120, %v802
      %v1197 = vadd.f32 %v1121, %v803
      %v1198 = vadd.f32 %v1122, %v804
      %v1199 = vadd.f32 %v1123, %v805
      %v1200 = vadd.f32 %v1124, %v806
      %v1201 = vadd.f32 %v1125, %v807
      %v1202 = vadd.f32 %v1126, %v808
      %v1203 = vadd.f32 %v1127, %v809
      %v1204 = vadd.f32 %v1128, %v810
      %v1205 = vadd.f32 %v1129, %v811
      %v1206 = vadd.f32 %v1130, %v812
      %v1207 = vpack.c.bf16 %v1132, %v1131
      %v1208 = vpack.c.bf16 %v1134, %v1133
      %v1209 = vpack.c.bf16 %v1136, %v1135
      %v1210 = vpack.c.bf16 %v1138, %v1137
      %v1211 = vpack.c.bf16 %v1140, %v1139
      %v1212 = vpack.c.bf16 %v1142, %v1141
      %v1213 = vpack.c.bf16 %v1144, %v1143
      %v1214 = vpack.c.bf16 %v1146, %v1145
      %v1215 = vpack.c.bf16 %v1148, %v1147
      %v1216 = vpack.c.bf16 %v1150, %v1149
      %v1217 = vpack.c.bf16 %v1152, %v1151
      %v1218 = vpack.c.bf16 %v1154, %v1153
      %v1219 = vpack.c.bf16 %v1156, %v1155
      %v1220 = vpack.c.bf16 %v1158, %v1157
      %v1221 = vpack.c.bf16 %v1160, %v1159
      %v1222 = vpack.c.bf16 %v1162, %v1161
      %v1223 = vpack.c.bf16 %v1164, %v1163
      %v1224 = vpack.c.bf16 %v1166, %v1165
      %v1225 = vpack.c.bf16 %v1168, %v1167
      %v1226 = vpack.c.bf16 %v1170, %v1169
      %v1227 = vpack.c.bf16 %v1172, %v1171
      %v1228 = vpack.c.bf16 %v1174, %v1173
      %v1229 = vpack.c.bf16 %v1176, %v1175
      %v1230 = vpack.c.bf16 %v1178, %v1177
      %v1231 = vpack.c.bf16 %v1180, %v1179
      %v1232 = vpack.c.bf16 %v1182, %v1181
      %v1233 = vpack.c.bf16 %v1184, %v1183
      %v1234 = vpack.c.bf16 %v1186, %v1185
      %v1235 = vpack.c.bf16 %v1188, %v1187
      %v1236 = vpack.c.bf16 %v1190, %v1189
      %v1237 = vpack.c.bf16 %v1192, %v1191
      %v1238 = vpack.c.bf16 %v1194, %v1193
      %v1239 = vpack.c.bf16 %v1196, %v1195
      %v1240 = vpack.c.bf16 %v1198, %v1197
      %v1241 = vpack.c.bf16 %v1200, %v1199
      %v1242 = vpack.c.bf16 %v1202, %v1201
      %v1243 = vpack.c.bf16 %v1204, %v1203
      %v1244 = vpack.c.bf16 %v1206, %v1205
      %v1245 = vld [vmem:[%s7] sm:$0xf]
      %v1246 = vld [vmem:[%s7 + $0x4] sm:$0xf]
      %v1247 = vld [vmem:[%s7 + $0x8] sm:$0xf]
      %v1248 = vld [vmem:[%s7 + $0xc] sm:$0xf]
      %v1249 = vld [vmem:[%s8] sm:$0x1]
      %v1251 = vlaneseq
      %v1252 = vshrl.u32 %v1251, 7
      %v1253 = vsub.s32 0, %v1252
      %v1254 = vrot.slane %v1249, %v1253
      %v1260 = vunpack.c.l.b16 %v1245
      %v1261 = vunpack.c.l.b16 %v1246
      %v1262 = vunpack.c.l.b16 %v1247
      %v1263 = vunpack.c.l.b16 %v1248
      %v1264 = vpack.c.b16 %v1261, %v1260
      %v1265 = vpack.c.b16 %v1263, %v1262
      %vm1268 = vcmask 261120
      %v1270 = vsel %vm1268, %v1207, 0
      %v1273 = vsel %vm1268, %v1208, 0
      %v1276 = vsel %vm1268, %v1209, 0
      %v1279 = vsel %vm1268, %v1210, 0
      %v1282 = vsel %vm1268, %v1211, 0
      %v1285 = vsel %vm1268, %v1212, 0
      %v1288 = vsel %vm1268, %v1213, 0
      %v1291 = vsel %vm1268, %v1214, 0
      %v1294 = vsel %vm1268, %v1215, 0
      %v1297 = vsel %vm1268, %v1216, 0
      %v1300 = vsel %vm1268, %v1217, 0
      %v1303 = vsel %vm1268, %v1218, 0
      %v1306 = vsel %vm1268, %v1219, 0
      %v1309 = vsel %vm1268, %v1220, 0
      %v1312 = vsel %vm1268, %v1221, 0
      %v1315 = vsel %vm1268, %v1222, 0
      %v1318 = vsel %vm1268, %v1223, 0
      %v1321 = vsel %vm1268, %v1224, 0
      %v1324 = vsel %vm1268, %v1225, 0
      %v1327 = vsel %vm1268, %v1226, 0
      %v1330 = vsel %vm1268, %v1227, 0
      %v1333 = vsel %vm1268, %v1228, 0
      %v1336 = vsel %vm1268, %v1229, 0
      %v1339 = vsel %vm1268, %v1230, 0
      %v1342 = vsel %vm1268, %v1231, 0
      %v1345 = vsel %vm1268, %v1232, 0
      %v1348 = vsel %vm1268, %v1233, 0
      %v1351 = vsel %vm1268, %v1234, 0
      %v1354 = vsel %vm1268, %v1235, 0
      %v1357 = vsel %vm1268, %v1236, 0
      %v1360 = vsel %vm1268, %v1237, 0
      %v1363 = vsel %vm1268, %v1238, 0
      %v1366 = vsel %vm1268, %v1239, 0
      %v1369 = vsel %vm1268, %v1240, 0
      %v1372 = vsel %vm1268, %v1241, 0
      %v1375 = vsel %vm1268, %v1242, 0
      %v1378 = vsel %vm1268, %v1243, 0
      %v1381 = vsel %vm1268, %v1244, 0
      %1383 = vmatprep.subr.bf16.mxu0 0
      %1384 = vmatpush1.bf16.msra.mxu0 %v1264
      %1385 = vmatprep.subr.bf16.mxu0 0
      %1386 = vmatpush1.bf16.msra.mxu0 %v1265
      %1387 = vmatprep.subr.bf16.mxu0 0
      %1388 = vmatpush1.bf16.msra.mxu0 0
      %1389 = vmatprep.subr.bf16.mxu0 0
      %1390 = vmatpush1.bf16.msra.mxu0 0
      %1391 = vmatprep.subr.bf16.mxu0 0
      %1392 = vmatpush1.bf16.msra.mxu0 0
      %1393 = vmatprep.subr.bf16.mxu0 0
      %1394 = vmatpush1.bf16.msra.mxu0 0
      %1395 = vmatprep.subr.bf16.mxu0 0
      %1396 = vmatpush1.bf16.msra.mxu0 0
      %1397 = vmatprep.subr.bf16.mxu0 0
      %1398 = vmatpush1.bf16.msra.mxu0 0
      %1399 = vmatprep.subr.bf16.mxu0 0
      %1400 = vmatpush1.bf16.msra.mxu0 0
      %1401 = vmatprep.subr.bf16.mxu0 0
      %1402 = vmatpush1.bf16.msra.mxu0 0
      %1403 = vmatprep.subr.bf16.mxu0 0
      %1404 = vmatpush1.bf16.msra.mxu0 0
      %1405 = vmatprep.subr.bf16.mxu0 0
      %1406 = vmatpush1.bf16.msra.mxu0 0
      %1407 = vmatprep.subr.bf16.mxu0 0
      %1408 = vmatpush1.bf16.msra.mxu0 0
      %1409 = vmatprep.subr.bf16.mxu0 0
      %1410 = vmatpush1.bf16.msra.mxu0 0
      %1411 = vmatprep.subr.bf16.mxu0 0
      %1412 = vmatpush1.bf16.msra.mxu0 0
      %1413 = vmatprep.subr.bf16.mxu0 0
      %1414 = vmatpush1.bf16.msra.mxu0 0
      %1415 = vmatprep.mubr.bf16.mxu0 0
      %1416 = vmatmul.mubr.bf16.gmra.mrb[0].mxu0 %v1270
      %v1417 = vpop.f32.mrb[0].mxu0
      %v1418 = vadd.f32 %v1254, %v1417
      %v1419 = vpop.f32.mrb[0].mxu0
      %v1420 = vpop.f32.mrb[0].mxu0
      %v1421 = vadd.f32 %v1254, %v1420
      %v1422 = vpop.f32.mrb[0].mxu0
      %1423 = vmatprep.mubr.bf16.mxu0 0
      %1424 = vmatmul.mubr.bf16.gmra.mrb[0].mxu0 %v1273
      %v1425 = vpop.f32.mrb[0].mxu0
      %v1426 = vadd.f32 %v1254, %v1425
      %v1427 = vpop.f32.mrb[0].mxu0
      %v1428 = vpop.f32.mrb[0].mxu0
      %v1429 = vadd.f32 %v1254, %v1428
      %v1430 = vpop.f32.mrb[0].mxu0
      %1431 = vmatprep.mubr.bf16.mxu0 0
      %1432 = vmatmul.mubr.bf16.gmra.mrb[0].mxu0 %v1276
      %v1433 = vpop.f32.mrb[0].mxu0
      %v1434 = vadd.f32 %v1254, %v1433
      %v1435 = vpop.f32.mrb[0].mxu0
      %v1436 = vpop.f32.mrb[0].mxu0
      %v1437 = vadd.f32 %v1254, %v1436
      %v1438 = vpop.f32.mrb[0].mxu0
      %1439 = vmatprep.mubr.bf16.mxu0 0
      %1440 = vmatmul.mubr.bf16.gmra.mrb[0].mxu0 %v1279
      %v1441 = vpop.f32.mrb[0].mxu0
      %v1442 = vadd.f32 %v1254, %v1441
      %v1443 = vpop.f32.mrb[0].mxu0
      %v1444 = vpop.f32.mrb[0].mxu0
      %v1445 = vadd.f32 %v1254, %v1444
      %v1446 = vpop.f32.mrb[0].mxu0
      %1447 = vmatprep.mubr.bf16.mxu0 0
      %1448 = vmatmul.mubr.bf16.gmra.mrb[0].mxu0 %v1282
      %v1449 = vpop.f32.mrb[0].mxu0
      %v1450 = vadd.f32 %v1254, %v1449
      %v1451 = vpop.f32.mrb[0].mxu0
      %v1452 = vpop.f32.mrb[0].mxu0
      %v1453 = vadd.f32 %v1254, %v1452
      %v1454 = vpop.f32.mrb[0].mxu0
      %1455 = vmatprep.mubr.bf16.mxu0 0
      %1456 = vmatmul.mubr.bf16.gmra.mrb[0].mxu0 %v1285
      %v1457 = vpop.f32.mrb[0].mxu0
      %v1458 = vadd.f32 %v1254, %v1457
      %v1459 = vpop.f32.mrb[0].mxu0
      %v1460 = vpop.f32.mrb[0].mxu0
      %v1461 = vadd.f32 %v1254, %v1460
      %v1462 = vpop.f32.mrb[0].mxu0
      %1463 = vmatprep.mubr.bf16.mxu0 0
      %1464 = vmatmul.mubr.bf16.gmra.mrb[0].mxu0 %v1288
      %v1465 = vpop.f32.mrb[0].mxu0
      %v1466 = vadd.f32 %v1254, %v1465
      %v1467 = vpop.f32.mrb[0].mxu0
      %v1468 = vpop.f32.mrb[0].mxu0
      %v1469 = vadd.f32 %v1254, %v1468
      %v1470 = vpop.f32.mrb[0].mxu0
      %1471 = vmatprep.mubr.bf16.mxu0 0
      %1472 = vmatmul.mubr.bf16.gmra.mrb[0].mxu0 %v1291
      %v1473 = vpop.f32.mrb[0].mxu0
      %v1474 = vadd.f32 %v1254, %v1473
      %v1475 = vpop.f32.mrb[0].mxu0
      %v1476 = vpop.f32.mrb[0].mxu0
      %v1477 = vadd.f32 %v1254, %v1476
      %v1478 = vpop.f32.mrb[0].mxu0
      %1479 = vmatprep.mubr.bf16.mxu0 0
      %1480 = vmatmul.mubr.bf16.gmra.mrb[0].mxu0 %v1294
      %v1481 = vpop.f32.mrb[0].mxu0
      %v1482 = vadd.f32 %v1254, %v1481
      %v1483 = vpop.f32.mrb[0].mxu0
      %v1484 = vpop.f32.mrb[0].mxu0
      %v1485 = vadd.f32 %v1254, %v1484
      %v1486 = vpop.f32.mrb[0].mxu0
      %1487 = vmatprep.mubr.bf16.mxu0 0
      %1488 = vmatmul.mubr.bf16.gmra.mrb[0].mxu0 %v1297
      %v1489 = vpop.f32.mrb[0].mxu0
      %v1490 = vadd.f32 %v1254, %v1489
      %v1491 = vpop.f32.mrb[0].mxu0
      %v1492 = vpop.f32.mrb[0].mxu0
      %v1493 = vadd.f32 %v1254, %v1492
      %v1494 = vpop.f32.mrb[0].mxu0
      %1495 = vmatprep.mubr.bf16.mxu0 0
      %1496 = vmatmul.mubr.bf16.gmra.mrb[0].mxu0 %v1300
      %v1497 = vpop.f32.mrb[0].mxu0
      %v1498 = vadd.f32 %v1254, %v1497
      %v1499 = vpop.f32.mrb[0].mxu0
      %v1500 = vpop.f32.mrb[0].mxu0
      %v1501 = vadd.f32 %v1254, %v1500
      %v1502 = vpop.f32.mrb[0].mxu0
      %1503 = vmatprep.mubr.bf16.mxu0 0
      %1504 = vmatmul.mubr.bf16.gmra.mrb[0].mxu0 %v1303
      %v1505 = vpop.f32.mrb[0].mxu0
      %v1506 = vadd.f32 %v1254, %v1505
      %v1507 = vpop.f32.mrb[0].mxu0
      %v1508 = vpop.f32.mrb[0].mxu0
      %v1509 = vadd.f32 %v1254, %v1508
      %v1510 = vpop.f32.mrb[0].mxu0
      %1511 = vmatprep.mubr.bf16.mxu0 0
      %1512 = vmatmul.mubr.bf16.gmra.mrb[0].mxu0 %v1306
      %v1513 = vpop.f32.mrb[0].mxu0
      %v1514 = vadd.f32 %v1254, %v1513
      %v1515 = vpop.f32.mrb[0].mxu0
      %v1516 = vpop.f32.mrb[0].mxu0
      %v1517 = vadd.f32 %v1254, %v1516
      %v1518 = vpop.f32.mrb[0].mxu0
      %1519 = vmatprep.mubr.bf16.mxu0 0
      %1520 = vmatmul.mubr.bf16.gmra.mrb[0].mxu0 %v1309
      %v1521 = vpop.f32.mrb[0].mxu0
      %v1522 = vadd.f32 %v1254, %v1521
      %v1523 = vpop.f32.mrb[0].mxu0
      %v1524 = vpop.f32.mrb[0].mxu0
      %v1525 = vadd.f32 %v1254, %v1524
      %v1526 = vpop.f32.mrb[0].mxu0
      %1527 = vmatprep.mubr.bf16.mxu0 0
      %1528 = vmatmul.mubr.bf16.gmra.mrb[0].mxu0 %v1312
      %v1529 = vpop.f32.mrb[0].mxu0
      %v1530 = vadd.f32 %v1254, %v1529
      %v1531 = vpop.f32.mrb[0].mxu0
      %v1532 = vpop.f32.mrb[0].mxu0
      %v1533 = vadd.f32 %v1254, %v1532
      %v1534 = vpop.f32.mrb[0].mxu0
      %1535 = vmatprep.mubr.bf16.mxu0 0
      %1536 = vmatmul.mubr.bf16.gmra.mrb[0].mxu0 %v1315
      %v1537 = vpop.f32.mrb[0].mxu0
      %v1538 = vadd.f32 %v1254, %v1537
      %v1539 = vpop.f32.mrb[0].mxu0
      %v1540 = vpop.f32.mrb[0].mxu0
      %v1541 = vadd.f32 %v1254, %v1540
      %v1542 = vpop.f32.mrb[0].mxu0
      %1543 = vmatprep.mubr.bf16.mxu0 0
      %1544 = vmatmul.mubr.bf16.gmra.mrb[0].mxu0 %v1318
      %v1545 = vpop.f32.mrb[0].mxu0
      %v1546 = vadd.f32 %v1254, %v1545
      %v1547 = vpop.f32.mrb[0].mxu0
      %v1548 = vpop.f32.mrb[0].mxu0
      %v1549 = vadd.f32 %v1254, %v1548
      %v1550 = vpop.f32.mrb[0].mxu0
      %1551 = vmatprep.mubr.bf16.mxu0 0
      %1552 = vmatmul.mubr.bf16.gmra.mrb[0].mxu0 %v1321
      %v1553 = vpop.f32.mrb[0].mxu0
      %v1554 = vadd.f32 %v1254, %v1553
      %v1555 = vpop.f32.mrb[0].mxu0
      %v1556 = vpop.f32.mrb[0].mxu0
      %v1557 = vadd.f32 %v1254, %v1556
      %v1558 = vpop.f32.mrb[0].mxu0
      %1559 = vmatprep.mubr.bf16.mxu0 0
      %1560 = vmatmul.mubr.bf16.gmra.mrb[0].mxu0 %v1324
      %v1561 = vpop.f32.mrb[0].mxu0
      %v1562 = vadd.f32 %v1254, %v1561
      %v1563 = vpop.f32.mrb[0].mxu0
      %v1564 = vpop.f32.mrb[0].mxu0
      %v1565 = vadd.f32 %v1254, %v1564
      %v1566 = vpop.f32.mrb[0].mxu0
      %1567 = vmatprep.mubr.bf16.mxu0 0
      %1568 = vmatmul.mubr.bf16.gmra.mrb[0].mxu0 %v1327
      %v1569 = vpop.f32.mrb[0].mxu0
      %v1570 = vadd.f32 %v1254, %v1569
      %v1571 = vpop.f32.mrb[0].mxu0
      %v1572 = vpop.f32.mrb[0].mxu0
      %v1573 = vadd.f32 %v1254, %v1572
      %v1574 = vpop.f32.mrb[0].mxu0
      %1575 = vmatprep.mubr.bf16.mxu0 0
      %1576 = vmatmul.mubr.bf16.gmra.mrb[0].mxu0 %v1330
      %v1577 = vpop.f32.mrb[0].mxu0
      %v1578 = vadd.f32 %v1254, %v1577
      %v1579 = vpop.f32.mrb[0].mxu0
      %v1580 = vpop.f32.mrb[0].mxu0
      %v1581 = vadd.f32 %v1254, %v1580
      %v1582 = vpop.f32.mrb[0].mxu0
      %1583 = vmatprep.mubr.bf16.mxu0 0
      %1584 = vmatmul.mubr.bf16.gmra.mrb[0].mxu0 %v1333
      %v1585 = vpop.f32.mrb[0].mxu0
      %v1586 = vadd.f32 %v1254, %v1585
      %v1587 = vpop.f32.mrb[0].mxu0
      %v1588 = vpop.f32.mrb[0].mxu0
      %v1589 = vadd.f32 %v1254, %v1588
      %v1590 = vpop.f32.mrb[0].mxu0
      %1591 = vmatprep.mubr.bf16.mxu0 0
      %1592 = vmatmul.mubr.bf16.gmra.mrb[0].mxu0 %v1336
      %v1593 = vpop.f32.mrb[0].mxu0
      %v1594 = vadd.f32 %v1254, %v1593
      %v1595 = vpop.f32.mrb[0].mxu0
      %v1596 = vpop.f32.mrb[0].mxu0
      %v1597 = vadd.f32 %v1254, %v1596
      %v1598 = vpop.f32.mrb[0].mxu0
      %1599 = vmatprep.mubr.bf16.mxu0 0
      %1600 = vmatmul.mubr.bf16.gmra.mrb[0].mxu0 %v1339
      %v1601 = vpop.f32.mrb[0].mxu0
      %v1602 = vadd.f32 %v1254, %v1601
      %v1603 = vpop.f32.mrb[0].mxu0
      %v1604 = vpop.f32.mrb[0].mxu0
      %v1605 = vadd.f32 %v1254, %v1604
      %v1606 = vpop.f32.mrb[0].mxu0
      %1607 = vmatprep.mubr.bf16.mxu0 0
      %1608 = vmatmul.mubr.bf16.gmra.mrb[0].mxu0 %v1342
      %v1609 = vpop.f32.mrb[0].mxu0
      %v1610 = vadd.f32 %v1254, %v1609
      %v1611 = vpop.f32.mrb[0].mxu0
      %v1612 = vpop.f32.mrb[0].mxu0
      %v1613 = vadd.f32 %v1254, %v1612
      %v1614 = vpop.f32.mrb[0].mxu0
      %1615 = vmatprep.mubr.bf16.mxu0 0
      %1616 = vmatmul.mubr.bf16.gmra.mrb[0].mxu0 %v1345
      %v1617 = vpop.f32.mrb[0].mxu0
      %v1618 = vadd.f32 %v1254, %v1617
      %v1619 = vpop.f32.mrb[0].mxu0
      %v1620 = vpop.f32.mrb[0].mxu0
      %v1621 = vadd.f32 %v1254, %v1620
      %v1622 = vpop.f32.mrb[0].mxu0
      %1623 = vmatprep.mubr.bf16.mxu0 0
      %1624 = vmatmul.mubr.bf16.gmra.mrb[0].mxu0 %v1348
      %v1625 = vpop.f32.mrb[0].mxu0
      %v1626 = vadd.f32 %v1254, %v1625
      %v1627 = vpop.f32.mrb[0].mxu0
      %v1628 = vpop.f32.mrb[0].mxu0
      %v1629 = vadd.f32 %v1254, %v1628
      %v1630 = vpop.f32.mrb[0].mxu0
      %1631 = vmatprep.mubr.bf16.mxu0 0
      %1632 = vmatmul.mubr.bf16.gmra.mrb[0].mxu0 %v1351
      %v1633 = vpop.f32.mrb[0].mxu0
      %v1634 = vadd.f32 %v1254, %v1633
      %v1635 = vpop.f32.mrb[0].mxu0
      %v1636 = vpop.f32.mrb[0].mxu0
      %v1637 = vadd.f32 %v1254, %v1636
      %v1638 = vpop.f32.mrb[0].mxu0
      %1639 = vmatprep.mubr.bf16.mxu0 0
      %1640 = vmatmul.mubr.bf16.gmra.mrb[0].mxu0 %v1354
      %v1641 = vpop.f32.mrb[0].mxu0
      %v1642 = vadd.f32 %v1254, %v1641
      %v1643 = vpop.f32.mrb[0].mxu0
      %v1644 = vpop.f32.mrb[0].mxu0
      %v1645 = vadd.f32 %v1254, %v1644
      %v1646 = vpop.f32.mrb[0].mxu0
      %1647 = vmatprep.mubr.bf16.mxu0 0
      %1648 = vmatmul.mubr.bf16.gmra.mrb[0].mxu0 %v1357
      %v1649 = vpop.f32.mrb[0].mxu0
      %v1650 = vadd.f32 %v1254, %v1649
      %v1651 = vpop.f32.mrb[0].mxu0
      %v1652 = vpop.f32.mrb[0].mxu0
      %v1653 = vadd.f32 %v1254, %v1652
      %v1654 = vpop.f32.mrb[0].mxu0
      %1655 = vmatprep.mubr.bf16.mxu0 0
      %1656 = vmatmul.mubr.bf16.gmra.mrb[0].mxu0 %v1360
      %v1657 = vpop.f32.mrb[0].mxu0
      %v1658 = vadd.f32 %v1254, %v1657
      %v1659 = vpop.f32.mrb[0].mxu0
      %v1660 = vpop.f32.mrb[0].mxu0
      %v1661 = vadd.f32 %v1254, %v1660
      %v1662 = vpop.f32.mrb[0].mxu0
      %1663 = vmatprep.mubr.bf16.mxu0 0
      %1664 = vmatmul.mubr.bf16.gmra.mrb[0].mxu0 %v1363
      %v1665 = vpop.f32.mrb[0].mxu0
      %v1666 = vadd.f32 %v1254, %v1665
      %v1667 = vpop.f32.mrb[0].mxu0
      %v1668 = vpop.f32.mrb[0].mxu0
      %v1669 = vadd.f32 %v1254, %v1668
      %v1670 = vpop.f32.mrb[0].mxu0
      %1671 = vmatprep.mubr.bf16.mxu0 0
      %1672 = vmatmul.mubr.bf16.gmra.mrb[0].mxu0 %v1366
      %v1673 = vpop.f32.mrb[0].mxu0
      %v1674 = vadd.f32 %v1254, %v1673
      %v1675 = vpop.f32.mrb[0].mxu0
      %v1676 = vpop.f32.mrb[0].mxu0
      %v1677 = vadd.f32 %v1254, %v1676
      %v1678 = vpop.f32.mrb[0].mxu0
      %1679 = vmatprep.mubr.bf16.mxu0 0
      %1680 = vmatmul.mubr.bf16.gmra.mrb[0].mxu0 %v1369
      %v1681 = vpop.f32.mrb[0].mxu0
      %v1682 = vadd.f32 %v1254, %v1681
      %v1683 = vpop.f32.mrb[0].mxu0
      %v1684 = vpop.f32.mrb[0].mxu0
      %v1685 = vadd.f32 %v1254, %v1684
      %v1686 = vpop.f32.mrb[0].mxu0
      %1687 = vmatprep.mubr.bf16.mxu0 0
      %1688 = vmatmul.mubr.bf16.gmra.mrb[0].mxu0 %v1372
      %v1689 = vpop.f32.mrb[0].mxu0
      %v1690 = vadd.f32 %v1254, %v1689
      %v1691 = vpop.f32.mrb[0].mxu0
      %v1692 = vpop.f32.mrb[0].mxu0
      %v1693 = vadd.f32 %v1254, %v1692
      %v1694 = vpop.f32.mrb[0].mxu0
      %1695 = vmatprep.mubr.bf16.mxu0 0
      %1696 = vmatmul.mubr.bf16.gmra.mrb[0].mxu0 %v1375
      %v1697 = vpop.f32.mrb[0].mxu0
      %v1698 = vadd.f32 %v1254, %v1697
      %v1699 = vpop.f32.mrb[0].mxu0
      %v1700 = vpop.f32.mrb[0].mxu0
      %v1701 = vadd.f32 %v1254, %v1700
      %v1702 = vpop.f32.mrb[0].mxu0
      %1703 = vmatprep.mubr.bf16.mxu0 0
      %1704 = vmatmul.mubr.bf16.gmra.mrb[0].mxu0 %v1378
      %v1705 = vpop.f32.mrb[0].mxu0
      %v1706 = vadd.f32 %v1254, %v1705
      %v1707 = vpop.f32.mrb[0].mxu0
      %v1708 = vpop.f32.mrb[0].mxu0
      %v1709 = vadd.f32 %v1254, %v1708
      %v1710 = vpop.f32.mrb[0].mxu0
      %1711 = vmatprep.mubr.bf16.mxu0 0
      %1712 = vmatmul.mubr.bf16.gmra.mrb[0].mxu0 %v1381
      %v1713 = vpop.f32.mrb[0].mxu0
      %v1714 = vadd.f32 %v1254, %v1713
      %v1715 = vpop.f32.mrb[0].mxu0
      %v1716 = vpop.f32.mrb[0].mxu0
      %v1717 = vadd.f32 %v1254, %v1716
      %v1718 = vpop.f32.mrb[0].mxu0
      %1719 = vdwg.mxu0
      %v1720 = vmul.f32 %v1418, 0.5
      %v1721 = vmul.f32 %v1421, 0.5
      %v1722 = vmul.f32 %v1426, 0.5
      %v1723 = vmul.f32 %v1429, 0.5
      %v1724 = vmul.f32 %v1434, 0.5
      %v1725 = vmul.f32 %v1437, 0.5
      %v1726 = vmul.f32 %v1442, 0.5
      %v1727 = vmul.f32 %v1445, 0.5
      %v1728 = vmul.f32 %v1450, 0.5
      %v1729 = vmul.f32 %v1453, 0.5
      %v1730 = vmul.f32 %v1458, 0.5
      %v1731 = vmul.f32 %v1461, 0.5
      %v1732 = vmul.f32 %v1466, 0.5
      %v1733 = vmul.f32 %v1469, 0.5
      %v1734 = vmul.f32 %v1474, 0.5
      %v1735 = vmul.f32 %v1477, 0.5
      %v1736 = vmul.f32 %v1482, 0.5
      %v1737 = vmul.f32 %v1485, 0.5
      %v1738 = vmul.f32 %v1490, 0.5
      %v1739 = vmul.f32 %v1493, 0.5
      %v1740 = vmul.f32 %v1498, 0.5
      %v1741 = vmul.f32 %v1501, 0.5
      %v1742 = vmul.f32 %v1506, 0.5
      %v1743 = vmul.f32 %v1509, 0.5
      %v1744 = vmul.f32 %v1514, 0.5
      %v1745 = vmul.f32 %v1517, 0.5
      %v1746 = vmul.f32 %v1522, 0.5
      %v1747 = vmul.f32 %v1525, 0.5
      %v1748 = vmul.f32 %v1530, 0.5
      %v1749 = vmul.f32 %v1533, 0.5
      %v1750 = vmul.f32 %v1538, 0.5
      %v1751 = vmul.f32 %v1541, 0.5
      %v1752 = vmul.f32 %v1546, 0.5
      %v1753 = vmul.f32 %v1549, 0.5
      %v1754 = vmul.f32 %v1554, 0.5
      %v1755 = vmul.f32 %v1557, 0.5
      %v1756 = vmul.f32 %v1562, 0.5
      %v1757 = vmul.f32 %v1565, 0.5
      %v1758 = vmul.f32 %v1570, 0.5
      %v1759 = vmul.f32 %v1573, 0.5
      %v1760 = vmul.f32 %v1578, 0.5
      %v1761 = vmul.f32 %v1581, 0.5
      %v1762 = vmul.f32 %v1586, 0.5
      %v1763 = vmul.f32 %v1589, 0.5
      %v1764 = vmul.f32 %v1594, 0.5
      %v1765 = vmul.f32 %v1597, 0.5
      %v1766 = vmul.f32 %v1602, 0.5
      %v1767 = vmul.f32 %v1605, 0.5
      %v1768 = vmul.f32 %v1610, 0.5
      %v1769 = vmul.f32 %v1613, 0.5
      %v1770 = vmul.f32 %v1618, 0.5
      %v1771 = vmul.f32 %v1621, 0.5
      %v1772 = vmul.f32 %v1626, 0.5
      %v1773 = vmul.f32 %v1629, 0.5
      %v1774 = vmul.f32 %v1634, 0.5
      %v1775 = vmul.f32 %v1637, 0.5
      %v1776 = vmul.f32 %v1642, 0.5
      %v1777 = vmul.f32 %v1645, 0.5
      %v1778 = vmul.f32 %v1650, 0.5
      %v1779 = vmul.f32 %v1653, 0.5
      %v1780 = vmul.f32 %v1658, 0.5
      %v1781 = vmul.f32 %v1661, 0.5
      %v1782 = vmul.f32 %v1666, 0.5
      %v1783 = vmul.f32 %v1669, 0.5
      %v1784 = vmul.f32 %v1674, 0.5
      %v1785 = vmul.f32 %v1677, 0.5
      %v1786 = vmul.f32 %v1682, 0.5
      %v1787 = vmul.f32 %v1685, 0.5
      %v1788 = vmul.f32 %v1690, 0.5
      %v1789 = vmul.f32 %v1693, 0.5
      %v1790 = vmul.f32 %v1698, 0.5
      %v1791 = vmul.f32 %v1701, 0.5
      %v1792 = vmul.f32 %v1706, 0.5
      %v1793 = vmul.f32 %v1709, 0.5
      %v1794 = vmul.f32 %v1714, 0.5
      %v1795 = vmul.f32 %v1717, 0.5
      %v1796 = vmul.f32 %v1418, 0.70710677
      %v1797 = vmul.f32 %v1421, 0.70710677
      %v1798 = vmul.f32 %v1426, 0.70710677
      %v1799 = vmul.f32 %v1429, 0.70710677
      %v1800 = vmul.f32 %v1434, 0.70710677
      %v1801 = vmul.f32 %v1437, 0.70710677
      %v1802 = vmul.f32 %v1442, 0.70710677
      %v1803 = vmul.f32 %v1445, 0.70710677
      %v1804 = vmul.f32 %v1450, 0.70710677
      %v1805 = vmul.f32 %v1453, 0.70710677
      %v1806 = vmul.f32 %v1458, 0.70710677
      %v1807 = vmul.f32 %v1461, 0.70710677
      %v1808 = vmul.f32 %v1466, 0.70710677
      %v1809 = vmul.f32 %v1469, 0.70710677
      %v1810 = vmul.f32 %v1474, 0.70710677
      %v1811 = vmul.f32 %v1477, 0.70710677
      %v1812 = vmul.f32 %v1482, 0.70710677
      %v1813 = vmul.f32 %v1485, 0.70710677
      %v1814 = vmul.f32 %v1490, 0.70710677
      %v1815 = vmul.f32 %v1493, 0.70710677
      %v1816 = vmul.f32 %v1498, 0.70710677
      %v1817 = vmul.f32 %v1501, 0.70710677
      %v1818 = vmul.f32 %v1506, 0.70710677
      %v1819 = vmul.f32 %v1509, 0.70710677
      %v1820 = vmul.f32 %v1514, 0.70710677
      %v1821 = vmul.f32 %v1517, 0.70710677
      %v1822 = vmul.f32 %v1522, 0.70710677
      %v1823 = vmul.f32 %v1525, 0.70710677
      %v1824 = vmul.f32 %v1530, 0.70710677
      %v1825 = vmul.f32 %v1533, 0.70710677
      %v1826 = vmul.f32 %v1538, 0.70710677
      %v1827 = vmul.f32 %v1541, 0.70710677
      %v1828 = vmul.f32 %v1546, 0.70710677
      %v1829 = vmul.f32 %v1549, 0.70710677
      %v1830 = vmul.f32 %v1554, 0.70710677
      %v1831 = vmul.f32 %v1557, 0.70710677
      %v1832 = vmul.f32 %v1562, 0.70710677
      %v1833 = vmul.f32 %v1565, 0.70710677
      %v1834 = vmul.f32 %v1570, 0.70710677
      %v1835 = vmul.f32 %v1573, 0.70710677
      %v1836 = vmul.f32 %v1578, 0.70710677
      %v1837 = vmul.f32 %v1581, 0.70710677
      %v1838 = vmul.f32 %v1586, 0.70710677
      %v1839 = vmul.f32 %v1589, 0.70710677
      %v1840 = vmul.f32 %v1594, 0.70710677
      %v1841 = vmul.f32 %v1597, 0.70710677
      %v1842 = vmul.f32 %v1602, 0.70710677
      %v1843 = vmul.f32 %v1605, 0.70710677
      %v1844 = vmul.f32 %v1610, 0.70710677
      %v1845 = vmul.f32 %v1613, 0.70710677
      %v1846 = vmul.f32 %v1618, 0.70710677
      %v1847 = vmul.f32 %v1621, 0.70710677
      %v1848 = vmul.f32 %v1626, 0.70710677
      %v1849 = vmul.f32 %v1629, 0.70710677
      %v1850 = vmul.f32 %v1634, 0.70710677
      %v1851 = vmul.f32 %v1637, 0.70710677
      %v1852 = vmul.f32 %v1642, 0.70710677
      %v1853 = vmul.f32 %v1645, 0.70710677
      %v1854 = vmul.f32 %v1650, 0.70710677
      %v1855 = vmul.f32 %v1653, 0.70710677
      %v1856 = vmul.f32 %v1658, 0.70710677
      %v1857 = vmul.f32 %v1661, 0.70710677
      %v1858 = vmul.f32 %v1666, 0.70710677
      %v1859 = vmul.f32 %v1669, 0.70710677
      %v1860 = vmul.f32 %v1674, 0.70710677
      %v1861 = vmul.f32 %v1677, 0.70710677
      %v1862 = vmul.f32 %v1682, 0.70710677
      %v1863 = vmul.f32 %v1685, 0.70710677
      %v1864 = vmul.f32 %v1690, 0.70710677
      %v1865 = vmul.f32 %v1693, 0.70710677
      %v1866 = vmul.f32 %v1698, 0.70710677
      %v1867 = vmul.f32 %v1701, 0.70710677
      %v1868 = vmul.f32 %v1706, 0.70710677
      %v1869 = vmul.f32 %v1709, 0.70710677
      %v1870 = vmul.f32 %v1714, 0.70710677
      %v1871 = vmul.f32 %v1717, 0.70710677
      %v1872 = verf.f32.pop %v1796
      %v1873 = verf.f32.pop %v1797
      %v1874 = verf.f32.pop %v1798
      %v1875 = verf.f32.pop %v1799
      %v1876 = verf.f32.pop %v1800
      %v1877 = verf.f32.pop %v1801
      %v1878 = verf.f32.pop %v1802
      %v1879 = verf.f32.pop %v1803
      %v1880 = verf.f32.pop %v1804
      %v1881 = verf.f32.pop %v1805
      %v1882 = verf.f32.pop %v1806
      %v1883 = verf.f32.pop %v1807
      %v1884 = verf.f32.pop %v1808
      %v1885 = verf.f32.pop %v1809
      %v1886 = verf.f32.pop %v1810
      %v1887 = verf.f32.pop %v1811
      %v1888 = verf.f32.pop %v1812
      %v1889 = verf.f32.pop %v1813
      %v1890 = verf.f32.pop %v1814
      %v1891 = verf.f32.pop %v1815
      %v1892 = verf.f32.pop %v1816
      %v1893 = verf.f32.pop %v1817
      %v1894 = verf.f32.pop %v1818
      %v1895 = verf.f32.pop %v1819
      %v1896 = verf.f32.pop %v1820
      %v1897 = verf.f32.pop %v1821
      %v1898 = verf.f32.pop %v1822
      %v1899 = verf.f32.pop %v1823
      %v1900 = verf.f32.pop %v1824
      %v1901 = verf.f32.pop %v1825
      %v1902 = verf.f32.pop %v1826
      %v1903 = verf.f32.pop %v1827
      %v1904 = verf.f32.pop %v1828
      %v1905 = verf.f32.pop %v1829
      %v1906 = verf.f32.pop %v1830
      %v1907 = verf.f32.pop %v1831
      %v1908 = verf.f32.pop %v1832
      %v1909 = verf.f32.pop %v1833
      %v1910 = verf.f32.pop %v1834
      %v1911 = verf.f32.pop %v1835
      %v1912 = verf.f32.pop %v1836
      %v1913 = verf.f32.pop %v1837
      %v1914 = verf.f32.pop %v1838
      %v1915 = verf.f32.pop %v1839
      %v1916 = verf.f32.pop %v1840
      %v1917 = verf.f32.pop %v1841
      %v1918 = verf.f32.pop %v1842
      %v1919 = verf.f32.pop %v1843
      %v1920 = verf.f32.pop %v1844
      %v1921 = verf.f32.pop %v1845
      %v1922 = verf.f32.pop %v1846
      %v1923 = verf.f32.pop %v1847
      %v1924 = verf.f32.pop %v1848
      %v1925 = verf.f32.pop %v1849
      %v1926 = verf.f32.pop %v1850
      %v1927 = verf.f32.pop %v1851
      %v1928 = verf.f32.pop %v1852
      %v1929 = verf.f32.pop %v1853
      %v1930 = verf.f32.pop %v1854
      %v1931 = verf.f32.pop %v1855
      %v1932 = verf.f32.pop %v1856
      %v1933 = verf.f32.pop %v1857
      %v1934 = verf.f32.pop %v1858
      %v1935 = verf.f32.pop %v1859
      %v1936 = verf.f32.pop %v1860
      %v1937 = verf.f32.pop %v1861
      %v1938 = verf.f32.pop %v1862
      %v1939 = verf.f32.pop %v1863
      %v1940 = verf.f32.pop %v1864
      %v1941 = verf.f32.pop %v1865
      %v1942 = verf.f32.pop %v1866
      %v1943 = verf.f32.pop %v1867
      %v1944 = verf.f32.pop %v1868
      %v1945 = verf.f32.pop %v1869
      %v1946 = verf.f32.pop %v1870
      %v1947 = verf.f32.pop %v1871
      %v1948 = vadd.f32 %v1872, 1.0
      %v1949 = vadd.f32 %v1873, 1.0
      %v1950 = vadd.f32 %v1874, 1.0
      %v1951 = vadd.f32 %v1875, 1.0
      %v1952 = vadd.f32 %v1876, 1.0
      %v1953 = vadd.f32 %v1877, 1.0
      %v1954 = vadd.f32 %v1878, 1.0
      %v1955 = vadd.f32 %v1879, 1.0
      %v1956 = vadd.f32 %v1880, 1.0
      %v1957 = vadd.f32 %v1881, 1.0
      %v1958 = vadd.f32 %v1882, 1.0
      %v1959 = vadd.f32 %v1883, 1.0
      %v1960 = vadd.f32 %v1884, 1.0
      %v1961 = vadd.f32 %v1885, 1.0
      %v1962 = vadd.f32 %v1886, 1.0
      %v1963 = vadd.f32 %v1887, 1.0
      %v1964 = vadd.f32 %v1888, 1.0
      %v1965 = vadd.f32 %v1889, 1.0
      %v1966 = vadd.f32 %v1890, 1.0
      %v1967 = vadd.f32 %v1891, 1.0
      %v1968 = vadd.f32 %v1892, 1.0
      %v1969 = vadd.f32 %v1893, 1.0
      %v1970 = vadd.f32 %v1894, 1.0
      %v1971 = vadd.f32 %v1895, 1.0
      %v1972 = vadd.f32 %v1896, 1.0
      %v1973 = vadd.f32 %v1897, 1.0
      %v1974 = vadd.f32 %v1898, 1.0
      %v1975 = vadd.f32 %v1899, 1.0
      %v1976 = vadd.f32 %v1900, 1.0
      %v1977 = vadd.f32 %v1901, 1.0
      %v1978 = vadd.f32 %v1902, 1.0
      %v1979 = vadd.f32 %v1903, 1.0
      %v1980 = vadd.f32 %v1904, 1.0
      %v1981 = vadd.f32 %v1905, 1.0
      %v1982 = vadd.f32 %v1906, 1.0
      %v1983 = vadd.f32 %v1907, 1.0
      %v1984 = vadd.f32 %v1908, 1.0
      %v1985 = vadd.f32 %v1909, 1.0
      %v1986 = vadd.f32 %v1910, 1.0
      %v1987 = vadd.f32 %v1911, 1.0
      %v1988 = vadd.f32 %v1912, 1.0
      %v1989 = vadd.f32 %v1913, 1.0
      %v1990 = vadd.f32 %v1914, 1.0
      %v1991 = vadd.f32 %v1915, 1.0
      %v1992 = vadd.f32 %v1916, 1.0
      %v1993 = vadd.f32 %v1917, 1.0
      %v1994 = vadd.f32 %v1918, 1.0
      %v1995 = vadd.f32 %v1919, 1.0
      %v1996 = vadd.f32 %v1920, 1.0
      %v1997 = vadd.f32 %v1921, 1.0
      %v1998 = vadd.f32 %v1922, 1.0
      %v1999 = vadd.f32 %v1923, 1.0
      %v2000 = vadd.f32 %v1924, 1.0
      %v2001 = vadd.f32 %v1925, 1.0
      %v2002 = vadd.f32 %v1926, 1.0
      %v2003 = vadd.f32 %v1927, 1.0
      %v2004 = vadd.f32 %v1928, 1.0
      %v2005 = vadd.f32 %v1929, 1.0
      %v2006 = vadd.f32 %v1930, 1.0
      %v2007 = vadd.f32 %v1931, 1.0
      %v2008 = vadd.f32 %v1932, 1.0
      %v2009 = vadd.f32 %v1933, 1.0
      %v2010 = vadd.f32 %v1934, 1.0
      %v2011 = vadd.f32 %v1935, 1.0
      %v2012 = vadd.f32 %v1936, 1.0
      %v2013 = vadd.f32 %v1937, 1.0
      %v2014 = vadd.f32 %v1938, 1.0
      %v2015 = vadd.f32 %v1939, 1.0
      %v2016 = vadd.f32 %v1940, 1.0
      %v2017 = vadd.f32 %v1941, 1.0
      %v2018 = vadd.f32 %v1942, 1.0
      %v2019 = vadd.f32 %v1943, 1.0
      %v2020 = vadd.f32 %v1944, 1.0
      %v2021 = vadd.f32 %v1945, 1.0
      %v2022 = vadd.f32 %v1946, 1.0
      %v2023 = vadd.f32 %v1947, 1.0
      %v2024 = vmul.f32 %v1720, %v1948
      %v2025 = vmul.f32 %v1721, %v1949
      %v2026 = vmul.f32 %v1722, %v1950
      %v2027 = vmul.f32 %v1723, %v1951
      %v2028 = vmul.f32 %v1724, %v1952
      %v2029 = vmul.f32 %v1725, %v1953
      %v2030 = vmul.f32 %v1726, %v1954
      %v2031 = vmul.f32 %v1727, %v1955
      %v2032 = vmul.f32 %v1728, %v1956
      %v2033 = vmul.f32 %v1729, %v1957
      %v2034 = vmul.f32 %v1730, %v1958
      %v2035 = vmul.f32 %v1731, %v1959
      %v2036 = vmul.f32 %v1732, %v1960
      %v2037 = vmul.f32 %v1733, %v1961
      %v2038 = vmul.f32 %v1734, %v1962
      %v2039 = vmul.f32 %v1735, %v1963
      %v2040 = vmul.f32 %v1736, %v1964
      %v2041 = vmul.f32 %v1737, %v1965
      %v2042 = vmul.f32 %v1738, %v1966
      %v2043 = vmul.f32 %v1739, %v1967
      %v2044 = vmul.f32 %v1740, %v1968
      %v2045 = vmul.f32 %v1741, %v1969
      %v2046 = vmul.f32 %v1742, %v1970
      %v2047 = vmul.f32 %v1743, %v1971
      %v2048 = vmul.f32 %v1744, %v1972
      %v2049 = vmul.f32 %v1745, %v1973
      %v2050 = vmul.f32 %v1746, %v1974
      %v2051 = vmul.f32 %v1747, %v1975
      %v2052 = vmul.f32 %v1748, %v1976
      %v2053 = vmul.f32 %v1749, %v1977
      %v2054 = vmul.f32 %v1750, %v1978
      %v2055 = vmul.f32 %v1751, %v1979
      %v2056 = vmul.f32 %v1752, %v1980
      %v2057 = vmul.f32 %v1753, %v1981
      %v2058 = vmul.f32 %v1754, %v1982
      %v2059 = vmul.f32 %v1755, %v1983
      %v2060 = vmul.f32 %v1756, %v1984
      %v2061 = vmul.f32 %v1757, %v1985
      %v2062 = vmul.f32 %v1758, %v1986
      %v2063 = vmul.f32 %v1759, %v1987
      %v2064 = vmul.f32 %v1760, %v1988
      %v2065 = vmul.f32 %v1761, %v1989
      %v2066 = vmul.f32 %v1762, %v1990
      %v2067 = vmul.f32 %v1763, %v1991
      %v2068 = vmul.f32 %v1764, %v1992
      %v2069 = vmul.f32 %v1765, %v1993
      %v2070 = vmul.f32 %v1766, %v1994
      %v2071 = vmul.f32 %v1767, %v1995
      %v2072 = vmul.f32 %v1768, %v1996
      %v2073 = vmul.f32 %v1769, %v1997
      %v2074 = vmul.f32 %v1770, %v1998
      %v2075 = vmul.f32 %v1771, %v1999
      %v2076 = vmul.f32 %v1772, %v2000
      %v2077 = vmul.f32 %v1773, %v2001
      %v2078 = vmul.f32 %v1774, %v2002
      %v2079 = vmul.f32 %v1775, %v2003
      %v2080 = vmul.f32 %v1776, %v2004
      %v2081 = vmul.f32 %v1777, %v2005
      %v2082 = vmul.f32 %v1778, %v2006
      %v2083 = vmul.f32 %v1779, %v2007
      %v2084 = vmul.f32 %v1780, %v2008
      %v2085 = vmul.f32 %v1781, %v2009
      %v2086 = vmul.f32 %v1782, %v2010
      %v2087 = vmul.f32 %v1783, %v2011
      %v2088 = vmul.f32 %v1784, %v2012
      %v2089 = vmul.f32 %v1785, %v2013
      %v2090 = vmul.f32 %v1786, %v2014
      %v2091 = vmul.f32 %v1787, %v2015
      %v2092 = vmul.f32 %v1788, %v2016
      %v2093 = vmul.f32 %v1789, %v2017
      %v2094 = vmul.f32 %v1790, %v2018
      %v2095 = vmul.f32 %v1791, %v2019
      %v2096 = vmul.f32 %v1792, %v2020
      %v2097 = vmul.f32 %v1793, %v2021
      %v2098 = vmul.f32 %v1794, %v2022
      %v2099 = vmul.f32 %v1795, %v2023
      %2101 = vset.pattern.permute.xlu0 0
      %2102 = vperm.xlu0 %2101, %v419
      %v2103 = vpop.permute.xlu0 %2102
      %2106 = vset.pattern.permute.xlu0 0
      %2107 = vperm.xlu0 %2106, %v420
      %v2108 = vpop.permute.xlu0 %2107
      %2111 = vset.pattern.permute.xlu0 0
      %2112 = vperm.xlu0 %2111, %v421
      %v2113 = vpop.permute.xlu0 %2112
      %2116 = vset.pattern.permute.xlu0 0
      %2117 = vperm.xlu0 %2116, %v422
      %v2118 = vpop.permute.xlu0 %2117
      %2121 = vset.pattern.permute.xlu0 0
      %2122 = vperm.xlu0 %2121, %v423
      %v2123 = vpop.permute.xlu0 %2122
      %2126 = vset.pattern.permute.xlu0 0
      %2127 = vperm.xlu0 %2126, %v424
      %v2128 = vpop.permute.xlu0 %2127
      %2131 = vset.pattern.permute.xlu0 0
      %2132 = vperm.xlu0 %2131, %v425
      %v2133 = vpop.permute.xlu0 %2132
      %2136 = vset.pattern.permute.xlu0 0
      %2137 = vperm.xlu0 %2136, %v426
      %v2138 = vpop.permute.xlu0 %2137
      %2141 = vset.pattern.permute.xlu0 0
      %2142 = vperm.xlu0 %2141, %v427
      %v2143 = vpop.permute.xlu0 %2142
      %2146 = vset.pattern.permute.xlu0 0
      %2147 = vperm.xlu0 %2146, %v428
      %v2148 = vpop.permute.xlu0 %2147
      %2151 = vset.pattern.permute.xlu0 0
      %2152 = vperm.xlu0 %2151, %v429
      %v2153 = vpop.permute.xlu0 %2152
      %2156 = vset.pattern.permute.xlu0 0
      %2157 = vperm.xlu0 %2156, %v430
      %v2158 = vpop.permute.xlu0 %2157
      %2161 = vset.pattern.permute.xlu0 0
      %2162 = vperm.xlu0 %2161, %v431
      %v2163 = vpop.permute.xlu0 %2162
      %2166 = vset.pattern.permute.xlu0 0
      %2167 = vperm.xlu0 %2166, %v432
      %v2168 = vpop.permute.xlu0 %2167
      %2171 = vset.pattern.permute.xlu0 0
      %2172 = vperm.xlu0 %2171, %v433
      %v2173 = vpop.permute.xlu0 %2172
      %2176 = vset.pattern.permute.xlu0 0
      %2177 = vperm.xlu0 %2176, %v434
      %v2178 = vpop.permute.xlu0 %2177
      %2181 = vset.pattern.permute.xlu0 0
      %2182 = vperm.xlu0 %2181, %v435
      %v2183 = vpop.permute.xlu0 %2182
      %2186 = vset.pattern.permute.xlu0 0
      %2187 = vperm.xlu0 %2186, %v436
      %v2188 = vpop.permute.xlu0 %2187
      %2191 = vset.pattern.permute.xlu0 0
      %2192 = vperm.xlu0 %2191, %v437
      %v2193 = vpop.permute.xlu0 %2192
      %2196 = vset.pattern.permute.xlu0 0
      %2197 = vperm.xlu0 %2196, %v438
      %v2198 = vpop.permute.xlu0 %2197
      %2201 = vset.pattern.permute.xlu0 0
      %2202 = vperm.xlu0 %2201, %v439
      %v2203 = vpop.permute.xlu0 %2202
      %2206 = vset.pattern.permute.xlu0 0
      %2207 = vperm.xlu0 %2206, %v440
      %v2208 = vpop.permute.xlu0 %2207
      %2211 = vset.pattern.permute.xlu0 0
      %2212 = vperm.xlu0 %2211, %v441
      %v2213 = vpop.permute.xlu0 %2212
      %2216 = vset.pattern.permute.xlu0 0
      %2217 = vperm.xlu0 %2216, %v442
      %v2218 = vpop.permute.xlu0 %2217
      %2221 = vset.pattern.permute.xlu0 0
      %2222 = vperm.xlu0 %2221, %v443
      %v2223 = vpop.permute.xlu0 %2222
      %2226 = vset.pattern.permute.xlu0 0
      %2227 = vperm.xlu0 %2226, %v444
      %v2228 = vpop.permute.xlu0 %2227
      %2231 = vset.pattern.permute.xlu0 0
      %2232 = vperm.xlu0 %2231, %v445
      %v2233 = vpop.permute.xlu0 %2232
      %2236 = vset.pattern.permute.xlu0 0
      %2237 = vperm.xlu0 %2236, %v446
      %v2238 = vpop.permute.xlu0 %2237
      %2241 = vset.pattern.permute.xlu0 0
      %2242 = vperm.xlu0 %2241, %v447
      %v2243 = vpop.permute.xlu0 %2242
      %2246 = vset.pattern.permute.xlu0 0
      %2247 = vperm.xlu0 %2246, %v448
      %v2248 = vpop.permute.xlu0 %2247
      %2251 = vset.pattern.permute.xlu0 0
      %2252 = vperm.xlu0 %2251, %v449
      %v2253 = vpop.permute.xlu0 %2252
      %2256 = vset.pattern.permute.xlu0 0
      %2257 = vperm.xlu0 %2256, %v450
      %v2258 = vpop.permute.xlu0 %2257
      %2261 = vset.pattern.permute.xlu0 0
      %2262 = vperm.xlu0 %2261, %v451
      %v2263 = vpop.permute.xlu0 %2262
      %2266 = vset.pattern.permute.xlu0 0
      %2267 = vperm.xlu0 %2266, %v452
      %v2268 = vpop.permute.xlu0 %2267
      %2271 = vset.pattern.permute.xlu0 0
      %2272 = vperm.xlu0 %2271, %v453
      %v2273 = vpop.permute.xlu0 %2272
      %2276 = vset.pattern.permute.xlu0 0
      %2277 = vperm.xlu0 %2276, %v454
      %v2278 = vpop.permute.xlu0 %2277
      %2281 = vset.pattern.permute.xlu0 0
      %2282 = vperm.xlu0 %2281, %v455
      %v2283 = vpop.permute.xlu0 %2282
      %2286 = vset.pattern.permute.xlu0 0
      %2287 = vperm.xlu0 %2286, %v456
      %v2288 = vpop.permute.xlu0 %2287
      %2291 = vset.pattern.permute.xlu0 0
      %2292 = vperm.xlu0 %2291, %v457
      %v2293 = vpop.permute.xlu0 %2292
      %2296 = vset.pattern.permute.xlu0 0
      %2297 = vperm.xlu0 %2296, %v458
      %v2298 = vpop.permute.xlu0 %2297
      %2301 = vset.pattern.permute.xlu0 0
      %2302 = vperm.xlu0 %2301, %v459
      %v2303 = vpop.permute.xlu0 %2302
      %2306 = vset.pattern.permute.xlu0 0
      %2307 = vperm.xlu0 %2306, %v460
      %v2308 = vpop.permute.xlu0 %2307
      %2311 = vset.pattern.permute.xlu0 0
      %2312 = vperm.xlu0 %2311, %v461
      %v2313 = vpop.permute.xlu0 %2312
      %2316 = vset.pattern.permute.xlu0 0
      %2317 = vperm.xlu0 %2316, %v462
      %v2318 = vpop.permute.xlu0 %2317
      %2321 = vset.pattern.permute.xlu0 0
      %2322 = vperm.xlu0 %2321, %v463
      %v2323 = vpop.permute.xlu0 %2322
      %2326 = vset.pattern.permute.xlu0 0
      %2327 = vperm.xlu0 %2326, %v464
      %v2328 = vpop.permute.xlu0 %2327
      %2331 = vset.pattern.permute.xlu0 0
      %2332 = vperm.xlu0 %2331, %v465
      %v2333 = vpop.permute.xlu0 %2332
      %2336 = vset.pattern.permute.xlu0 0
      %2337 = vperm.xlu0 %2336, %v466
      %v2338 = vpop.permute.xlu0 %2337
      %2341 = vset.pattern.permute.xlu0 0
      %2342 = vperm.xlu0 %2341, %v467
      %v2343 = vpop.permute.xlu0 %2342
      %2346 = vset.pattern.permute.xlu0 0
      %2347 = vperm.xlu0 %2346, %v468
      %v2348 = vpop.permute.xlu0 %2347
      %2351 = vset.pattern.permute.xlu0 0
      %2352 = vperm.xlu0 %2351, %v469
      %v2353 = vpop.permute.xlu0 %2352
      %2356 = vset.pattern.permute.xlu0 0
      %2357 = vperm.xlu0 %2356, %v470
      %v2358 = vpop.permute.xlu0 %2357
      %2361 = vset.pattern.permute.xlu0 0
      %2362 = vperm.xlu0 %2361, %v471
      %v2363 = vpop.permute.xlu0 %2362
      %2366 = vset.pattern.permute.xlu0 0
      %2367 = vperm.xlu0 %2366, %v472
      %v2368 = vpop.permute.xlu0 %2367
      %2371 = vset.pattern.permute.xlu0 0
      %2372 = vperm.xlu0 %2371, %v473
      %v2373 = vpop.permute.xlu0 %2372
      %2376 = vset.pattern.permute.xlu0 0
      %2377 = vperm.xlu0 %2376, %v474
      %v2378 = vpop.permute.xlu0 %2377
      %2381 = vset.pattern.permute.xlu0 0
      %2382 = vperm.xlu0 %2381, %v475
      %v2383 = vpop.permute.xlu0 %2382
      %2386 = vset.pattern.permute.xlu0 0
      %2387 = vperm.xlu0 %2386, %v476
      %v2388 = vpop.permute.xlu0 %2387
      %2391 = vset.pattern.permute.xlu0 0
      %2392 = vperm.xlu0 %2391, %v477
      %v2393 = vpop.permute.xlu0 %2392
      %2396 = vset.pattern.permute.xlu0 0
      %2397 = vperm.xlu0 %2396, %v478
      %v2398 = vpop.permute.xlu0 %2397
      %2401 = vset.pattern.permute.xlu0 0
      %2402 = vperm.xlu0 %2401, %v479
      %v2403 = vpop.permute.xlu0 %2402
      %2406 = vset.pattern.permute.xlu0 0
      %2407 = vperm.xlu0 %2406, %v480
      %v2408 = vpop.permute.xlu0 %2407
      %2411 = vset.pattern.permute.xlu0 0
      %2412 = vperm.xlu0 %2411, %v481
      %v2413 = vpop.permute.xlu0 %2412
      %2416 = vset.pattern.permute.xlu0 0
      %2417 = vperm.xlu0 %2416, %v482
      %v2418 = vpop.permute.xlu0 %2417
      %2421 = vset.pattern.permute.xlu0 0
      %2422 = vperm.xlu0 %2421, %v483
      %v2423 = vpop.permute.xlu0 %2422
      %2426 = vset.pattern.permute.xlu0 0
      %2427 = vperm.xlu0 %2426, %v484
      %v2428 = vpop.permute.xlu0 %2427
      %2431 = vset.pattern.permute.xlu0 0
      %2432 = vperm.xlu0 %2431, %v485
      %v2433 = vpop.permute.xlu0 %2432
      %2436 = vset.pattern.permute.xlu0 0
      %2437 = vperm.xlu0 %2436, %v486
      %v2438 = vpop.permute.xlu0 %2437
      %2441 = vset.pattern.permute.xlu0 0
      %2442 = vperm.xlu0 %2441, %v487
      %v2443 = vpop.permute.xlu0 %2442
      %2446 = vset.pattern.permute.xlu0 0
      %2447 = vperm.xlu0 %2446, %v488
      %v2448 = vpop.permute.xlu0 %2447
      %2451 = vset.pattern.permute.xlu0 0
      %2452 = vperm.xlu0 %2451, %v489
      %v2453 = vpop.permute.xlu0 %2452
      %2456 = vset.pattern.permute.xlu0 0
      %2457 = vperm.xlu0 %2456, %v490
      %v2458 = vpop.permute.xlu0 %2457
      %2461 = vset.pattern.permute.xlu0 0
      %2462 = vperm.xlu0 %2461, %v491
      %v2463 = vpop.permute.xlu0 %2462
      %2466 = vset.pattern.permute.xlu0 0
      %2467 = vperm.xlu0 %2466, %v492
      %v2468 = vpop.permute.xlu0 %2467
      %2471 = vset.pattern.permute.xlu0 0
      %2472 = vperm.xlu0 %2471, %v493
      %v2473 = vpop.permute.xlu0 %2472
      %2476 = vset.pattern.permute.xlu0 0
      %2477 = vperm.xlu0 %2476, %v494
      %v2478 = vpop.permute.xlu0 %2477
      %v2480 = vmul.f32 %v2024, %v2103
      %v2481 = vmul.f32 %v2025, %v2108
      %v2482 = vmul.f32 %v2026, %v2113
      %v2483 = vmul.f32 %v2027, %v2118
      %v2484 = vmul.f32 %v2028, %v2123
      %v2485 = vmul.f32 %v2029, %v2128
      %v2486 = vmul.f32 %v2030, %v2133
      %v2487 = vmul.f32 %v2031, %v2138
      %v2488 = vmul.f32 %v2032, %v2143
      %v2489 = vmul.f32 %v2033, %v2148
      %v2490 = vmul.f32 %v2034, %v2153
      %v2491 = vmul.f32 %v2035, %v2158
      %v2492 = vmul.f32 %v2036, %v2163
      %v2493 = vmul.f32 %v2037, %v2168
      %v2494 = vmul.f32 %v2038, %v2173
      %v2495 = vmul.f32 %v2039, %v2178
      %v2496 = vmul.f32 %v2040, %v2183
      %v2497 = vmul.f32 %v2041, %v2188
      %v2498 = vmul.f32 %v2042, %v2193
      %v2499 = vmul.f32 %v2043, %v2198
      %v2500 = vmul.f32 %v2044, %v2203
      %v2501 = vmul.f32 %v2045, %v2208
      %v2502 = vmul.f32 %v2046, %v2213
      %v2503 = vmul.f32 %v2047, %v2218
      %v2504 = vmul.f32 %v2048, %v2223
      %v2505 = vmul.f32 %v2049, %v2228
      %v2506 = vmul.f32 %v2050, %v2233
      %v2507 = vmul.f32 %v2051, %v2238
      %v2508 = vmul.f32 %v2052, %v2243
      %v2509 = vmul.f32 %v2053, %v2248
      %v2510 = vmul.f32 %v2054, %v2253
      %v2511 = vmul.f32 %v2055, %v2258
      %v2512 = vmul.f32 %v2056, %v2263
      %v2513 = vmul.f32 %v2057, %v2268
      %v2514 = vmul.f32 %v2058, %v2273
      %v2515 = vmul.f32 %v2059, %v2278
      %v2516 = vmul.f32 %v2060, %v2283
      %v2517 = vmul.f32 %v2061, %v2288
      %v2518 = vmul.f32 %v2062, %v2293
      %v2519 = vmul.f32 %v2063, %v2298
      %v2520 = vmul.f32 %v2064, %v2303
      %v2521 = vmul.f32 %v2065, %v2308
      %v2522 = vmul.f32 %v2066, %v2313
      %v2523 = vmul.f32 %v2067, %v2318
      %v2524 = vmul.f32 %v2068, %v2323
      %v2525 = vmul.f32 %v2069, %v2328
      %v2526 = vmul.f32 %v2070, %v2333
      %v2527 = vmul.f32 %v2071, %v2338
      %v2528 = vmul.f32 %v2072, %v2343
      %v2529 = vmul.f32 %v2073, %v2348
      %v2530 = vmul.f32 %v2074, %v2353
      %v2531 = vmul.f32 %v2075, %v2358
      %v2532 = vmul.f32 %v2076, %v2363
      %v2533 = vmul.f32 %v2077, %v2368
      %v2534 = vmul.f32 %v2078, %v2373
      %v2535 = vmul.f32 %v2079, %v2378
      %v2536 = vmul.f32 %v2080, %v2383
      %v2537 = vmul.f32 %v2081, %v2388
      %v2538 = vmul.f32 %v2082, %v2393
      %v2539 = vmul.f32 %v2083, %v2398
      %v2540 = vmul.f32 %v2084, %v2403
      %v2541 = vmul.f32 %v2085, %v2408
      %v2542 = vmul.f32 %v2086, %v2413
      %v2543 = vmul.f32 %v2087, %v2418
      %v2544 = vmul.f32 %v2088, %v2423
      %v2545 = vmul.f32 %v2089, %v2428
      %v2546 = vmul.f32 %v2090, %v2433
      %v2547 = vmul.f32 %v2091, %v2438
      %v2548 = vmul.f32 %v2092, %v2443
      %v2549 = vmul.f32 %v2093, %v2448
      %v2550 = vmul.f32 %v2094, %v2453
      %v2551 = vmul.f32 %v2095, %v2458
      %v2552 = vmul.f32 %v2096, %v2463
      %v2553 = vmul.f32 %v2097, %v2468
      %v2554 = vmul.f32 %v2098, %v2473
      %v2555 = vmul.f32 %v2099, %v2478
      %v2556 = vpack.c.bf16 %v2481, %v2480
      %v2557 = vpack.c.bf16 %v2483, %v2482
      %v2558 = vpack.c.bf16 %v2485, %v2484
      %v2559 = vpack.c.bf16 %v2487, %v2486
      %v2560 = vpack.c.bf16 %v2489, %v2488
      %v2561 = vpack.c.bf16 %v2491, %v2490
      %v2562 = vpack.c.bf16 %v2493, %v2492
      %v2563 = vpack.c.bf16 %v2495, %v2494
      %v2564 = vpack.c.bf16 %v2497, %v2496
      %v2565 = vpack.c.bf16 %v2499, %v2498
      %v2566 = vpack.c.bf16 %v2501, %v2500
      %v2567 = vpack.c.bf16 %v2503, %v2502
      %v2568 = vpack.c.bf16 %v2505, %v2504
      %v2569 = vpack.c.bf16 %v2507, %v2506
      %v2570 = vpack.c.bf16 %v2509, %v2508
      %v2571 = vpack.c.bf16 %v2511, %v2510
      %v2572 = vpack.c.bf16 %v2513, %v2512
      %v2573 = vpack.c.bf16 %v2515, %v2514
      %v2574 = vpack.c.bf16 %v2517, %v2516
      %v2575 = vpack.c.bf16 %v2519, %v2518
      %v2576 = vpack.c.bf16 %v2521, %v2520
      %v2577 = vpack.c.bf16 %v2523, %v2522
      %v2578 = vpack.c.bf16 %v2525, %v2524
      %v2579 = vpack.c.bf16 %v2527, %v2526
      %v2580 = vpack.c.bf16 %v2529, %v2528
      %v2581 = vpack.c.bf16 %v2531, %v2530
      %v2582 = vpack.c.bf16 %v2533, %v2532
      %v2583 = vpack.c.bf16 %v2535, %v2534
      %v2584 = vpack.c.bf16 %v2537, %v2536
      %v2585 = vpack.c.bf16 %v2539, %v2538
      %v2586 = vpack.c.bf16 %v2541, %v2540
      %v2587 = vpack.c.bf16 %v2543, %v2542
      %v2588 = vpack.c.bf16 %v2545, %v2544
      %v2589 = vpack.c.bf16 %v2547, %v2546
      %v2590 = vpack.c.bf16 %v2549, %v2548
      %v2591 = vpack.c.bf16 %v2551, %v2550
      %v2592 = vpack.c.bf16 %v2553, %v2552
      %v2593 = vpack.c.bf16 %v2555, %v2554
      %v2632 = vunpack.c.l.b16 %v2556
      %v2633 = vunpack.c.h.b16 %v2556
      %v2634 = vunpack.c.l.b16 %v2557
      %v2635 = vunpack.c.h.b16 %v2557
      %v2636 = vunpack.c.l.b16 %v2558
      %v2637 = vunpack.c.h.b16 %v2558
      %v2638 = vunpack.c.l.b16 %v2559
      %v2639 = vunpack.c.h.b16 %v2559
      %v2640 = vunpack.c.l.b16 %v2560
      %v2641 = vunpack.c.h.b16 %v2560
      %v2642 = vunpack.c.l.b16 %v2561
      %v2643 = vunpack.c.h.b16 %v2561
      %v2644 = vunpack.c.l.b16 %v2562
      %v2645 = vunpack.c.h.b16 %v2562
      %v2646 = vunpack.c.l.b16 %v2563
      %v2647 = vunpack.c.h.b16 %v2563
      %v2648 = vunpack.c.l.b16 %v2564
      %v2649 = vunpack.c.h.b16 %v2564
      %v2650 = vunpack.c.l.b16 %v2565
      %v2651 = vunpack.c.h.b16 %v2565
      %v2652 = vunpack.c.l.b16 %v2566
      %v2653 = vunpack.c.h.b16 %v2566
      %v2654 = vunpack.c.l.b16 %v2567
      %v2655 = vunpack.c.h.b16 %v2567
      %v2656 = vunpack.c.l.b16 %v2568
      %v2657 = vunpack.c.h.b16 %v2568
      %v2658 = vunpack.c.l.b16 %v2569
      %v2659 = vunpack.c.h.b16 %v2569
      %v2660 = vunpack.c.l.b16 %v2570
      %v2661 = vunpack.c.h.b16 %v2570
      %v2662 = vunpack.c.l.b16 %v2571
      %v2663 = vunpack.c.h.b16 %v2571
      %v2664 = vunpack.c.l.b16 %v2572
      %v2665 = vunpack.c.h.b16 %v2572
      %v2666 = vunpack.c.l.b16 %v2573
      %v2667 = vunpack.c.h.b16 %v2573
      %v2668 = vunpack.c.l.b16 %v2574
      %v2669 = vunpack.c.h.b16 %v2574
      %v2670 = vunpack.c.l.b16 %v2575
      %v2671 = vunpack.c.h.b16 %v2575
      %v2672 = vunpack.c.l.b16 %v2576
      %v2673 = vunpack.c.h.b16 %v2576
      %v2674 = vunpack.c.l.b16 %v2577
      %v2675 = vunpack.c.h.b16 %v2577
      %v2676 = vunpack.c.l.b16 %v2578
      %v2677 = vunpack.c.h.b16 %v2578
      %v2678 = vunpack.c.l.b16 %v2579
      %v2679 = vunpack.c.h.b16 %v2579
      %v2680 = vunpack.c.l.b16 %v2580
      %v2681 = vunpack.c.h.b16 %v2580
      %v2682 = vunpack.c.l.b16 %v2581
      %v2683 = vunpack.c.h.b16 %v2581
      %v2684 = vunpack.c.l.b16 %v2582
      %v2685 = vunpack.c.h.b16 %v2582
      %v2686 = vunpack.c.l.b16 %v2583
      %v2687 = vunpack.c.h.b16 %v2583
      %v2688 = vunpack.c.l.b16 %v2584
      %v2689 = vunpack.c.h.b16 %v2584
      %v2690 = vunpack.c.l.b16 %v2585
      %v2691 = vunpack.c.h.b16 %v2585
      %v2692 = vunpack.c.l.b16 %v2586
      %v2693 = vunpack.c.h.b16 %v2586
      %v2694 = vunpack.c.l.b16 %v2587
      %v2695 = vunpack.c.h.b16 %v2587
      %v2696 = vunpack.c.l.b16 %v2588
      %v2697 = vunpack.c.h.b16 %v2588
      %v2698 = vunpack.c.l.b16 %v2589
      %v2699 = vunpack.c.h.b16 %v2589
      %v2700 = vunpack.c.l.b16 %v2590
      %v2701 = vunpack.c.h.b16 %v2590
      %v2702 = vunpack.c.l.b16 %v2591
      %v2703 = vunpack.c.h.b16 %v2591
      %v2704 = vunpack.c.l.b16 %v2592
      %v2705 = vunpack.c.h.b16 %v2592
      %v2706 = vunpack.c.l.b16 %v2593
      %v2707 = vunpack.c.h.b16 %v2593
      %v2708 = vpack.c.b16 %v2632, %v2632
      %v2709 = vpack.c.b16 %v2633, %v2633
      %v2710 = vpack.c.b16 %v2634, %v2634
      %v2711 = vpack.c.b16 %v2635, %v2635
      %v2712 = vpack.c.b16 %v2636, %v2636
      %v2713 = vpack.c.b16 %v2637, %v2637
      %v2714 = vpack.c.b16 %v2638, %v2638
      %v2715 = vpack.c.b16 %v2639, %v2639
      %v2716 = vpack.c.b16 %v2640, %v2640
      %v2717 = vpack.c.b16 %v2641, %v2641
      %v2718 = vpack.c.b16 %v2642, %v2642
      %v2719 = vpack.c.b16 %v2643, %v2643
      %v2720 = vpack.c.b16 %v2644, %v2644
      %v2721 = vpack.c.b16 %v2645, %v2645
      %v2722 = vpack.c.b16 %v2646, %v2646
      %v2723 = vpack.c.b16 %v2647, %v2647
      %v2724 = vpack.c.b16 %v2648, %v2648
      %v2725 = vpack.c.b16 %v2649, %v2649
      %v2726 = vpack.c.b16 %v2650, %v2650
      %v2727 = vpack.c.b16 %v2651, %v2651
      %v2728 = vpack.c.b16 %v2652, %v2652
      %v2729 = vpack.c.b16 %v2653, %v2653
      %v2730 = vpack.c.b16 %v2654, %v2654
      %v2731 = vpack.c.b16 %v2655, %v2655
      %v2732 = vpack.c.b16 %v2656, %v2656
      %v2733 = vpack.c.b16 %v2657, %v2657
      %v2734 = vpack.c.b16 %v2658, %v2658
      %v2735 = vpack.c.b16 %v2659, %v2659
      %v2736 = vpack.c.b16 %v2660, %v2660
      %v2737 = vpack.c.b16 %v2661, %v2661
      %v2738 = vpack.c.b16 %v2662, %v2662
      %v2739 = vpack.c.b16 %v2663, %v2663
      %v2740 = vpack.c.b16 %v2664, %v2664
      %v2741 = vpack.c.b16 %v2665, %v2665
      %v2742 = vpack.c.b16 %v2666, %v2666
      %v2743 = vpack.c.b16 %v2667, %v2667
      %v2744 = vpack.c.b16 %v2668, %v2668
      %v2745 = vpack.c.b16 %v2669, %v2669
      %v2746 = vpack.c.b16 %v2670, %v2670
      %v2747 = vpack.c.b16 %v2671, %v2671
      %v2748 = vpack.c.b16 %v2672, %v2672
      %v2749 = vpack.c.b16 %v2673, %v2673
      %v2750 = vpack.c.b16 %v2674, %v2674
      %v2751 = vpack.c.b16 %v2675, %v2675
      %v2752 = vpack.c.b16 %v2676, %v2676
      %v2753 = vpack.c.b16 %v2677, %v2677
      %v2754 = vpack.c.b16 %v2678, %v2678
      %v2755 = vpack.c.b16 %v2679, %v2679
      %v2756 = vpack.c.b16 %v2680, %v2680
      %v2757 = vpack.c.b16 %v2681, %v2681
      %v2758 = vpack.c.b16 %v2682, %v2682
      %v2759 = vpack.c.b16 %v2683, %v2683
      %v2760 = vpack.c.b16 %v2684, %v2684
      %v2761 = vpack.c.b16 %v2685, %v2685
      %v2762 = vpack.c.b16 %v2686, %v2686
      %v2763 = vpack.c.b16 %v2687, %v2687
      %v2764 = vpack.c.b16 %v2688, %v2688
      %v2765 = vpack.c.b16 %v2689, %v2689
      %v2766 = vpack.c.b16 %v2690, %v2690
      %v2767 = vpack.c.b16 %v2691, %v2691
      %v2768 = vpack.c.b16 %v2692, %v2692
      %v2769 = vpack.c.b16 %v2693, %v2693
      %v2770 = vpack.c.b16 %v2694, %v2694
      %v2771 = vpack.c.b16 %v2695, %v2695
      %v2772 = vpack.c.b16 %v2696, %v2696
      %v2773 = vpack.c.b16 %v2697, %v2697
      %v2774 = vpack.c.b16 %v2698, %v2698
      %v2775 = vpack.c.b16 %v2699, %v2699
      %v2776 = vpack.c.b16 %v2700, %v2700
      %v2777 = vpack.c.b16 %v2701, %v2701
      %v2778 = vpack.c.b16 %v2702, %v2702
      %v2779 = vpack.c.b16 %v2703, %v2703
      %v2780 = vpack.c.b16 %v2704, %v2704
      %v2781 = vpack.c.b16 %v2705, %v2705
      %v2782 = vpack.c.b16 %v2706, %v2706
      %v2783 = vpack.c.b16 %v2707, %v2707
      %vm2860 = vcmask 257024
      %2861 = vst.msk [vmem:[%s412] sm:$0xf] %vm2860, %v2708
      %2862 = vst.msk [vmem:[%s412 + $0x4] sm:$0xf] %vm2860, %v2709
      %2863 = vst.msk [vmem:[%s412 + $0x8] sm:$0xf] %vm2860, %v2710
      %2864 = vst.msk [vmem:[%s412 + $0xc] sm:$0xf] %vm2860, %v2711
      %2865 = vst.msk [vmem:[%s412 + $0x10] sm:$0xf] %vm2860, %v2712
      %2866 = vst.msk [vmem:[%s412 + $0x14] sm:$0xf] %vm2860, %v2713
      %2867 = vst.msk [vmem:[%s412 + $0x18] sm:$0xf] %vm2860, %v2714
      %2868 = vst.msk [vmem:[%s412 + $0x1c] sm:$0xf] %vm2860, %v2715
      %2869 = vst.msk [vmem:[%s412 + $0x20] sm:$0xf] %vm2860, %v2716
      %2870 = vst.msk [vmem:[%s412 + $0x24] sm:$0xf] %vm2860, %v2717
      %2871 = vst.msk [vmem:[%s412 + $0x28] sm:$0xf] %vm2860, %v2718
      %2872 = vst.msk [vmem:[%s412 + $0x2c] sm:$0xf] %vm2860, %v2719
      %2873 = vst.msk [vmem:[%s412 + $0x30] sm:$0xf] %vm2860, %v2720
      %2874 = vst.msk [vmem:[%s412 + $0x34] sm:$0xf] %vm2860, %v2721
      %2875 = vst.msk [vmem:[%s412 + $0x38] sm:$0xf] %vm2860, %v2722
      %2876 = vst.msk [vmem:[%s412 + $0x3c] sm:$0xf] %vm2860, %v2723
      %2877 = vst.msk [vmem:[%s412 + $0x40] sm:$0xf] %vm2860, %v2724
      %2878 = vst.msk [vmem:[%s412 + $0x44] sm:$0xf] %vm2860, %v2725
      %2879 = vst.msk [vmem:[%s412 + $0x48] sm:$0xf] %vm2860, %v2726
      %2880 = vst.msk [vmem:[%s412 + $0x4c] sm:$0xf] %vm2860, %v2727
      %2881 = vst.msk [vmem:[%s412 + $0x50] sm:$0xf] %vm2860, %v2728
      %2882 = vst.msk [vmem:[%s412 + $0x54] sm:$0xf] %vm2860, %v2729
      %2883 = vst.msk [vmem:[%s412 + $0x58] sm:$0xf] %vm2860, %v2730
      %2884 = vst.msk [vmem:[%s412 + $0x5c] sm:$0xf] %vm2860, %v2731
      %2885 = vst.msk [vmem:[%s412 + $0x60] sm:$0xf] %vm2860, %v2732
      %2886 = vst.msk [vmem:[%s412 + $0x64] sm:$0xf] %vm2860, %v2733
      %2887 = vst.msk [vmem:[%s412 + $0x68] sm:$0xf] %vm2860, %v2734
      %2888 = vst.msk [vmem:[%s412 + $0x6c] sm:$0xf] %vm2860, %v2735
      %2889 = vst.msk [vmem:[%s412 + $0x70] sm:$0xf] %vm2860, %v2736
      %2890 = vst.msk [vmem:[%s412 + $0x74] sm:$0xf] %vm2860, %v2737
      %2891 = vst.msk [vmem:[%s412 + $0x78] sm:$0xf] %vm2860, %v2738
      %2892 = vst.msk [vmem:[%s412 + $0x7c] sm:$0xf] %vm2860, %v2739
      %2893 = vst.msk [vmem:[%s412 + $0x80] sm:$0xf] %vm2860, %v2740
      %2894 = vst.msk [vmem:[%s412 + $0x84] sm:$0xf] %vm2860, %v2741
      %2895 = vst.msk [vmem:[%s412 + $0x88] sm:$0xf] %vm2860, %v2742
      %2896 = vst.msk [vmem:[%s412 + $0x8c] sm:$0xf] %vm2860, %v2743
      %2897 = vst.msk [vmem:[%s412 + $0x90] sm:$0xf] %vm2860, %v2744
      %2898 = vst.msk [vmem:[%s412 + $0x94] sm:$0xf] %vm2860, %v2745
      %2899 = vst.msk [vmem:[%s412 + $0x98] sm:$0xf] %vm2860, %v2746
      %2900 = vst.msk [vmem:[%s412 + $0x9c] sm:$0xf] %vm2860, %v2747
      %2901 = vst.msk [vmem:[%s412 + $0xa0] sm:$0xf] %vm2860, %v2748
      %2902 = vst.msk [vmem:[%s412 + $0xa4] sm:$0xf] %vm2860, %v2749
      %2903 = vst.msk [vmem:[%s412 + $0xa8] sm:$0xf] %vm2860, %v2750
      %2904 = vst.msk [vmem:[%s412 + $0xac] sm:$0xf] %vm2860, %v2751
      %2905 = vst.msk [vmem:[%s412 + $0xb0] sm:$0xf] %vm2860, %v2752
      %2906 = vst.msk [vmem:[%s412 + $0xb4] sm:$0xf] %vm2860, %v2753
      %2907 = vst.msk [vmem:[%s412 + $0xb8] sm:$0xf] %vm2860, %v2754
      %2908 = vst.msk [vmem:[%s412 + $0xbc] sm:$0xf] %vm2860, %v2755
      %2909 = vst.msk [vmem:[%s412 + $0xc0] sm:$0xf] %vm2860, %v2756
      %2910 = vst.msk [vmem:[%s412 + $0xc4] sm:$0xf] %vm2860, %v2757
      %2911 = vst.msk [vmem:[%s412 + $0xc8] sm:$0xf] %vm2860, %v2758
      %2912 = vst.msk [vmem:[%s412 + $0xcc] sm:$0xf] %vm2860, %v2759
      %2913 = vst.msk [vmem:[%s412 + $0xd0] sm:$0xf] %vm2860, %v2760
      %2914 = vst.msk [vmem:[%s412 + $0xd4] sm:$0xf] %vm2860, %v2761
      %2915 = vst.msk [vmem:[%s412 + $0xd8] sm:$0xf] %vm2860, %v2762
      %2916 = vst.msk [vmem:[%s412 + $0xdc] sm:$0xf] %vm2860, %v2763
      %2917 = vst.msk [vmem:[%s412 + $0xe0] sm:$0xf] %vm2860, %v2764
      %2918 = vst.msk [vmem:[%s412 + $0xe4] sm:$0xf] %vm2860, %v2765
      %2919 = vst.msk [vmem:[%s412 + $0xe8] sm:$0xf] %vm2860, %v2766
      %2920 = vst.msk [vmem:[%s412 + $0xec] sm:$0xf] %vm2860, %v2767
      %2921 = vst.msk [vmem:[%s412 + $0xf0] sm:$0xf] %vm2860, %v2768
      %2922 = vst.msk [vmem:[%s412 + $0xf4] sm:$0xf] %vm2860, %v2769
      %2923 = vst.msk [vmem:[%s412 + $0xf8] sm:$0xf] %vm2860, %v2770
      %2924 = vst.msk [vmem:[%s412 + $0xfc] sm:$0xf] %vm2860, %v2771
      %2925 = vst.msk [vmem:[%s412 + $0x100] sm:$0xf] %vm2860, %v2772
      %2926 = vst.msk [vmem:[%s412 + $0x104] sm:$0xf] %vm2860, %v2773
      %2927 = vst.msk [vmem:[%s412 + $0x108] sm:$0xf] %vm2860, %v2774
      %2928 = vst.msk [vmem:[%s412 + $0x10c] sm:$0xf] %vm2860, %v2775
      %2929 = vst.msk [vmem:[%s412 + $0x110] sm:$0xf] %vm2860, %v2776
      %2930 = vst.msk [vmem:[%s412 + $0x114] sm:$0xf] %vm2860, %v2777
      %2931 = vst.msk [vmem:[%s412 + $0x118] sm:$0xf] %vm2860, %v2778
      %2932 = vst.msk [vmem:[%s412 + $0x11c] sm:$0xf] %vm2860, %v2779
      %2933 = vst.msk [vmem:[%s412 + $0x120] sm:$0xf] %vm2860, %v2780
      %2934 = vst.msk [vmem:[%s412 + $0x124] sm:$0xf] %vm2860, %v2781
      %2935 = vst.msk [vmem:[%s412 + $0x128] sm:$0xf] %vm2860, %v2782
      %2936 = vst.msk [vmem:[%s412 + $0x12c] sm:$0xf] %vm2860, %v2783
      %v2937 = vsel %vm1268, %v2480, 0.0
      %v2938 = vsel %vm1268, %v2481, 0.0
      %v2939 = vadd.f32 %v2937, %v2938
      %v2940 = vsel %vm1268, %v2482, 0.0
      %v2941 = vadd.f32 %v2939, %v2940
      %v2942 = vsel %vm1268, %v2483, 0.0
      %v2943 = vadd.f32 %v2941, %v2942
      %v2944 = vsel %vm1268, %v2484, 0.0
      %v2945 = vadd.f32 %v2943, %v2944
      %v2946 = vsel %vm1268, %v2485, 0.0
      %v2947 = vadd.f32 %v2945, %v2946
      %v2948 = vsel %vm1268, %v2486, 0.0
      %v2949 = vadd.f32 %v2947, %v2948
      %v2950 = vsel %vm1268, %v2487, 0.0
      %v2951 = vadd.f32 %v2949, %v2950
      %v2952 = vsel %vm1268, %v2488, 0.0
      %v2953 = vadd.f32 %v2951, %v2952
      %v2954 = vsel %vm1268, %v2489, 0.0
      %v2955 = vadd.f32 %v2953, %v2954
      %v2956 = vsel %vm1268, %v2490, 0.0
      %v2957 = vadd.f32 %v2955, %v2956
      %v2958 = vsel %vm1268, %v2491, 0.0
      %v2959 = vadd.f32 %v2957, %v2958
      %v2960 = vsel %vm1268, %v2492, 0.0
      %v2961 = vadd.f32 %v2959, %v2960
      %v2962 = vsel %vm1268, %v2493, 0.0
      %v2963 = vadd.f32 %v2961, %v2962
      %v2964 = vsel %vm1268, %v2494, 0.0
      %v2965 = vadd.f32 %v2963, %v2964
      %v2966 = vsel %vm1268, %v2495, 0.0
      %v2967 = vadd.f32 %v2965, %v2966
      %v2968 = vsel %vm1268, %v2496, 0.0
      %v2969 = vadd.f32 %v2967, %v2968
      %v2970 = vsel %vm1268, %v2497, 0.0
      %v2971 = vadd.f32 %v2969, %v2970
      %v2972 = vsel %vm1268, %v2498, 0.0
      %v2973 = vadd.f32 %v2971, %v2972
      %v2974 = vsel %vm1268, %v2499, 0.0
      %v2975 = vadd.f32 %v2973, %v2974
      %v2976 = vsel %vm1268, %v2500, 0.0
      %v2977 = vadd.f32 %v2975, %v2976
      %v2978 = vsel %vm1268, %v2501, 0.0
      %v2979 = vadd.f32 %v2977, %v2978
      %v2980 = vsel %vm1268, %v2502, 0.0
      %v2981 = vadd.f32 %v2979, %v2980
      %v2982 = vsel %vm1268, %v2503, 0.0
      %v2983 = vadd.f32 %v2981, %v2982
      %v2984 = vsel %vm1268, %v2504, 0.0
      %v2985 = vadd.f32 %v2983, %v2984
      %v2986 = vsel %vm1268, %v2505, 0.0
      %v2987 = vadd.f32 %v2985, %v2986
      %v2988 = vsel %vm1268, %v2506, 0.0
      %v2989 = vadd.f32 %v2987, %v2988
      %v2990 = vsel %vm1268, %v2507, 0.0
      %v2991 = vadd.f32 %v2989, %v2990
      %v2992 = vsel %vm1268, %v2508, 0.0
      %v2993 = vadd.f32 %v2991, %v2992
      %v2994 = vsel %vm1268, %v2509, 0.0
      %v2995 = vadd.f32 %v2993, %v2994
      %v2996 = vsel %vm1268, %v2510, 0.0
      %v2997 = vadd.f32 %v2995, %v2996
      %v2998 = vsel %vm1268, %v2511, 0.0
      %v2999 = vadd.f32 %v2997, %v2998
      %v3000 = vsel %vm1268, %v2512, 0.0
      %v3001 = vadd.f32 %v2999, %v3000
      %v3002 = vsel %vm1268, %v2513, 0.0
      %v3003 = vadd.f32 %v3001, %v3002
      %v3004 = vsel %vm1268, %v2514, 0.0
      %v3005 = vadd.f32 %v3003, %v3004
      %v3006 = vsel %vm1268, %v2515, 0.0
      %v3007 = vadd.f32 %v3005, %v3006
      %v3008 = vsel %vm1268, %v2516, 0.0
      %v3009 = vadd.f32 %v3007, %v3008
      %v3010 = vsel %vm1268, %v2517, 0.0
      %v3011 = vadd.f32 %v3009, %v3010
      %v3012 = vsel %vm1268, %v2518, 0.0
      %v3013 = vadd.f32 %v3011, %v3012
      %v3014 = vsel %vm1268, %v2519, 0.0
      %v3015 = vadd.f32 %v3013, %v3014
      %v3016 = vsel %vm1268, %v2520, 0.0
      %v3017 = vadd.f32 %v3015, %v3016
      %v3018 = vsel %vm1268, %v2521, 0.0
      %v3019 = vadd.f32 %v3017, %v3018
      %v3020 = vsel %vm1268, %v2522, 0.0
      %v3021 = vadd.f32 %v3019, %v3020
      %v3022 = vsel %vm1268, %v2523, 0.0
      %v3023 = vadd.f32 %v3021, %v3022
      %v3024 = vsel %vm1268, %v2524, 0.0
      %v3025 = vadd.f32 %v3023, %v3024
      %v3026 = vsel %vm1268, %v2525, 0.0
      %v3027 = vadd.f32 %v3025, %v3026
      %v3028 = vsel %vm1268, %v2526, 0.0
      %v3029 = vadd.f32 %v3027, %v3028
      %v3030 = vsel %vm1268, %v2527, 0.0
      %v3031 = vadd.f32 %v3029, %v3030
      %v3032 = vsel %vm1268, %v2528, 0.0
      %v3033 = vadd.f32 %v3031, %v3032
      %v3034 = vsel %vm1268, %v2529, 0.0
      %v3035 = vadd.f32 %v3033, %v3034
      %v3036 = vsel %vm1268, %v2530, 0.0
      %v3037 = vadd.f32 %v3035, %v3036
      %v3038 = vsel %vm1268, %v2531, 0.0
      %v3039 = vadd.f32 %v3037, %v3038
      %v3040 = vsel %vm1268, %v2532, 0.0
      %v3041 = vadd.f32 %v3039, %v3040
      %v3042 = vsel %vm1268, %v2533, 0.0
      %v3043 = vadd.f32 %v3041, %v3042
      %v3044 = vsel %vm1268, %v2534, 0.0
      %v3045 = vadd.f32 %v3043, %v3044
      %v3046 = vsel %vm1268, %v2535, 0.0
      %v3047 = vadd.f32 %v3045, %v3046
      %v3048 = vsel %vm1268, %v2536, 0.0
      %v3049 = vadd.f32 %v3047, %v3048
      %v3050 = vsel %vm1268, %v2537, 0.0
      %v3051 = vadd.f32 %v3049, %v3050
      %v3052 = vsel %vm1268, %v2538, 0.0
      %v3053 = vadd.f32 %v3051, %v3052
      %v3054 = vsel %vm1268, %v2539, 0.0
      %v3055 = vadd.f32 %v3053, %v3054
      %v3056 = vsel %vm1268, %v2540, 0.0
      %v3057 = vadd.f32 %v3055, %v3056
      %v3058 = vsel %vm1268, %v2541, 0.0
      %v3059 = vadd.f32 %v3057, %v3058
      %v3060 = vsel %vm1268, %v2542, 0.0
      %v3061 = vadd.f32 %v3059, %v3060
      %v3062 = vsel %vm1268, %v2543, 0.0
      %v3063 = vadd.f32 %v3061, %v3062
      %v3064 = vsel %vm1268, %v2544, 0.0
      %v3065 = vadd.f32 %v3063, %v3064
      %v3066 = vsel %vm1268, %v2545, 0.0
      %v3067 = vadd.f32 %v3065, %v3066
      %v3068 = vsel %vm1268, %v2546, 0.0
      %v3069 = vadd.f32 %v3067, %v3068
      %v3070 = vsel %vm1268, %v2547, 0.0
      %v3071 = vadd.f32 %v3069, %v3070
      %v3072 = vsel %vm1268, %v2548, 0.0
      %v3073 = vadd.f32 %v3071, %v3072
      %v3074 = vsel %vm1268, %v2549, 0.0
      %v3075 = vadd.f32 %v3073, %v3074
      %v3076 = vsel %vm1268, %v2550, 0.0
      %v3077 = vadd.f32 %v3075, %v3076
      %v3078 = vsel %vm1268, %v2551, 0.0
      %v3079 = vadd.f32 %v3077, %v3078
      %v3080 = vsel %vm1268, %v2552, 0.0
      %v3081 = vadd.f32 %v3079, %v3080
      %v3082 = vsel %vm1268, %v2553, 0.0
      %v3083 = vadd.f32 %v3081, %v3082
      %v3084 = vsel %vm1268, %v2554, 0.0
      %v3085 = vadd.f32 %v3083, %v3084
      %v3086 = vsel %vm1268, %v2555, 0.0
      %v3087 = vadd.f32 %v3085, %v3086
      %v3088 = vrot.slane %v3087, 4
      %v3089 = vadd.f32 %v3087, %v3088
      %v3090 = vrot.slane %v3089, 2
      %v3091 = vadd.f32 %v3089, %v3090
      %v3092 = vrot.slane %v3091, 1
      %v3093 = vadd.f32 %v3091, %v3092
      %vm3094 = vcmask 253952
      %3095 = vst.msk [vmem:[%s417] sm:$0x1] %vm3094, %v3093
      %v3096 = vmul.f32 %v2480, %v2480
      %v3097 = vmul.f32 %v2481, %v2481
      %v3098 = vmul.f32 %v2482, %v2482
      %v3099 = vmul.f32 %v2483, %v2483
      %v3100 = vmul.f32 %v2484, %v2484
      %v3101 = vmul.f32 %v2485, %v2485
      %v3102 = vmul.f32 %v2486, %v2486
      %v3103 = vmul.f32 %v2487, %v2487
      %v3104 = vmul.f32 %v2488, %v2488
      %v3105 = vmul.f32 %v2489, %v2489
      %v3106 = vmul.f32 %v2490, %v2490
      %v3107 = vmul.f32 %v2491, %v2491
      %v3108 = vmul.f32 %v2492, %v2492
      %v3109 = vmul.f32 %v2493, %v2493
      %v3110 = vmul.f32 %v2494, %v2494
      %v3111 = vmul.f32 %v2495, %v2495
      %v3112 = vmul.f32 %v2496, %v2496
      %v3113 = vmul.f32 %v2497, %v2497
      %v3114 = vmul.f32 %v2498, %v2498
      %v3115 = vmul.f32 %v2499, %v2499
      %v3116 = vmul.f32 %v2500, %v2500
      %v3117 = vmul.f32 %v2501, %v2501
      %v3118 = vmul.f32 %v2502, %v2502
      %v3119 = vmul.f32 %v2503, %v2503
      %v3120 = vmul.f32 %v2504, %v2504
      %v3121 = vmul.f32 %v2505, %v2505
      %v3122 = vmul.f32 %v2506, %v2506
      %v3123 = vmul.f32 %v2507, %v2507
      %v3124 = vmul.f32 %v2508, %v2508
      %v3125 = vmul.f32 %v2509, %v2509
      %v3126 = vmul.f32 %v2510, %v2510
      %v3127 = vmul.f32 %v2511, %v2511
      %v3128 = vmul.f32 %v2512, %v2512
      %v3129 = vmul.f32 %v2513, %v2513
      %v3130 = vmul.f32 %v2514, %v2514
      %v3131 = vmul.f32 %v2515, %v2515
      %v3132 = vmul.f32 %v2516, %v2516
      %v3133 = vmul.f32 %v2517, %v2517
      %v3134 = vmul.f32 %v2518, %v2518
      %v3135 = vmul.f32 %v2519, %v2519
      %v3136 = vmul.f32 %v2520, %v2520
      %v3137 = vmul.f32 %v2521, %v2521
      %v3138 = vmul.f32 %v2522, %v2522
      %v3139 = vmul.f32 %v2523, %v2523
      %v3140 = vmul.f32 %v2524, %v2524
      %v3141 = vmul.f32 %v2525, %v2525
      %v3142 = vmul.f32 %v2526, %v2526
      %v3143 = vmul.f32 %v2527, %v2527
      %v3144 = vmul.f32 %v2528, %v2528
      %v3145 = vmul.f32 %v2529, %v2529
      %v3146 = vmul.f32 %v2530, %v2530
      %v3147 = vmul.f32 %v2531, %v2531
      %v3148 = vmul.f32 %v2532, %v2532
      %v3149 = vmul.f32 %v2533, %v2533
      %v3150 = vmul.f32 %v2534, %v2534
      %v3151 = vmul.f32 %v2535, %v2535
      %v3152 = vmul.f32 %v2536, %v2536
      %v3153 = vmul.f32 %v2537, %v2537
      %v3154 = vmul.f32 %v2538, %v2538
      %v3155 = vmul.f32 %v2539, %v2539
      %v3156 = vmul.f32 %v2540, %v2540
      %v3157 = vmul.f32 %v2541, %v2541
      %v3158 = vmul.f32 %v2542, %v2542
      %v3159 = vmul.f32 %v2543, %v2543
      %v3160 = vmul.f32 %v2544, %v2544
      %v3161 = vmul.f32 %v2545, %v2545
      %v3162 = vmul.f32 %v2546, %v2546
      %v3163 = vmul.f32 %v2547, %v2547
      %v3164 = vmul.f32 %v2548, %v2548
      %v3165 = vmul.f32 %v2549, %v2549
      %v3166 = vmul.f32 %v2550, %v2550
      %v3167 = vmul.f32 %v2551, %v2551
      %v3168 = vmul.f32 %v2552, %v2552
      %v3169 = vmul.f32 %v2553, %v2553
      %v3170 = vmul.f32 %v2554, %v2554
      %v3171 = vmul.f32 %v2555, %v2555
      %v3172 = vsel %vm1268, %v3096, 0.0
      %v3173 = vsel %vm1268, %v3097, 0.0
      %v3174 = vadd.f32 %v3172, %v3173
      %v3175 = vsel %vm1268, %v3098, 0.0
      %v3176 = vadd.f32 %v3174, %v3175
      %v3177 = vsel %vm1268, %v3099, 0.0
      %v3178 = vadd.f32 %v3176, %v3177
      %v3179 = vsel %vm1268, %v3100, 0.0
      %v3180 = vadd.f32 %v3178, %v3179
      %v3181 = vsel %vm1268, %v3101, 0.0
      %v3182 = vadd.f32 %v3180, %v3181
      %v3183 = vsel %vm1268, %v3102, 0.0
      %v3184 = vadd.f32 %v3182, %v3183
      %v3185 = vsel %vm1268, %v3103, 0.0
      %v3186 = vadd.f32 %v3184, %v3185
      %v3187 = vsel %vm1268, %v3104, 0.0
      %v3188 = vadd.f32 %v3186, %v3187
      %v3189 = vsel %vm1268, %v3105, 0.0
      %v3190 = vadd.f32 %v3188, %v3189
      %v3191 = vsel %vm1268, %v3106, 0.0
      %v3192 = vadd.f32 %v3190, %v3191
      %v3193 = vsel %vm1268, %v3107, 0.0
      %v3194 = vadd.f32 %v3192, %v3193
      %v3195 = vsel %vm1268, %v3108, 0.0
      %v3196 = vadd.f32 %v3194, %v3195
      %v3197 = vsel %vm1268, %v3109, 0.0
      %v3198 = vadd.f32 %v3196, %v3197
      %v3199 = vsel %vm1268, %v3110, 0.0
      %v3200 = vadd.f32 %v3198, %v3199
      %v3201 = vsel %vm1268, %v3111, 0.0
      %v3202 = vadd.f32 %v3200, %v3201
      %v3203 = vsel %vm1268, %v3112, 0.0
      %v3204 = vadd.f32 %v3202, %v3203
      %v3205 = vsel %vm1268, %v3113, 0.0
      %v3206 = vadd.f32 %v3204, %v3205
      %v3207 = vsel %vm1268, %v3114, 0.0
      %v3208 = vadd.f32 %v3206, %v3207
      %v3209 = vsel %vm1268, %v3115, 0.0
      %v3210 = vadd.f32 %v3208, %v3209
      %v3211 = vsel %vm1268, %v3116, 0.0
      %v3212 = vadd.f32 %v3210, %v3211
      %v3213 = vsel %vm1268, %v3117, 0.0
      %v3214 = vadd.f32 %v3212, %v3213
      %v3215 = vsel %vm1268, %v3118, 0.0
      %v3216 = vadd.f32 %v3214, %v3215
      %v3217 = vsel %vm1268, %v3119, 0.0
      %v3218 = vadd.f32 %v3216, %v3217
      %v3219 = vsel %vm1268, %v3120, 0.0
      %v3220 = vadd.f32 %v3218, %v3219
      %v3221 = vsel %vm1268, %v3121, 0.0
      %v3222 = vadd.f32 %v3220, %v3221
      %v3223 = vsel %vm1268, %v3122, 0.0
      %v3224 = vadd.f32 %v3222, %v3223
      %v3225 = vsel %vm1268, %v3123, 0.0
      %v3226 = vadd.f32 %v3224, %v3225
      %v3227 = vsel %vm1268, %v3124, 0.0
      %v3228 = vadd.f32 %v3226, %v3227
      %v3229 = vsel %vm1268, %v3125, 0.0
      %v3230 = vadd.f32 %v3228, %v3229
      %v3231 = vsel %vm1268, %v3126, 0.0
      %v3232 = vadd.f32 %v3230, %v3231
      %v3233 = vsel %vm1268, %v3127, 0.0
      %v3234 = vadd.f32 %v3232, %v3233
      %v3235 = vsel %vm1268, %v3128, 0.0
      %v3236 = vadd.f32 %v3234, %v3235
      %v3237 = vsel %vm1268, %v3129, 0.0
      %v3238 = vadd.f32 %v3236, %v3237
      %v3239 = vsel %vm1268, %v3130, 0.0
      %v3240 = vadd.f32 %v3238, %v3239
      %v3241 = vsel %vm1268, %v3131, 0.0
      %v3242 = vadd.f32 %v3240, %v3241
      %v3243 = vsel %vm1268, %v3132, 0.0
      %v3244 = vadd.f32 %v3242, %v3243
      %v3245 = vsel %vm1268, %v3133, 0.0
      %v3246 = vadd.f32 %v3244, %v3245
      %v3247 = vsel %vm1268, %v3134, 0.0
      %v3248 = vadd.f32 %v3246, %v3247
      %v3249 = vsel %vm1268, %v3135, 0.0
      %v3250 = vadd.f32 %v3248, %v3249
      %v3251 = vsel %vm1268, %v3136, 0.0
      %v3252 = vadd.f32 %v3250, %v3251
      %v3253 = vsel %vm1268, %v3137, 0.0
      %v3254 = vadd.f32 %v3252, %v3253
      %v3255 = vsel %vm1268, %v3138, 0.0
      %v3256 = vadd.f32 %v3254, %v3255
      %v3257 = vsel %vm1268, %v3139, 0.0
      %v3258 = vadd.f32 %v3256, %v3257
      %v3259 = vsel %vm1268, %v3140, 0.0
      %v3260 = vadd.f32 %v3258, %v3259
      %v3261 = vsel %vm1268, %v3141, 0.0
      %v3262 = vadd.f32 %v3260, %v3261
      %v3263 = vsel %vm1268, %v3142, 0.0
      %v3264 = vadd.f32 %v3262, %v3263
      %v3265 = vsel %vm1268, %v3143, 0.0
      %v3266 = vadd.f32 %v3264, %v3265
      %v3267 = vsel %vm1268, %v3144, 0.0
      %v3268 = vadd.f32 %v3266, %v3267
      %v3269 = vsel %vm1268, %v3145, 0.0
      %v3270 = vadd.f32 %v3268, %v3269
      %v3271 = vsel %vm1268, %v3146, 0.0
      %v3272 = vadd.f32 %v3270, %v3271
      %v3273 = vsel %vm1268, %v3147, 0.0
      %v3274 = vadd.f32 %v3272, %v3273
      %v3275 = vsel %vm1268, %v3148, 0.0
      %v3276 = vadd.f32 %v3274, %v3275
      %v3277 = vsel %vm1268, %v3149, 0.0
      %v3278 = vadd.f32 %v3276, %v3277
      %v3279 = vsel %vm1268, %v3150, 0.0
      %v3280 = vadd.f32 %v3278, %v3279
      %v3281 = vsel %vm1268, %v3151, 0.0
      %v3282 = vadd.f32 %v3280, %v3281
      %v3283 = vsel %vm1268, %v3152, 0.0
      %v3284 = vadd.f32 %v3282, %v3283
      %v3285 = vsel %vm1268, %v3153, 0.0
      %v3286 = vadd.f32 %v3284, %v3285
      %v3287 = vsel %vm1268, %v3154, 0.0
      %v3288 = vadd.f32 %v3286, %v3287
      %v3289 = vsel %vm1268, %v3155, 0.0
      %v3290 = vadd.f32 %v3288, %v3289
      %v3291 = vsel %vm1268, %v3156, 0.0
      %v3292 = vadd.f32 %v3290, %v3291
      %v3293 = vsel %vm1268, %v3157, 0.0
      %v3294 = vadd.f32 %v3292, %v3293
      %v3295 = vsel %vm1268, %v3158, 0.0
      %v3296 = vadd.f32 %v3294, %v3295
      %v3297 = vsel %vm1268, %v3159, 0.0
      %v3298 = vadd.f32 %v3296, %v3297
      %v3299 = vsel %vm1268, %v3160, 0.0
      %v3300 = vadd.f32 %v3298, %v3299
      %v3301 = vsel %vm1268, %v3161, 0.0
      %v3302 = vadd.f32 %v3300, %v3301
      %v3303 = vsel %vm1268, %v3162, 0.0
      %v3304 = vadd.f32 %v3302, %v3303
      %v3305 = vsel %vm1268, %v3163, 0.0
      %v3306 = vadd.f32 %v3304, %v3305
      %v3307 = vsel %vm1268, %v3164, 0.0
      %v3308 = vadd.f32 %v3306, %v3307
      %v3309 = vsel %vm1268, %v3165, 0.0
      %v3310 = vadd.f32 %v3308, %v3309
      %v3311 = vsel %vm1268, %v3166, 0.0
      %v3312 = vadd.f32 %v3310, %v3311
      %v3313 = vsel %vm1268, %v3167, 0.0
      %v3314 = vadd.f32 %v3312, %v3313
      %v3315 = vsel %vm1268, %v3168, 0.0
      %v3316 = vadd.f32 %v3314, %v3315
      %v3317 = vsel %vm1268, %v3169, 0.0
      %v3318 = vadd.f32 %v3316, %v3317
      %v3319 = vsel %vm1268, %v3170, 0.0
      %v3320 = vadd.f32 %v3318, %v3319
      %v3321 = vsel %vm1268, %v3171, 0.0
      %v3322 = vadd.f32 %v3320, %v3321
      %v3323 = vrot.slane %v3322, 4
      %v3324 = vadd.f32 %v3322, %v3323
      %v3325 = vrot.slane %v3324, 2
      %v3326 = vadd.f32 %v3324, %v3325
      %v3327 = vrot.slane %v3326, 1
      %v3328 = vadd.f32 %v3326, %v3327
      %3329 = vst.msk [vmem:[%s417 + $0x1] sm:$0x1] %vm3094, %v3328
      %s3330 = smul.u32 76, %s22
      %p3331 = scmp.lt.s32.totalorder %s3330, 151
      %s3332 = scalar_select %p3331, %s3330, 151
      %s3333 = smul.addr %s3332, 4
      %s3334 = scalar_lea.vmem %s9, %s3333
      %p3335 = scmp.lt.s32.totalorder %s22, 1
      %s3336 = scalar_select %p3335, %s22, 1
      %s3337 = smul.addr %s3336, 8
      %s3338 = scalar_lea.vmem %s10, %s3337
      // Predicated region
      $region57: #{convmixer_forward.5} parent=55 // pred_check
        %p3339 = pneg %p244
      $region58: #{convmixer_forward.5} parent=55 // pred_check_branch
        %3341 = sbr.rel (%p3339) target = $region60
      $region59: #{convmixer_forward.5} parent=55 // pred_region
        %s3342 = smul.u32 76, %s22
      $region60: #{convmixer_forward.5} parent=55 // pred_fallthru
        _
      // Predicated region
      $region61: #{convmixer_forward.5} parent=55 // pred_check
        %p3343 = pneg %p270
      $region62: #{convmixer_forward.5} parent=55 // pred_check_branch
        %3345 = sbr.rel (%p3343) target = $region64
      $region63: #{convmixer_forward.5} parent=55 // pred_region
        _
      $region64: #{convmixer_forward.5} parent=55 // pred_fallthru
        _
    $region56: #{convmixer_forward.5} parent=5 // pred_fallthru
      _
    %p3346 = scmp.le.s32.totalorder 2, %s17
    // Predicated region
    $region65: #{convmixer_forward.5} parent=5 // pred_check
      %p3347 = pneg %p3346
    $region66: #{convmixer_forward.5} parent=5 // pred_check_branch
      %3349 = sbr.rel (%p3347) target = $region68
    $region67: #{convmixer_forward.5} parent=5 // pred_region
      %s3350 = ssub.s32 %s17, 2
      // Predicated region
      $region69: #{convmixer_forward.5} parent=67 // pred_check
        %p3351 = pneg %p250
      $region70: #{convmixer_forward.5} parent=67 // pred_check_branch
        %3353 = sbr.rel (%p3351) target = $region72
      $region71: #{convmixer_forward.5} parent=67 // pred_region
        %s3354 = smul.u32 76, %s23
        %p3355 = scmp.lt.s32.totalorder %s3354, 151
        %s3356 = scalar_select %p3355, %s3354, 151
        %s3357 = smul.addr %s3356, 4
        %s3358 = scalar_lea.vmem %s9, %s3357
      $region72: #{convmixer_forward.5} parent=67 // pred_fallthru
        _
      // Predicated region
      $region73: #{convmixer_forward.5} parent=67 // pred_check
        %p3359 = pneg %p276
      $region74: #{convmixer_forward.5} parent=67 // pred_check_branch
        %3361 = sbr.rel (%p3359) target = $region76
      $region75: #{convmixer_forward.5} parent=67 // pred_region
        %p3362 = scmp.lt.s32.totalorder %s23, 1
        %s3363 = scalar_select %p3362, %s23, 1
        %s3364 = smul.addr %s3363, 8
        %s3365 = scalar_lea.vmem %s10, %s3364
      $region76: #{convmixer_forward.5} parent=67 // pred_fallthru
        _
    $region68: #{convmixer_forward.5} parent=5 // pred_fallthru
      _
  $region6: #{convmixer_forward.5} parent=0 // loop_footer
    %s21 = sadd.s32 1, %s17
  $region7: #{convmixer_forward.5} parent=0 // loop_footer_branch
    %16 = sbr.rel target = $region3
  $region8: #{convmixer_forward.5} parent=0 // loop_exit
    _

</llo_original>
